<compile_context>
chip_gen: v6e
topology: v6e:2x2x1
jax: 0.10.0
libtpu: 0.0.40
codegen_flags: <defaults>
</compile_context>

<pallas_src>
import jax
import jax.numpy as jnp
from jax import lax
from jax.experimental import pallas as pl
from jax.experimental.pallas import tpu as pltpu


def make_mhsa_kernel(head: int, d: int, batch_block: int, compute_dtype=jnp.bfloat16):
    """Returns the Pallas kernel body for given head count / head dim / batch block."""
    C = head * d

    def kernel(x_ref, w_rhs_ref, b_rhs_ref, w_lhs_ref, add_lhs_ref, o_ref):
        N = x_ref.shape[-1]

        w_rhs = w_rhs_ref[...]          # (3C, C)  fused [K_h;Q_h]*head, then V
        b_rhs = b_rhs_ref[...]          # (3C, 1)
        w_lhs = w_lhs_ref[...]          # (C, 2C)  per-head columns [Wq_h^T | 0]
        add_lhs = add_lhs_ref[...]      # (N, 2C)  per-head columns [bq_h | pos_h^T]

        # Hoisted constant (JAX does not CSE broadcast_in_dim inside the unrolled loops).
        ones_row = jnp.ones((1, N), dtype=compute_dtype)

        # Static loops: batch_block and head are small here.
        # TODO(synk): for head >= ~8 switch to lax.fori_loop with pl.ds slicing to bound
        # live ranges; for N >~ 1-1.5K add flash-style query tiling (esp. v7x 64 MiB VMEM).
        for bt in range(batch_block):
            x_cn = x_ref[bt]            # (C, N)  channel-major view of this batch element

            # Fused K/Q/V projection: one MXU op (f32; tiny fraction of the MACs).
            proj = (jnp.dot(w_rhs, x_cn, preferred_element_type=jnp.float32)
                    + b_rhs)                                                   # (3C, N)

            # Fused energy-LHS projection via transposed contraction (no x^T input copy):
            # (C, N)^T-contract (C, 2C) -> (N, 2C); Q bias + rel-pos folded into add_lhs.
            lhs_all = (lax.dot_general(x_cn, w_lhs, (((0,), (0,)), ((), ())),
                                       preferred_element_type=jnp.float32)
                       + add_lhs)                                              # (N, 2C)

            for h in range(head):
                lhs_h = lhs_all[:, 2 * d * h:2 * d * (h + 1)]                  # (N, 2d) = [q^T | pos^T]
                rhs_h = proj[2 * d * h:2 * d * (h + 1)]                        # (2d, N) = [k ; q]
                v_h = proj[2 * C + d * h:2 * C + d * (h + 1)]                  # (d, N)

                # energy[n, m] = sum_dd q[dd,n] k[dd,m] + pos[dd,n] q[dd,m]
                # one matmul, contraction depth 2d; bf16 MXU operands, f32 accumulation.
                energy = jnp.dot(lhs_h.astype(compute_dtype),
                                 rhs_h.astype(compute_dtype),
                                 preferred_element_type=jnp.float32)           # (N, N)

                # softmax over keys, all element-wise math in f32 (v5e-safe).
                m = jnp.max(energy, axis=-1, keepdims=True)                    # (N, 1)
                e = jnp.exp(energy - m)                                        # (N, N) f32
                e_c = e.astype(compute_dtype)                                  # MXU boundary only

                # Deferred normalization:
                #   out_un[dd, i] = sum_n v[dd, n] e[i, n]       (MXU)
                #   row_sum[0, i] = sum_n e[i, n]                (MXU, lane-oriented)
                out_un = lax.dot_general(v_h.astype(compute_dtype), e_c,
                                         (((1,), (1,)), ((), ())),
                                         preferred_element_type=jnp.float32)   # (d, N)
                row_sum_t = lax.dot_general(ones_row, e_c,
                                            (((1,), (1,)), ((), ())),
                                            preferred_element_type=jnp.float32)  # (1, N)
                out_h = out_un * pl.reciprocal(row_sum_t, approx=True)         # (d, N)

                # Per-head lane-dense store (full N lanes) + residual add; no final concat.
                o_ref[bt, d * h:d * (h + 1), :] = (
                    out_h + x_cn[d * h:d * (h + 1), :]).astype(o_ref.dtype)

    return kernel


def _pick_batch_block(B: int, C: int, N: int, budget_bytes: int = 8 * 1024 * 1024) -> int:
    """Largest divisor of B whose per-step working set fits a conservative VMEM budget."""
    # per batch element (f32): x + proj + lhs + out tiles ~ 7*C*N*4, plus energy/e ~ 2*N^2*4.
    per_b = 7 * C * N * 4 + 2 * N * N * 4
    cap = int(min(max(1, budget_bytes // per_b), 8, B))
    bt = 1
    for cand in range(1, cap + 1):
        if B % cand == 0:
            bt = cand
    return bt


def _vmem_limit_bytes() -> int:
    """Generation-aware scoped-VMEM limit (v5e/v6e: 128 MiB phys, v7x: 64 MiB phys)."""
    try:
        cap = int(getattr(pltpu.get_tpu_info(), "vmem_capacity_bytes", 64 * 1024 * 1024))
    except Exception:
        cap = 64 * 1024 * 1024
    return max(32 * 1024 * 1024, (cap * 3) // 4)


def mhsa_pallas(x, wq, bq, wk, bk, wv, bv, rel_h, rel_w, head,
                compute_dtype=jnp.bfloat16):
    B, C, W, H = x.shape
    N = W * H
    d = C // head
    f32 = jnp.float32

    # TODO(synk): if N is ever not a multiple of 128, pad N here and mask padded key
    # columns with -inf before the softmax (not needed for 16x16 -> 256).
    x_cn = x.reshape(B, C, N).astype(f32)                                   # single x input

    # ---- fused RHS projection weights: rows [K_h ; Q_h] per head, then V --------------
    wq_h = wq.reshape(head, d, C).astype(f32)
    wk_h = wk.reshape(head, d, C).astype(f32)
    w_rhs = jnp.concatenate(
        [jnp.concatenate([wk_h, wq_h], axis=1).reshape(2 * C, C),
         wv.astype(f32)], axis=0)                                           # (3C, C)

    bq_h = bq.reshape(head, d).astype(f32)
    bk_h = bk.reshape(head, d).astype(f32)
    b_rhs = jnp.concatenate(
        [jnp.concatenate([bk_h, bq_h], axis=1).reshape(2 * C),
         bv.astype(f32)], axis=0).reshape(3 * C, 1)                         # (3C, 1)

    # ---- fused LHS projection weights: per-head column blocks [Wq_h^T | 0] ------------
    wq_t_h = jnp.transpose(wq_h, (0, 2, 1))                                 # (head, C, d)
    w_lhs = jnp.concatenate([wq_t_h, jnp.zeros_like(wq_t_h)], axis=2)       # (head, C, 2d)
    w_lhs = jnp.transpose(w_lhs, (1, 0, 2)).reshape(C, 2 * C)               # (C, 2C)

    # additive constant: per-head column blocks [bq_h (bcast over N) | pos_h^T]
    pos = (rel_h + rel_w).reshape(C, N).astype(f32)                         # (C, N)
    pos_nc = pos.T.reshape(N, head, d)
    bq_b = jnp.broadcast_to(bq_h[None, :, :], (N, head, d))
    add_lhs = jnp.concatenate([bq_b, pos_nc], axis=2).reshape(N, 2 * C)     # (N, 2C)

    bt = _pick_batch_block(B, C, N)
    grid = (B // bt,)
    # TODO(synk): on v7x (2 TCs) add a second "parallel" grid axis (heads / query tiles)
    # when grid collapses to a single step so both TensorCores stay busy.

    out = pl.pallas_call(
        make_mhsa_kernel(head, d, bt, compute_dtype),
        out_shape=jax.ShapeDtypeStruct((B, C, N), f32),
        grid_spec=pltpu.PrefetchScalarGridSpec(
            num_scalar_prefetch=0,
            grid=grid,
            in_specs=[
                pl.BlockSpec((bt, C, N), lambda i: (i, 0, 0)),              # x (only input view)
                # batch-invariant operands: single-buffered (block index never changes)
                pl.BlockSpec((3 * C, C), lambda i: (0, 0),
                             pipeline_mode=pl.Buffered(1)),                 # fused [K;Q;V] weights
                pl.BlockSpec((3 * C, 1), lambda i: (0, 0),
                             pipeline_mode=pl.Buffered(1)),                 # fused biases
                pl.BlockSpec((C, 2 * C), lambda i: (0, 0),
                             pipeline_mode=pl.Buffered(1)),                 # fused LHS weights
                pl.BlockSpec((N, 2 * C), lambda i: (0, 0),
                             pipeline_mode=pl.Buffered(1)),                 # bias + rel-pos constant
            ],
            out_specs=pl.BlockSpec((bt, C, N), lambda i: (i, 0, 0)),
        ),
        compiler_params=pltpu.CompilerParams(
            dimension_semantics=("parallel",),
            vmem_limit_bytes=_vmem_limit_bytes(),
        ),
    )(x_cn, w_rhs, b_rhs, w_lhs, add_lhs)

    return out.reshape(B, C, W, H)


def mhsa_reference(x, wq, bq, wk, bk, wv, bv, rel_h, rel_w, head):
    """Pure-JAX reference matching the PyTorch forward."""
    B, C, W, H = x.shape
    N = W * H
    d = C // head
    xf = x.reshape(B, C, N)

    def conv1x1(w, b):
        return jnp.einsum('oc,bcn->bon', w, xf) + b[None, :, None]

    q = conv1x1(wq, bq).reshape(B, head, d, N)
    k = conv1x1(wk, bk).reshape(B, head, d, N)
    v = conv1x1(wv, bv).reshape(B, head, d, N)

    cc = jnp.einsum('bhdn,bhdm->bhnm', q, k)
    pos = (rel_h + rel_w).reshape(1, head, d, N)
    cp = jnp.einsum('ohdn,bhdm->bhnm', pos, q)
    energy = cc + cp
    attn = jax.nn.softmax(energy, axis=-1)
    out = jnp.einsum('bhdn,bhmn->bhdm', v, attn)
    return out.reshape(B, C, W, H) + x


if __name__ == "__main__":
    # small shapes consistent with the module: MHSA(n_dims=4, width=16, height=16, head=2)
    B, C, W, H, head = 2, 4, 16, 16, 2
    d = C // head

    key = jax.random.PRNGKey(0)
    ks = jax.random.split(key, 9)
    x = jax.random.normal(ks[0], (B, C, W, H), dtype=jnp.float32)
    wq = jax.random.normal(ks[1], (C, C), dtype=jnp.float32) * 0.1
    bq = jax.random.normal(ks[2], (C,), dtype=jnp.float32) * 0.1
    wk = jax.random.normal(ks[3], (C, C), dtype=jnp.float32) * 0.1
    bk = jax.random.normal(ks[4], (C,), dtype=jnp.float32) * 0.1
    wv = jax.random.normal(ks[5], (C, C), dtype=jnp.float32) * 0.1
    bv = jax.random.normal(ks[6], (C,), dtype=jnp.float32) * 0.1
    rel_h = jax.random.normal(ks[7], (1, head, d, 1, H), dtype=jnp.float32)
    rel_w = jax.random.normal(ks[8], (1, head, d, W, 1), dtype=jnp.float32)

    out = mhsa_pallas(x, wq, bq, wk, bk, wv, bv, rel_h, rel_w, head)
    out = jax.block_until_ready(out)

    ref = mhsa_reference(x, wq, bq, wk, bk, wv, bv, rel_h, rel_w, head)
    assert out.shape == (B, C, W, H)
    # tolerance accounts for bf16 MXU operands + approx reciprocal (f32 accumulation).
    assert jnp.allclose(out, ref, rtol=1e-2, atol=1e-2), "mismatch vs reference"

    print("KERNEL_OK")
</pallas_src>

<mosaic_0001>
module attributes {stable_mosaic.version = 11 : i64} {
  func.func @kernel(%arg0: i32, %arg1: memref<2x4x256xf32, #tpu.memory_space<vmem>>, %arg2: memref<12x4xf32, #tpu.memory_space<vmem>>, %arg3: memref<12x1xf32, #tpu.memory_space<vmem>>, %arg4: memref<4x8xf32, #tpu.memory_space<vmem>>, %arg5: memref<256x8xf32, #tpu.memory_space<vmem>>, %arg6: memref<2x4x256xf32, #tpu.memory_space<vmem>>) attributes {dimension_semantics = [#tpu.dimension_semantics<parallel>], iteration_bounds = array<i64: 1>, scalar_prefetch = 0 : i64, scratch_operands = 0 : i64, tpu.core_type = #tpu.core_type<tc>, window_params = [{transform_indices = @transform_0, window_bounds = array<i64: 2, 4, 256>}, {pipeline_mode = #tpu.pipeline_mode<synchronous>, transform_indices = @transform_1, window_bounds = array<i64: 12, 4>}, {pipeline_mode = #tpu.pipeline_mode<synchronous>, transform_indices = @transform_2, window_bounds = array<i64: 12, 1>}, {pipeline_mode = #tpu.pipeline_mode<synchronous>, transform_indices = @transform_3, window_bounds = array<i64: 4, 8>}, {pipeline_mode = #tpu.pipeline_mode<synchronous>, transform_indices = @transform_4, window_bounds = array<i64: 256, 8>}, {transform_indices = @transform_5, window_bounds = array<i64: 2, 4, 256>}]} {
    %c0 = arith.constant 0 : index
    %c0_0 = arith.constant 0 : index
    %0 = vector.load %arg2[%c0, %c0_0] : memref<12x4xf32, #tpu.memory_space<vmem>>, vector<12x4xf32>
    %c0_1 = arith.constant 0 : index
    %c0_2 = arith.constant 0 : index
    %1 = vector.load %arg3[%c0_1, %c0_2] : memref<12x1xf32, #tpu.memory_space<vmem>>, vector<12x1xf32>
    %c0_3 = arith.constant 0 : index
    %c0_4 = arith.constant 0 : index
    %2 = vector.load %arg4[%c0_3, %c0_4] : memref<4x8xf32, #tpu.memory_space<vmem>>, vector<4x8xf32>
    %c0_5 = arith.constant 0 : index
    %c0_6 = arith.constant 0 : index
    %3 = vector.load %arg5[%c0_5, %c0_6] : memref<256x8xf32, #tpu.memory_space<vmem>>, vector<256x8xf32>
    %cst = arith.constant 1.000000e+00 : bf16
    %4 = vector.broadcast %cst : bf16 to vector<1x256xbf16>
    %c0_7 = arith.constant 0 : index
    %c0_8 = arith.constant 0 : index
    %c0_9 = arith.constant 0 : index
    %5 = vector.load %arg1[%c0_7, %c0_8, %c0_9] : memref<2x4x256xf32, #tpu.memory_space<vmem>>, vector<1x4x256xf32>
    %6 = vector.shape_cast %5 : vector<1x4x256xf32> to vector<4x256xf32>
    %cst_10 = arith.constant dense<0.000000e+00> : vector<12x256xf32>
    %7 = tpu.matmul %0, %6, %cst_10 {dimension_numbers = #tpu.dot_dimension_numbers<[1], [0], [0], [1], [0, 0, 1, 1], [], []>} : vector<12x4xf32>, vector<4x256xf32>, vector<12x256xf32> -> vector<12x256xf32>
    %8 = vector.broadcast %1 : vector<12x1xf32> to vector<12x256xf32>
    %9 = arith.addf %7, %8 : vector<12x256xf32>
    %cst_11 = arith.constant dense<0.000000e+00> : vector<256x8xf32>
    %10 = tpu.matmul %6, %2, %cst_11 {dimension_numbers = #tpu.dot_dimension_numbers<[0], [0], [1], [1], [0, 1, 1, 1], [], []>} : vector<4x256xf32>, vector<4x8xf32>, vector<256x8xf32> -> vector<256x8xf32>
    %11 = arith.addf %10, %3 : vector<256x8xf32>
    %12 = vector.extract_strided_slice %11 {offsets = [0, 0], sizes = [256, 4], strides = [1, 1]} : vector<256x8xf32> to vector<256x4xf32>
    %13 = vector.extract_strided_slice %9 {offsets = [0, 0], sizes = [4, 256], strides = [1, 1]} : vector<12x256xf32> to vector<4x256xf32>
    %14 = vector.extract_strided_slice %9 {offsets = [8, 0], sizes = [2, 256], strides = [1, 1]} : vector<12x256xf32> to vector<2x256xf32>
    %15 = arith.truncf %12 : vector<256x4xf32> to vector<256x4xbf16>
    %16 = arith.truncf %13 : vector<4x256xf32> to vector<4x256xbf16>
    %cst_12 = arith.constant dense<0.000000e+00> : vector<256x256xf32>
    %17 = tpu.matmul %15, %16, %cst_12 {dimension_numbers = #tpu.dot_dimension_numbers<[1], [0], [0], [1], [0, 0, 1, 1], [], []>} : vector<256x4xbf16>, vector<4x256xbf16>, vector<256x256xf32> -> vector<256x256xf32>
    %cst_13 = arith.constant dense<0xFF800000> : vector<256xf32>
    %18 = vector.multi_reduction <maximumf>, %17, %cst_13 [1] : vector<256x256xf32> to vector<256xf32>
    %19 = vector.shape_cast %18 : vector<256xf32> to vector<256x1xf32>
    %20 = vector.broadcast %19 : vector<256x1xf32> to vector<256x256xf32>
    %21 = arith.subf %17, %20 : vector<256x256xf32>
    %22 = math.exp %21 : vector<256x256xf32>
    %23 = arith.truncf %22 : vector<256x256xf32> to vector<256x256xbf16>
    %24 = arith.truncf %14 : vector<2x256xf32> to vector<2x256xbf16>
    %cst_14 = arith.constant dense<0.000000e+00> : vector<2x256xf32>
    %25 = tpu.matmul %24, %23, %cst_14 {dimension_numbers = #tpu.dot_dimension_numbers<[1], [1], [0], [0], [0, 0, 1, 0], [], []>} : vector<2x256xbf16>, vector<256x256xbf16>, vector<2x256xf32> -> vector<2x256xf32>
    %cst_15 = arith.constant dense<0.000000e+00> : vector<1x256xf32>
    %26 = tpu.matmul %4, %23, %cst_15 {dimension_numbers = #tpu.dot_dimension_numbers<[1], [1], [0], [0], [0, 0, 1, 0], [], []>} : vector<1x256xbf16>, vector<256x256xbf16>, vector<1x256xf32> -> vector<1x256xf32>
    %27 = tpu.reciprocal %26 {approx = true} : vector<1x256xf32> -> vector<1x256xf32>
    %28 = vector.broadcast %27 : vector<1x256xf32> to vector<2x256xf32>
    %29 = arith.mulf %25, %28 : vector<2x256xf32>
    %30 = vector.extract_strided_slice %6 {offsets = [0, 0], sizes = [2, 256], strides = [1, 1]} : vector<4x256xf32> to vector<2x256xf32>
    %31 = arith.addf %29, %30 : vector<2x256xf32>
    %c0_16 = arith.constant 0 : index
    %c0_17 = arith.constant 0 : index
    %c0_18 = arith.constant 0 : index
    %32 = vector.load %arg6[%c0_16, %c0_17, %c0_18] : memref<2x4x256xf32, #tpu.memory_space<vmem>>, vector<1x2x256xf32>
    %33 = vector.shape_cast %32 : vector<1x2x256xf32> to vector<2x256xf32>
    %34 = vector.shape_cast %31 : vector<2x256xf32> to vector<1x2x256xf32>
    tpu.vector_store %arg6[%c0_16, %c0_17, %c0_18], %34 {strides = array<i32>} : memref<2x4x256xf32, #tpu.memory_space<vmem>>, vector<1x2x256xf32>,
    %35 = vector.extract_strided_slice %11 {offsets = [0, 4], sizes = [256, 4], strides = [1, 1]} : vector<256x8xf32> to vector<256x4xf32>
    %36 = vector.extract_strided_slice %9 {offsets = [4, 0], sizes = [4, 256], strides = [1, 1]} : vector<12x256xf32> to vector<4x256xf32>
    %37 = vector.extract_strided_slice %9 {offsets = [10, 0], sizes = [2, 256], strides = [1, 1]} : vector<12x256xf32> to vector<2x256xf32>
    %38 = arith.truncf %35 : vector<256x4xf32> to vector<256x4xbf16>
    %39 = arith.truncf %36 : vector<4x256xf32> to vector<4x256xbf16>
    %cst_19 = arith.constant dense<0.000000e+00> : vector<256x256xf32>
    %40 = tpu.matmul %38, %39, %cst_19 {dimension_numbers = #tpu.dot_dimension_numbers<[1], [0], [0], [1], [0, 0, 1, 1], [], []>} : vector<256x4xbf16>, vector<4x256xbf16>, vector<256x256xf32> -> vector<256x256xf32>
    %cst_20 = arith.constant dense<0xFF800000> : vector<256xf32>
    %41 = vector.multi_reduction <maximumf>, %40, %cst_20 [1] : vector<256x256xf32> to vector<256xf32>
    %42 = vector.shape_cast %41 : vector<256xf32> to vector<256x1xf32>
    %43 = vector.broadcast %42 : vector<256x1xf32> to vector<256x256xf32>
    %44 = arith.subf %40, %43 : vector<256x256xf32>
    %45 = math.exp %44 : vector<256x256xf32>
    %46 = arith.truncf %45 : vector<256x256xf32> to vector<256x256xbf16>
    %47 = arith.truncf %37 : vector<2x256xf32> to vector<2x256xbf16>
    %cst_21 = arith.constant dense<0.000000e+00> : vector<2x256xf32>
    %48 = tpu.matmul %47, %46, %cst_21 {dimension_numbers = #tpu.dot_dimension_numbers<[1], [1], [0], [0], [0, 0, 1, 0], [], []>} : vector<2x256xbf16>, vector<256x256xbf16>, vector<2x256xf32> -> vector<2x256xf32>
    %cst_22 = arith.constant dense<0.000000e+00> : vector<1x256xf32>
    %49 = tpu.matmul %4, %46, %cst_22 {dimension_numbers = #tpu.dot_dimension_numbers<[1], [1], [0], [0], [0, 0, 1, 0], [], []>} : vector<1x256xbf16>, vector<256x256xbf16>, vector<1x256xf32> -> vector<1x256xf32>
    %50 = tpu.reciprocal %49 {approx = true} : vector<1x256xf32> -> vector<1x256xf32>
    %51 = vector.broadcast %50 : vector<1x256xf32> to vector<2x256xf32>
    %52 = arith.mulf %48, %51 : vector<2x256xf32>
    %53 = vector.extract_strided_slice %6 {offsets = [2, 0], sizes = [2, 256], strides = [1, 1]} : vector<4x256xf32> to vector<2x256xf32>
    %54 = arith.addf %52, %53 : vector<2x256xf32>
    %c0_23 = arith.constant 0 : index
    %c2 = arith.constant 2 : index
    %c0_24 = arith.constant 0 : index
    %55 = vector.load %arg6[%c0_23, %c2, %c0_24] : memref<2x4x256xf32, #tpu.memory_space<vmem>>, vector<1x2x256xf32>
    %56 = vector.shape_cast %55 : vector<1x2x256xf32> to vector<2x256xf32>
    %57 = vector.shape_cast %54 : vector<2x256xf32> to vector<1x2x256xf32>
    tpu.vector_store %arg6[%c0_23, %c2, %c0_24], %57 {strides = array<i32>} : memref<2x4x256xf32, #tpu.memory_space<vmem>>, vector<1x2x256xf32>,
    %c1 = arith.constant 1 : index
    %c0_25 = arith.constant 0 : index
    %c0_26 = arith.constant 0 : index
    %58 = vector.load %arg1[%c1, %c0_25, %c0_26] : memref<2x4x256xf32, #tpu.memory_space<vmem>>, vector<1x4x256xf32>
    %59 = vector.shape_cast %58 : vector<1x4x256xf32> to vector<4x256xf32>
    %cst_27 = arith.constant dense<0.000000e+00> : vector<12x256xf32>
    %60 = tpu.matmul %0, %59, %cst_27 {dimension_numbers = #tpu.dot_dimension_numbers<[1], [0], [0], [1], [0, 0, 1, 1], [], []>} : vector<12x4xf32>, vector<4x256xf32>, vector<12x256xf32> -> vector<12x256xf32>
    %61 = vector.broadcast %1 : vector<12x1xf32> to vector<12x256xf32>
    %62 = arith.addf %60, %61 : vector<12x256xf32>
    %cst_28 = arith.constant dense<0.000000e+00> : vector<256x8xf32>
    %63 = tpu.matmul %59, %2, %cst_28 {dimension_numbers = #tpu.dot_dimension_numbers<[0], [0], [1], [1], [0, 1, 1, 1], [], []>} : vector<4x256xf32>, vector<4x8xf32>, vector<256x8xf32> -> vector<256x8xf32>
    %64 = arith.addf %63, %3 : vector<256x8xf32>
    %65 = vector.extract_strided_slice %64 {offsets = [0, 0], sizes = [256, 4], strides = [1, 1]} : vector<256x8xf32> to vector<256x4xf32>
    %66 = vector.extract_strided_slice %62 {offsets = [0, 0], sizes = [4, 256], strides = [1, 1]} : vector<12x256xf32> to vector<4x256xf32>
    %67 = vector.extract_strided_slice %62 {offsets = [8, 0], sizes = [2, 256], strides = [1, 1]} : vector<12x256xf32> to vector<2x256xf32>
    %68 = arith.truncf %65 : vector<256x4xf32> to vector<256x4xbf16>
    %69 = arith.truncf %66 : vector<4x256xf32> to vector<4x256xbf16>
    %cst_29 = arith.constant dense<0.000000e+00> : vector<256x256xf32>
    %70 = tpu.matmul %68, %69, %cst_29 {dimension_numbers = #tpu.dot_dimension_numbers<[1], [0], [0], [1], [0, 0, 1, 1], [], []>} : vector<256x4xbf16>, vector<4x256xbf16>, vector<256x256xf32> -> vector<256x256xf32>
    %cst_30 = arith.constant dense<0xFF800000> : vector<256xf32>
    %71 = vector.multi_reduction <maximumf>, %70, %cst_30 [1] : vector<256x256xf32> to vector<256xf32>
    %72 = vector.shape_cast %71 : vector<256xf32> to vector<256x1xf32>
    %73 = vector.broadcast %72 : vector<256x1xf32> to vector<256x256xf32>
    %74 = arith.subf %70, %73 : vector<256x256xf32>
    %75 = math.exp %74 : vector<256x256xf32>
    %76 = arith.truncf %75 : vector<256x256xf32> to vector<256x256xbf16>
    %77 = arith.truncf %67 : vector<2x256xf32> to vector<2x256xbf16>
    %cst_31 = arith.constant dense<0.000000e+00> : vector<2x256xf32>
    %78 = tpu.matmul %77, %76, %cst_31 {dimension_numbers = #tpu.dot_dimension_numbers<[1], [1], [0], [0], [0, 0, 1, 0], [], []>} : vector<2x256xbf16>, vector<256x256xbf16>, vector<2x256xf32> -> vector<2x256xf32>
    %cst_32 = arith.constant dense<0.000000e+00> : vector<1x256xf32>
    %79 = tpu.matmul %4, %76, %cst_32 {dimension_numbers = #tpu.dot_dimension_numbers<[1], [1], [0], [0], [0, 0, 1, 0], [], []>} : vector<1x256xbf16>, vector<256x256xbf16>, vector<1x256xf32> -> vector<1x256xf32>
    %80 = tpu.reciprocal %79 {approx = true} : vector<1x256xf32> -> vector<1x256xf32>
    %81 = vector.broadcast %80 : vector<1x256xf32> to vector<2x256xf32>
    %82 = arith.mulf %78, %81 : vector<2x256xf32>
    %83 = vector.extract_strided_slice %59 {offsets = [0, 0], sizes = [2, 256], strides = [1, 1]} : vector<4x256xf32> to vector<2x256xf32>
    %84 = arith.addf %82, %83 : vector<2x256xf32>
    %c1_33 = arith.constant 1 : index
    %c0_34 = arith.constant 0 : index
    %c0_35 = arith.constant 0 : index
    %85 = vector.load %arg6[%c1_33, %c0_34, %c0_35] : memref<2x4x256xf32, #tpu.memory_space<vmem>>, vector<1x2x256xf32>
    %86 = vector.shape_cast %85 : vector<1x2x256xf32> to vector<2x256xf32>
    %87 = vector.shape_cast %84 : vector<2x256xf32> to vector<1x2x256xf32>
    tpu.vector_store %arg6[%c1_33, %c0_34, %c0_35], %87 {strides = array<i32>} : memref<2x4x256xf32, #tpu.memory_space<vmem>>, vector<1x2x256xf32>,
    %88 = vector.extract_strided_slice %64 {offsets = [0, 4], sizes = [256, 4], strides = [1, 1]} : vector<256x8xf32> to vector<256x4xf32>
    %89 = vector.extract_strided_slice %62 {offsets = [4, 0], sizes = [4, 256], strides = [1, 1]} : vector<12x256xf32> to vector<4x256xf32>
    %90 = vector.extract_strided_slice %62 {offsets = [10, 0], sizes = [2, 256], strides = [1, 1]} : vector<12x256xf32> to vector<2x256xf32>
    %91 = arith.truncf %88 : vector<256x4xf32> to vector<256x4xbf16>
    %92 = arith.truncf %89 : vector<4x256xf32> to vector<4x256xbf16>
    %cst_36 = arith.constant dense<0.000000e+00> : vector<256x256xf32>
    %93 = tpu.matmul %91, %92, %cst_36 {dimension_numbers = #tpu.dot_dimension_numbers<[1], [0], [0], [1], [0, 0, 1, 1], [], []>} : vector<256x4xbf16>, vector<4x256xbf16>, vector<256x256xf32> -> vector<256x256xf32>
    %cst_37 = arith.constant dense<0xFF800000> : vector<256xf32>
    %94 = vector.multi_reduction <maximumf>, %93, %cst_37 [1] : vector<256x256xf32> to vector<256xf32>
    %95 = vector.shape_cast %94 : vector<256xf32> to vector<256x1xf32>
    %96 = vector.broadcast %95 : vector<256x1xf32> to vector<256x256xf32>
    %97 = arith.subf %93, %96 : vector<256x256xf32>
    %98 = math.exp %97 : vector<256x256xf32>
    %99 = arith.truncf %98 : vector<256x256xf32> to vector<256x256xbf16>
    %100 = arith.truncf %90 : vector<2x256xf32> to vector<2x256xbf16>
    %cst_38 = arith.constant dense<0.000000e+00> : vector<2x256xf32>
    %101 = tpu.matmul %100, %99, %cst_38 {dimension_numbers = #tpu.dot_dimension_numbers<[1], [1], [0], [0], [0, 0, 1, 0], [], []>} : vector<2x256xbf16>, vector<256x256xbf16>, vector<2x256xf32> -> vector<2x256xf32>
    %cst_39 = arith.constant dense<0.000000e+00> : vector<1x256xf32>
    %102 = tpu.matmul %4, %99, %cst_39 {dimension_numbers = #tpu.dot_dimension_numbers<[1], [1], [0], [0], [0, 0, 1, 0], [], []>} : vector<1x256xbf16>, vector<256x256xbf16>, vector<1x256xf32> -> vector<1x256xf32>
    %103 = tpu.reciprocal %102 {approx = true} : vector<1x256xf32> -> vector<1x256xf32>
    %104 = vector.broadcast %103 : vector<1x256xf32> to vector<2x256xf32>
    %105 = arith.mulf %101, %104 : vector<2x256xf32>
    %106 = vector.extract_strided_slice %59 {offsets = [2, 0], sizes = [2, 256], strides = [1, 1]} : vector<4x256xf32> to vector<2x256xf32>
    %107 = arith.addf %105, %106 : vector<2x256xf32>
    %c1_40 = arith.constant 1 : index
    %c2_41 = arith.constant 2 : index
    %c0_42 = arith.constant 0 : index
    %108 = vector.load %arg6[%c1_40, %c2_41, %c0_42] : memref<2x4x256xf32, #tpu.memory_space<vmem>>, vector<1x2x256xf32>
    %109 = vector.shape_cast %108 : vector<1x2x256xf32> to vector<2x256xf32>
    %110 = vector.shape_cast %107 : vector<2x256xf32> to vector<1x2x256xf32>
    tpu.vector_store %arg6[%c1_40, %c2_41, %c0_42], %110 {strides = array<i32>} : memref<2x4x256xf32, #tpu.memory_space<vmem>>, vector<1x2x256xf32>,
    return
  }
  func.func @transform_0(%arg0: i32) -> (i32, i32, i32) {
    %c0_i32 = arith.constant 0 : i32
    %c0_i32_0 = arith.constant 0 : i32
    %c0_i32_1 = arith.constant 0 : i32
    return %arg0, %c0_i32, %c0_i32_0 : i32, i32, i32
  }
  func.func @transform_1(%arg0: i32) -> (i32, i32) {
    %c0_i32 = arith.constant 0 : i32
    %c0_i32_0 = arith.constant 0 : i32
    %c0_i32_1 = arith.constant 0 : i32
    return %c0_i32, %c0_i32_0 : i32, i32
  }
  func.func @transform_2(%arg0: i32) -> (i32, i32) {
    %c0_i32 = arith.constant 0 : i32
    %c0_i32_0 = arith.constant 0 : i32
    %c0_i32_1 = arith.constant 0 : i32
    return %c0_i32, %c0_i32_0 : i32, i32
  }
  func.func @transform_3(%arg0: i32) -> (i32, i32) {
    %c0_i32 = arith.constant 0 : i32
    %c0_i32_0 = arith.constant 0 : i32
    %c0_i32_1 = arith.constant 0 : i32
    return %c0_i32, %c0_i32_0 : i32, i32
  }
  func.func @transform_4(%arg0: i32) -> (i32, i32) {
    %c0_i32 = arith.constant 0 : i32
    %c0_i32_0 = arith.constant 0 : i32
    %c0_i32_1 = arith.constant 0 : i32
    return %c0_i32, %c0_i32_0 : i32, i32
  }
  func.func @transform_5(%arg0: i32) -> (i32, i32, i32) {
    %c0_i32 = arith.constant 0 : i32
    %c0_i32_0 = arith.constant 0 : i32
    %c0_i32_1 = arith.constant 0 : i32
    return %arg0, %c0_i32, %c0_i32_0 : i32, i32, i32
  }
}

</mosaic_0001>

<llo_original>
// kernel: tpu_custom_call.1
$region0: #{tpu_custom_call.1}
  #allocation0 [shape = 'u32[]', space=smem, size = 0x4, offset = 0x4, fixed_abs, tag = 'smem constant byte address 0x4 - core index']
  #allocation1 [shape = 'u32[144,128]{1,0:T(1,128)}', space=vmem, size = 0x12000, scoped, tag = 'internal scratch']
  %s0 = inlined_call_operand.vmem [shape: f32[2,4,256], index: 0, kind: input, shape index: {}]
  %s1 = inlined_call_operand.vmem [shape: f32[12,4], index: 1, kind: input, shape index: {}]
  %s2 = inlined_call_operand.vmem [shape: f32[12,1], index: 2, kind: input, shape index: {}]
  %s3 = inlined_call_operand.vmem [shape: f32[4,8], index: 3, kind: input, shape index: {}]
  %s4 = inlined_call_operand.vmem [shape: f32[256,8], index: 4, kind: input, shape index: {}]
  %s5 = inlined_call_operand.hbm [shape: f32[2,4,256], index: 5, kind: output, shape index: {}]
  %s6 = sld [smem:[#allocation0]]
  $region30: #{tpu_custom_call.1} parent=0
    _
  %s8 = ssub.s32 1, %s6
  %s9 = scalar_select 0, %s8, %s6
  $region1: #{tpu_custom_call.1} parent=0
    #allocation2 [shape = 'u8[8192]{0}', space=vmem, size = 0x2000, scoped, tag = 'output window, operand 0, single buffered']
    #allocation3 [shape = 's32[1]{0}', space=sflag, size = 0x4, scoped, tag = 'scoped memory for tpu_custom_call.1']
    %10 = vsyncpa [#allocation3], 0
    // Predicated region
    $region2: #{tpu_custom_call.1} parent=1 // pred_check
      _
    $region3: #{tpu_custom_call.1} parent=1 // pred_check_branch
      %12 = sbr.rel (0) target = $region5
    $region4: #{tpu_custom_call.1} parent=1 // pred_region
      _
    $region5: #{tpu_custom_call.1} parent=1 // pred_fallthru
      _
    // Predicated region
    $region6: #{tpu_custom_call.1} parent=1 // pred_check
      _
    $region7: #{tpu_custom_call.1} parent=1 // pred_check_branch
      %14 = sbr.rel (0) target = $region9
    $region8: #{tpu_custom_call.1} parent=1 // pred_region
      _
    $region9: #{tpu_custom_call.1} parent=1 // pred_fallthru
      _
    // Predicated region
    $region10: #{tpu_custom_call.1} parent=1 // pred_check
      _
    $region11: #{tpu_custom_call.1} parent=1 // pred_check_branch
      %16 = sbr.rel (0) target = $region13
    $region12: #{tpu_custom_call.1} parent=1 // pred_region
      _
    $region13: #{tpu_custom_call.1} parent=1 // pred_fallthru
      _
    // Predicated region
    $region14: #{tpu_custom_call.1} parent=1 // pred_check
      _
    $region15: #{tpu_custom_call.1} parent=1 // pred_check_branch
      %18 = sbr.rel (0) target = $region17
    $region16: #{tpu_custom_call.1} parent=1 // pred_region
      _
    $region17: #{tpu_custom_call.1} parent=1 // pred_fallthru
      _
    // Predicated region
    $region18: #{tpu_custom_call.1} parent=1 // pred_check
      _
    $region19: #{tpu_custom_call.1} parent=1 // pred_check_branch
      %20 = sbr.rel (0) target = $region21
    $region20: #{tpu_custom_call.1} parent=1 // pred_region
      _
    $region21: #{tpu_custom_call.1} parent=1 // pred_fallthru
      _
    %v23 = vld [vmem:[%s1] sm:$0xff]
    %v24 = vld [vmem:[%s1 + $0x8] sm:$0xf]
    %v25 = vld [vmem:[%s2] sm:$0xff]
    %v26 = vld [vmem:[%s2 + $0x8] sm:$0xf]
    %v27 = vld [vmem:[%s3] sm:$0xf]
    %v28 = vld [vmem:[%s4] sm:$0xff]
    %v29 = vld [vmem:[%s4 + $0x8] sm:$0xff]
    %v30 = vld [vmem:[%s4 + $0x10] sm:$0xff]
    %v31 = vld [vmem:[%s4 + $0x18] sm:$0xff]
    %v32 = vld [vmem:[%s4 + $0x20] sm:$0xff]
    %v33 = vld [vmem:[%s4 + $0x28] sm:$0xff]
    %v34 = vld [vmem:[%s4 + $0x30] sm:$0xff]
    %v35 = vld [vmem:[%s4 + $0x38] sm:$0xff]
    %v36 = vld [vmem:[%s4 + $0x40] sm:$0xff]
    %v37 = vld [vmem:[%s4 + $0x48] sm:$0xff]
    %v38 = vld [vmem:[%s4 + $0x50] sm:$0xff]
    %v39 = vld [vmem:[%s4 + $0x58] sm:$0xff]
    %v40 = vld [vmem:[%s4 + $0x60] sm:$0xff]
    %v41 = vld [vmem:[%s4 + $0x68] sm:$0xff]
    %v42 = vld [vmem:[%s4 + $0x70] sm:$0xff]
    %v43 = vld [vmem:[%s4 + $0x78] sm:$0xff]
    %v44 = vld [vmem:[%s4 + $0x80] sm:$0xff]
    %v45 = vld [vmem:[%s4 + $0x88] sm:$0xff]
    %v46 = vld [vmem:[%s4 + $0x90] sm:$0xff]
    %v47 = vld [vmem:[%s4 + $0x98] sm:$0xff]
    %v48 = vld [vmem:[%s4 + $0xa0] sm:$0xff]
    %v49 = vld [vmem:[%s4 + $0xa8] sm:$0xff]
    %v50 = vld [vmem:[%s4 + $0xb0] sm:$0xff]
    %v51 = vld [vmem:[%s4 + $0xb8] sm:$0xff]
    %v52 = vld [vmem:[%s4 + $0xc0] sm:$0xff]
    %v53 = vld [vmem:[%s4 + $0xc8] sm:$0xff]
    %v54 = vld [vmem:[%s4 + $0xd0] sm:$0xff]
    %v55 = vld [vmem:[%s4 + $0xd8] sm:$0xff]
    %v56 = vld [vmem:[%s4 + $0xe0] sm:$0xff]
    %v57 = vld [vmem:[%s4 + $0xe8] sm:$0xff]
    %v58 = vld [vmem:[%s4 + $0xf0] sm:$0xff]
    %v59 = vld [vmem:[%s4 + $0xf8] sm:$0xff]
    %v60 = vld [vmem:[%s0] sm:$0xff]
    %62 = vset.pattern.permute.xlu0 0
    %63 = vperm.xlu0 %62, %v25
    %v64 = vpop.permute.xlu0 %63
    %67 = vset.pattern.permute.xlu0 0
    %68 = vperm.xlu0 %67, %v26
    %v69 = vpop.permute.xlu0 %68
    %v72 = vcombine.high %v60, %v60
    %vm73 = vcmask 31744
    %v75 = vsel %vm73, %v23, 0
    %v78 = vsel %vm73, %v24, 0
    %vm80 = vcmask 1043456
    %v81 = vsel %vm80, %v60, 0
    %v83 = vsel %vm80, %v72, 0
    %85 = vmatprep.subr.mxu0 0.0
    %86 = vmatpush1.msra.mxu0 0.0
    %87 = vmatprep.subr.mxu0 0.0
    %88 = vmatpush1.msra.mxu0 0.0
    %89 = vmatprep.subr.mxu0 0.0
    %90 = vmatpush1.msra.mxu0 0.0
    %91 = vmatprep.subr.mxu0 0.0
    %92 = vmatpush1.msra.mxu0 0.0
    %93 = vmatprep.subr.mxu0 0.0
    %94 = vmatpush1.msra.mxu0 0.0
    %95 = vmatprep.subr.mxu0 0.0
    %96 = vmatpush1.msra.mxu0 0.0
    %97 = vmatprep.subr.mxu0 0.0
    %98 = vmatpush1.msra.mxu0 0.0
    %99 = vmatprep.subr.mxu0 0.0
    %100 = vmatpush1.msra.mxu0 0.0
    %101 = vmatprep.subr.mxu0 0.0
    %102 = vmatpush1.msra.mxu0 0.0
    %103 = vmatprep.subr.mxu0 0.0
    %104 = vmatpush1.msra.mxu0 0.0
    %105 = vmatprep.subr.mxu0 0.0
    %106 = vmatpush1.msra.mxu0 0.0
    %107 = vmatprep.subr.mxu0 0.0
    %108 = vmatpush1.msra.mxu0 0.0
    %109 = vmatprep.subr.mxu0 0.0
    %110 = vmatpush1.msra.mxu0 0.0
    %111 = vmatprep.subr.mxu0 0.0
    %112 = vmatpush1.msra.mxu0 0.0
    %113 = vmatprep.subr.mxu0 0.0
    %114 = vmatpush1.msra.mxu0 0.0
    %115 = vmatprep.subr.mxu0 %v83
    %116 = vmatpush1.msra.mxu0 %v81
    %117 = vmatprep.subr.mxu0 0.0
    %118 = vmatpush2.msra.mxu0 0.0
    %119 = vmatprep.subr.mxu0 0.0
    %120 = vmatpush2.msra.mxu0 0.0
    %121 = vmatprep.subr.mxu0 0.0
    %122 = vmatpush2.msra.mxu0 0.0
    %123 = vmatprep.subr.mxu0 0.0
    %124 = vmatpush2.msra.mxu0 0.0
    %125 = vmatprep.subr.mxu0 0.0
    %126 = vmatpush2.msra.mxu0 0.0
    %127 = vmatprep.subr.mxu0 0.0
    %128 = vmatpush2.msra.mxu0 0.0
    %129 = vmatprep.subr.mxu0 0.0
    %130 = vmatpush2.msra.mxu0 0.0
    %131 = vmatprep.subr.mxu0 0.0
    %132 = vmatpush2.msra.mxu0 0.0
    %133 = vmatprep.subr.mxu0 0.0
    %134 = vmatpush2.msra.mxu0 0.0
    %135 = vmatprep.subr.mxu0 0.0
    %136 = vmatpush2.msra.mxu0 0.0
    %137 = vmatprep.subr.mxu0 0.0
    %138 = vmatpush2.msra.mxu0 0.0
    %139 = vmatprep.subr.mxu0 0.0
    %140 = vmatpush2.msra.mxu0 0.0
    %141 = vmatprep.subr.mxu0 0.0
    %142 = vmatpush2.msra.mxu0 0.0
    %143 = vmatprep.subr.mxu0 0.0
    %144 = vmatpush2.msra.mxu0 0.0
    %145 = vmatprep.subr.mxu0 0.0
    %146 = vmatpush2.msra.mxu0 0.0
    %147 = vmatprep.subr.mxu0 0.0
    %148 = vmatpush2.msra.mxu0 0.0
    %149 = vmatprep.mubr.f32.mxu0 0.0
    %150 = vmatmul.mubr.f32.gmra.mxu0 %v75
    %v151 = vpop.f32.mrf.mxu0
    %v152 = vadd.f32 %v64, %v151
    %v153 = vpop.f32.mrf.mxu0
    %v154 = vadd.f32 %v64, %v153
    %155 = vmatprep.mubr.f32.mxu0 0.0
    %156 = vmatmul.mubr.f32.gmra.mxu0 %v78
    %v157 = vpop.f32.mrf.mxu0
    %v158 = vadd.f32 %v69, %v157
    %v159 = vpop.f32.mrf.mxu0
    %v160 = vadd.f32 %v69, %v159
    %161 = vdwg.mxu0
    %163 = vxpose.xlu0.b32.start [1/16] %v60, 128
    %164 = vxpose.xlu0.b32.cont [2/16] 0.0, 128
    %165 = vxpose.xlu0.b32.cont [3/16] 0.0, 128
    %166 = vxpose.xlu0.b32.cont [4/16] 0.0, 128
    %167 = vxpose.xlu0.b32.cont [5/16] 0.0, 128
    %168 = vxpose.xlu0.b32.cont [6/16] 0.0, 128
    %169 = vxpose.xlu0.b32.cont [7/16] 0.0, 128
    %170 = vxpose.xlu0.b32.cont [8/16] 0.0, 128
    %171 = vxpose.xlu0.b32.cont [9/16] 0.0, 128
    %172 = vxpose.xlu0.b32.cont [10/16] 0.0, 128
    %173 = vxpose.xlu0.b32.cont [11/16] 0.0, 128
    %174 = vxpose.xlu0.b32.cont [12/16] 0.0, 128
    %175 = vxpose.xlu0.b32.cont [13/16] 0.0, 128
    %176 = vxpose.xlu0.b32.cont [14/16] 0.0, 128
    %177 = vxpose.xlu0.b32.cont [15/16] 0.0, 128
    %178 = vxpose.xlu0.b32.end [16/16] 0.0, 128
    %v179 = vpop.trf.xlu0
    %v180 = vpop.trf.xlu0
    %v181 = vpop.trf.xlu0
    %v182 = vpop.trf.xlu0
    %v183 = vpop.trf.xlu0
    %v184 = vpop.trf.xlu0
    %v185 = vpop.trf.xlu0
    %v186 = vpop.trf.xlu0
    %v187 = vpop.trf.xlu0
    %v188 = vpop.trf.xlu0
    %v189 = vpop.trf.xlu0
    %v190 = vpop.trf.xlu0
    %v191 = vpop.trf.xlu0
    %v192 = vpop.trf.xlu0
    %v193 = vpop.trf.xlu0
    %v194 = vpop.trf.xlu0
    %195 = vxpose.xlu0.b32.start [1/16] %v72, 128
    %196 = vxpose.xlu0.b32.cont [2/16] 0.0, 128
    %197 = vxpose.xlu0.b32.cont [3/16] 0.0, 128
    %198 = vxpose.xlu0.b32.cont [4/16] 0.0, 128
    %199 = vxpose.xlu0.b32.cont [5/16] 0.0, 128
    %200 = vxpose.xlu0.b32.cont [6/16] 0.0, 128
    %201 = vxpose.xlu0.b32.cont [7/16] 0.0, 128
    %202 = vxpose.xlu0.b32.cont [8/16] 0.0, 128
    %203 = vxpose.xlu0.b32.cont [9/16] 0.0, 128
    %204 = vxpose.xlu0.b32.cont [10/16] 0.0, 128
    %205 = vxpose.xlu0.b32.cont [11/16] 0.0, 128
    %206 = vxpose.xlu0.b32.cont [12/16] 0.0, 128
    %207 = vxpose.xlu0.b32.cont [13/16] 0.0, 128
    %208 = vxpose.xlu0.b32.cont [14/16] 0.0, 128
    %209 = vxpose.xlu0.b32.cont [15/16] 0.0, 128
    %210 = vxpose.xlu0.b32.end [16/16] 0.0, 128
    %v211 = vpop.trf.xlu0
    %v212 = vpop.trf.xlu0
    %v213 = vpop.trf.xlu0
    %v214 = vpop.trf.xlu0
    %v215 = vpop.trf.xlu0
    %v216 = vpop.trf.xlu0
    %v217 = vpop.trf.xlu0
    %v218 = vpop.trf.xlu0
    %v219 = vpop.trf.xlu0
    %v220 = vpop.trf.xlu0
    %v221 = vpop.trf.xlu0
    %v222 = vpop.trf.xlu0
    %v223 = vpop.trf.xlu0
    %v224 = vpop.trf.xlu0
    %v225 = vpop.trf.xlu0
    %v226 = vpop.trf.xlu0
    %v228 = vsel %vm73, %v179, 0
    %v231 = vsel %vm73, %v180, 0
    %v234 = vsel %vm73, %v181, 0
    %v237 = vsel %vm73, %v182, 0
    %v240 = vsel %vm73, %v183, 0
    %v243 = vsel %vm73, %v184, 0
    %v246 = vsel %vm73, %v185, 0
    %v249 = vsel %vm73, %v186, 0
    %v252 = vsel %vm73, %v187, 0
    %v255 = vsel %vm73, %v188, 0
    %v258 = vsel %vm73, %v189, 0
    %v261 = vsel %vm73, %v190, 0
    %v264 = vsel %vm73, %v191, 0
    %v267 = vsel %vm73, %v192, 0
    %v270 = vsel %vm73, %v193, 0
    %v273 = vsel %vm73, %v194, 0
    %v276 = vsel %vm73, %v211, 0
    %v279 = vsel %vm73, %v212, 0
    %v282 = vsel %vm73, %v213, 0
    %v285 = vsel %vm73, %v214, 0
    %v288 = vsel %vm73, %v215, 0
    %v291 = vsel %vm73, %v216, 0
    %v294 = vsel %vm73, %v217, 0
    %v297 = vsel %vm73, %v218, 0
    %v300 = vsel %vm73, %v219, 0
    %v303 = vsel %vm73, %v220, 0
    %v306 = vsel %vm73, %v221, 0
    %v309 = vsel %vm73, %v222, 0
    %v312 = vsel %vm73, %v223, 0
    %v315 = vsel %vm73, %v224, 0
    %v318 = vsel %vm73, %v225, 0
    %v321 = vsel %vm73, %v226, 0
    %v324 = vsel %vm80, %v27, 0
    %326 = vmatprep.subr.mxu0 0.0
    %327 = vmatpush1.msra.mxu0 0.0
    %328 = vmatprep.subr.mxu0 0.0
    %329 = vmatpush1.msra.mxu0 0.0
    %330 = vmatprep.subr.mxu0 0.0
    %331 = vmatpush1.msra.mxu0 0.0
    %332 = vmatprep.subr.mxu0 0.0
    %333 = vmatpush1.msra.mxu0 0.0
    %334 = vmatprep.subr.mxu0 0.0
    %335 = vmatpush1.msra.mxu0 0.0
    %336 = vmatprep.subr.mxu0 0.0
    %337 = vmatpush1.msra.mxu0 0.0
    %338 = vmatprep.subr.mxu0 0.0
    %339 = vmatpush1.msra.mxu0 0.0
    %340 = vmatprep.subr.mxu0 0.0
    %341 = vmatpush1.msra.mxu0 0.0
    %342 = vmatprep.subr.mxu0 0.0
    %343 = vmatpush1.msra.mxu0 0.0
    %344 = vmatprep.subr.mxu0 0.0
    %345 = vmatpush1.msra.mxu0 0.0
    %346 = vmatprep.subr.mxu0 0.0
    %347 = vmatpush1.msra.mxu0 0.0
    %348 = vmatprep.subr.mxu0 0.0
    %349 = vmatpush1.msra.mxu0 0.0
    %350 = vmatprep.subr.mxu0 0.0
    %351 = vmatpush1.msra.mxu0 0.0
    %352 = vmatprep.subr.mxu0 0.0
    %353 = vmatpush1.msra.mxu0 0.0
    %354 = vmatprep.subr.mxu0 0.0
    %355 = vmatpush1.msra.mxu0 0.0
    %356 = vmatprep.subr.mxu0 0.0
    %357 = vmatpush1.msra.mxu0 %v324
    %358 = vmatprep.subr.mxu0 0.0
    %359 = vmatpush2.msra.mxu0 0.0
    %360 = vmatprep.subr.mxu0 0.0
    %361 = vmatpush2.msra.mxu0 0.0
    %362 = vmatprep.subr.mxu0 0.0
    %363 = vmatpush2.msra.mxu0 0.0
    %364 = vmatprep.subr.mxu0 0.0
    %365 = vmatpush2.msra.mxu0 0.0
    %366 = vmatprep.subr.mxu0 0.0
    %367 = vmatpush2.msra.mxu0 0.0
    %368 = vmatprep.subr.mxu0 0.0
    %369 = vmatpush2.msra.mxu0 0.0
    %370 = vmatprep.subr.mxu0 0.0
    %371 = vmatpush2.msra.mxu0 0.0
    %372 = vmatprep.subr.mxu0 0.0
    %373 = vmatpush2.msra.mxu0 0.0
    %374 = vmatprep.subr.mxu0 0.0
    %375 = vmatpush2.msra.mxu0 0.0
    %376 = vmatprep.subr.mxu0 0.0
    %377 = vmatpush2.msra.mxu0 0.0
    %378 = vmatprep.subr.mxu0 0.0
    %379 = vmatpush2.msra.mxu0 0.0
    %380 = vmatprep.subr.mxu0 0.0
    %381 = vmatpush2.msra.mxu0 0.0
    %382 = vmatprep.subr.mxu0 0.0
    %383 = vmatpush2.msra.mxu0 0.0
    %384 = vmatprep.subr.mxu0 0.0
    %385 = vmatpush2.msra.mxu0 0.0
    %386 = vmatprep.subr.mxu0 0.0
    %387 = vmatpush2.msra.mxu0 0.0
    %388 = vmatprep.subr.mxu0 0.0
    %389 = vmatpush2.msra.mxu0 0.0
    %390 = vmatprep.mubr.f32.mxu0 0.0
    %391 = vmatmul.mubr.f32.gmra.mxu0 %v228
    %v392 = vpop.f32.mrf.mxu0
    %v393 = vadd.f32 %v28, %v392
    %v394 = vpop.f32.mrf.mxu0
    %395 = vmatprep.mubr.f32.mxu0 0.0
    %396 = vmatmul.mubr.f32.gmra.mxu0 %v231
    %v397 = vpop.f32.mrf.mxu0
    %v398 = vadd.f32 %v29, %v397
    %v399 = vpop.f32.mrf.mxu0
    %400 = vmatprep.mubr.f32.mxu0 0.0
    %401 = vmatmul.mubr.f32.gmra.mxu0 %v234
    %v402 = vpop.f32.mrf.mxu0
    %v403 = vadd.f32 %v30, %v402
    %v404 = vpop.f32.mrf.mxu0
    %405 = vmatprep.mubr.f32.mxu0 0.0
    %406 = vmatmul.mubr.f32.gmra.mxu0 %v237
    %v407 = vpop.f32.mrf.mxu0
    %v408 = vadd.f32 %v31, %v407
    %v409 = vpop.f32.mrf.mxu0
    %410 = vmatprep.mubr.f32.mxu0 0.0
    %411 = vmatmul.mubr.f32.gmra.mxu0 %v240
    %v412 = vpop.f32.mrf.mxu0
    %v413 = vadd.f32 %v32, %v412
    %v414 = vpop.f32.mrf.mxu0
    %415 = vmatprep.mubr.f32.mxu0 0.0
    %416 = vmatmul.mubr.f32.gmra.mxu0 %v243
    %v417 = vpop.f32.mrf.mxu0
    %v418 = vadd.f32 %v33, %v417
    %v419 = vpop.f32.mrf.mxu0
    %420 = vmatprep.mubr.f32.mxu0 0.0
    %421 = vmatmul.mubr.f32.gmra.mxu0 %v246
    %v422 = vpop.f32.mrf.mxu0
    %v423 = vadd.f32 %v34, %v422
    %v424 = vpop.f32.mrf.mxu0
    %425 = vmatprep.mubr.f32.mxu0 0.0
    %426 = vmatmul.mubr.f32.gmra.mxu0 %v249
    %v427 = vpop.f32.mrf.mxu0
    %v428 = vadd.f32 %v35, %v427
    %v429 = vpop.f32.mrf.mxu0
    %430 = vmatprep.mubr.f32.mxu0 0.0
    %431 = vmatmul.mubr.f32.gmra.mxu0 %v252
    %v432 = vpop.f32.mrf.mxu0
    %v433 = vadd.f32 %v36, %v432
    %v434 = vpop.f32.mrf.mxu0
    %435 = vmatprep.mubr.f32.mxu0 0.0
    %436 = vmatmul.mubr.f32.gmra.mxu0 %v255
    %v437 = vpop.f32.mrf.mxu0
    %v438 = vadd.f32 %v37, %v437
    %v439 = vpop.f32.mrf.mxu0
    %440 = vmatprep.mubr.f32.mxu0 0.0
    %441 = vmatmul.mubr.f32.gmra.mxu0 %v258
    %v442 = vpop.f32.mrf.mxu0
    %v443 = vadd.f32 %v38, %v442
    %v444 = vpop.f32.mrf.mxu0
    %445 = vmatprep.mubr.f32.mxu0 0.0
    %446 = vmatmul.mubr.f32.gmra.mxu0 %v261
    %v447 = vpop.f32.mrf.mxu0
    %v448 = vadd.f32 %v39, %v447
    %v449 = vpop.f32.mrf.mxu0
    %450 = vmatprep.mubr.f32.mxu0 0.0
    %451 = vmatmul.mubr.f32.gmra.mxu0 %v264
    %v452 = vpop.f32.mrf.mxu0
    %v453 = vadd.f32 %v40, %v452
    %v454 = vpop.f32.mrf.mxu0
    %455 = vmatprep.mubr.f32.mxu0 0.0
    %456 = vmatmul.mubr.f32.gmra.mxu0 %v267
    %v457 = vpop.f32.mrf.mxu0
    %v458 = vadd.f32 %v41, %v457
    %v459 = vpop.f32.mrf.mxu0
    %460 = vmatprep.mubr.f32.mxu0 0.0
    %461 = vmatmul.mubr.f32.gmra.mxu0 %v270
    %v462 = vpop.f32.mrf.mxu0
    %v463 = vadd.f32 %v42, %v462
    %v464 = vpop.f32.mrf.mxu0
    %465 = vmatprep.mubr.f32.mxu0 0.0
    %466 = vmatmul.mubr.f32.gmra.mxu0 %v273
    %v467 = vpop.f32.mrf.mxu0
    %v468 = vadd.f32 %v43, %v467
    %v469 = vpop.f32.mrf.mxu0
    %470 = vmatprep.mubr.f32.mxu0 0.0
    %471 = vmatmul.mubr.f32.gmra.mxu0 %v276
    %v472 = vpop.f32.mrf.mxu0
    %v473 = vadd.f32 %v44, %v472
    %v474 = vpop.f32.mrf.mxu0
    %475 = vmatprep.mubr.f32.mxu0 0.0
    %476 = vmatmul.mubr.f32.gmra.mxu0 %v279
    %v477 = vpop.f32.mrf.mxu0
    %v478 = vadd.f32 %v45, %v477
    %v479 = vpop.f32.mrf.mxu0
    %480 = vmatprep.mubr.f32.mxu0 0.0
    %481 = vmatmul.mubr.f32.gmra.mxu0 %v282
    %v482 = vpop.f32.mrf.mxu0
    %v483 = vadd.f32 %v46, %v482
    %v484 = vpop.f32.mrf.mxu0
    %485 = vmatprep.mubr.f32.mxu0 0.0
    %486 = vmatmul.mubr.f32.gmra.mxu0 %v285
    %v487 = vpop.f32.mrf.mxu0
    %v488 = vadd.f32 %v47, %v487
    %v489 = vpop.f32.mrf.mxu0
    %490 = vmatprep.mubr.f32.mxu0 0.0
    %491 = vmatmul.mubr.f32.gmra.mxu0 %v288
    %v492 = vpop.f32.mrf.mxu0
    %v493 = vadd.f32 %v48, %v492
    %v494 = vpop.f32.mrf.mxu0
    %495 = vmatprep.mubr.f32.mxu0 0.0
    %496 = vmatmul.mubr.f32.gmra.mxu0 %v291
    %v497 = vpop.f32.mrf.mxu0
    %v498 = vadd.f32 %v49, %v497
    %v499 = vpop.f32.mrf.mxu0
    %500 = vmatprep.mubr.f32.mxu0 0.0
    %501 = vmatmul.mubr.f32.gmra.mxu0 %v294
    %v502 = vpop.f32.mrf.mxu0
    %v503 = vadd.f32 %v50, %v502
    %v504 = vpop.f32.mrf.mxu0
    %505 = vmatprep.mubr.f32.mxu0 0.0
    %506 = vmatmul.mubr.f32.gmra.mxu0 %v297
    %v507 = vpop.f32.mrf.mxu0
    %v508 = vadd.f32 %v51, %v507
    %v509 = vpop.f32.mrf.mxu0
    %510 = vmatprep.mubr.f32.mxu0 0.0
    %511 = vmatmul.mubr.f32.gmra.mxu0 %v300
    %v512 = vpop.f32.mrf.mxu0
    %v513 = vadd.f32 %v52, %v512
    %v514 = vpop.f32.mrf.mxu0
    %515 = vmatprep.mubr.f32.mxu0 0.0
    %516 = vmatmul.mubr.f32.gmra.mxu0 %v303
    %v517 = vpop.f32.mrf.mxu0
    %v518 = vadd.f32 %v53, %v517
    %v519 = vpop.f32.mrf.mxu0
    %520 = vmatprep.mubr.f32.mxu0 0.0
    %521 = vmatmul.mubr.f32.gmra.mxu0 %v306
    %v522 = vpop.f32.mrf.mxu0
    %v523 = vadd.f32 %v54, %v522
    %v524 = vpop.f32.mrf.mxu0
    %525 = vmatprep.mubr.f32.mxu0 0.0
    %526 = vmatmul.mubr.f32.gmra.mxu0 %v309
    %v527 = vpop.f32.mrf.mxu0
    %v528 = vadd.f32 %v55, %v527
    %v529 = vpop.f32.mrf.mxu0
    %530 = vmatprep.mubr.f32.mxu0 0.0
    %531 = vmatmul.mubr.f32.gmra.mxu0 %v312
    %v532 = vpop.f32.mrf.mxu0
    %v533 = vadd.f32 %v56, %v532
    %v534 = vpop.f32.mrf.mxu0
    %535 = vmatprep.mubr.f32.mxu0 0.0
    %536 = vmatmul.mubr.f32.gmra.mxu0 %v315
    %v537 = vpop.f32.mrf.mxu0
    %v538 = vadd.f32 %v57, %v537
    %v539 = vpop.f32.mrf.mxu0
    %540 = vmatprep.mubr.f32.mxu0 0.0
    %541 = vmatmul.mubr.f32.gmra.mxu0 %v318
    %v542 = vpop.f32.mrf.mxu0
    %v543 = vadd.f32 %v58, %v542
    %v544 = vpop.f32.mrf.mxu0
    %545 = vmatprep.mubr.f32.mxu0 0.0
    %546 = vmatmul.mubr.f32.gmra.mxu0 %v321
    %v547 = vpop.f32.mrf.mxu0
    %v548 = vadd.f32 %v59, %v547
    %v549 = vpop.f32.mrf.mxu0
    %550 = vdwg.mxu0
    %v551 = vpack.c.bf16 %v398, %v393
    %v552 = vpack.c.bf16 %v408, %v403
    %v553 = vpack.c.bf16 %v418, %v413
    %v554 = vpack.c.bf16 %v428, %v423
    %v555 = vpack.c.bf16 %v438, %v433
    %v556 = vpack.c.bf16 %v448, %v443
    %v557 = vpack.c.bf16 %v458, %v453
    %v558 = vpack.c.bf16 %v468, %v463
    %v559 = vpack.c.bf16 %v478, %v473
    %v560 = vpack.c.bf16 %v488, %v483
    %v561 = vpack.c.bf16 %v498, %v493
    %v562 = vpack.c.bf16 %v508, %v503
    %v563 = vpack.c.bf16 %v518, %v513
    %v564 = vpack.c.bf16 %v528, %v523
    %v565 = vpack.c.bf16 %v538, %v533
    %v566 = vpack.c.bf16 %v548, %v543
    %v567 = vpack.c.bf16 %v152, %v152
    %v568 = vpack.c.bf16 %v154, %v154
    %v570 = vsel %vm73, %v551, 0
    %v573 = vsel %vm73, %v552, 0
    %v576 = vsel %vm73, %v553, 0
    %v579 = vsel %vm73, %v554, 0
    %v582 = vsel %vm73, %v555, 0
    %v585 = vsel %vm73, %v556, 0
    %v588 = vsel %vm73, %v557, 0
    %v591 = vsel %vm73, %v558, 0
    %v594 = vsel %vm73, %v559, 0
    %v597 = vsel %vm73, %v560, 0
    %v600 = vsel %vm73, %v561, 0
    %v603 = vsel %vm73, %v562, 0
    %v606 = vsel %vm73, %v563, 0
    %v609 = vsel %vm73, %v564, 0
    %v612 = vsel %vm73, %v565, 0
    %v615 = vsel %vm73, %v566, 0
    %vm617 = vcmask 1041408
    %v619 = vsel %vm617, %v567, 0
    %v622 = vsel %vm617, %v568, 0
    %624 = vmatprep.subr.bf16.mxu0 0
    %625 = vmatpush1.bf16.msra.mxu0 0
    %626 = vmatprep.subr.bf16.mxu0 0
    %627 = vmatpush1.bf16.msra.mxu0 0
    %628 = vmatprep.subr.bf16.mxu0 0
    %629 = vmatpush1.bf16.msra.mxu0 0
    %630 = vmatprep.subr.bf16.mxu0 0
    %631 = vmatpush1.bf16.msra.mxu0 0
    %632 = vmatprep.subr.bf16.mxu0 0
    %633 = vmatpush1.bf16.msra.mxu0 0
    %634 = vmatprep.subr.bf16.mxu0 0
    %635 = vmatpush1.bf16.msra.mxu0 0
    %636 = vmatprep.subr.bf16.mxu0 0
    %637 = vmatpush1.bf16.msra.mxu0 0
    %638 = vmatprep.subr.bf16.mxu0 %v622
    %639 = vmatpush1.bf16.msra.mxu0 %v619
    %640 = vmatprep.subr.bf16.mxu0 0
    %641 = vmatpush2.bf16.msra.mxu0 0
    %642 = vmatprep.subr.bf16.mxu0 0
    %643 = vmatpush2.bf16.msra.mxu0 0
    %644 = vmatprep.subr.bf16.mxu0 0
    %645 = vmatpush2.bf16.msra.mxu0 0
    %646 = vmatprep.subr.bf16.mxu0 0
    %647 = vmatpush2.bf16.msra.mxu0 0
    %648 = vmatprep.subr.bf16.mxu0 0
    %649 = vmatpush2.bf16.msra.mxu0 0
    %650 = vmatprep.subr.bf16.mxu0 0
    %651 = vmatpush2.bf16.msra.mxu0 0
    %652 = vmatprep.subr.bf16.mxu0 0
    %653 = vmatpush2.bf16.msra.mxu0 0
    %654 = vmatprep.subr.bf16.mxu0 0
    %655 = vmatpush2.bf16.msra.mxu0 0
    %656 = vmatprep.mubr.bf16.mxu0 0
    %657 = vmatmul.mubr.bf16.gmra.mxu0 %v570
    %v658 = vpop.f32.mrf.mxu0
    %v659 = vadd.f32 0.0, %v658
    %v660 = vpop.f32.mrf.mxu0
    %v661 = vadd.f32 0.0, %v660
    %v662 = vpop.f32.mrf.mxu0
    %v663 = vadd.f32 0.0, %v662
    %v664 = vpop.f32.mrf.mxu0
    %v665 = vadd.f32 0.0, %v664
    %666 = vmatprep.mubr.bf16.mxu0 0
    %667 = vmatmul.mubr.bf16.gmra.mxu0 %v573
    %v668 = vpop.f32.mrf.mxu0
    %v669 = vadd.f32 0.0, %v668
    %v670 = vpop.f32.mrf.mxu0
    %v671 = vadd.f32 0.0, %v670
    %v672 = vpop.f32.mrf.mxu0
    %v673 = vadd.f32 0.0, %v672
    %v674 = vpop.f32.mrf.mxu0
    %v675 = vadd.f32 0.0, %v674
    %676 = vmatprep.mubr.bf16.mxu0 0
    %677 = vmatmul.mubr.bf16.gmra.mxu0 %v576
    %v678 = vpop.f32.mrf.mxu0
    %v679 = vadd.f32 0.0, %v678
    %v680 = vpop.f32.mrf.mxu0
    %v681 = vadd.f32 0.0, %v680
    %v682 = vpop.f32.mrf.mxu0
    %v683 = vadd.f32 0.0, %v682
    %v684 = vpop.f32.mrf.mxu0
    %v685 = vadd.f32 0.0, %v684
    %686 = vmatprep.mubr.bf16.mxu0 0
    %687 = vmatmul.mubr.bf16.gmra.mxu0 %v579
    %v688 = vpop.f32.mrf.mxu0
    %v689 = vadd.f32 0.0, %v688
    %v690 = vpop.f32.mrf.mxu0
    %v691 = vadd.f32 0.0, %v690
    %v692 = vpop.f32.mrf.mxu0
    %v693 = vadd.f32 0.0, %v692
    %v694 = vpop.f32.mrf.mxu0
    %v695 = vadd.f32 0.0, %v694
    %696 = vmatprep.mubr.bf16.mxu0 0
    %697 = vmatmul.mubr.bf16.gmra.mxu0 %v582
    %v698 = vpop.f32.mrf.mxu0
    %v699 = vadd.f32 0.0, %v698
    %v700 = vpop.f32.mrf.mxu0
    %v701 = vadd.f32 0.0, %v700
    %v702 = vpop.f32.mrf.mxu0
    %v703 = vadd.f32 0.0, %v702
    %v704 = vpop.f32.mrf.mxu0
    %v705 = vadd.f32 0.0, %v704
    %706 = vmatprep.mubr.bf16.mxu0 0
    %707 = vmatmul.mubr.bf16.gmra.mxu0 %v585
    %v708 = vpop.f32.mrf.mxu0
    %v709 = vadd.f32 0.0, %v708
    %v710 = vpop.f32.mrf.mxu0
    %v711 = vadd.f32 0.0, %v710
    %v712 = vpop.f32.mrf.mxu0
    %v713 = vadd.f32 0.0, %v712
    %v714 = vpop.f32.mrf.mxu0
    %v715 = vadd.f32 0.0, %v714
    %716 = vmatprep.mubr.bf16.mxu0 0
    %717 = vmatmul.mubr.bf16.gmra.mxu0 %v588
    %v718 = vpop.f32.mrf.mxu0
    %v719 = vadd.f32 0.0, %v718
    %v720 = vpop.f32.mrf.mxu0
    %v721 = vadd.f32 0.0, %v720
    %v722 = vpop.f32.mrf.mxu0
    %v723 = vadd.f32 0.0, %v722
    %v724 = vpop.f32.mrf.mxu0
    %v725 = vadd.f32 0.0, %v724
    %726 = vmatprep.mubr.bf16.mxu0 0
    %727 = vmatmul.mubr.bf16.gmra.mxu0 %v591
    %v728 = vpop.f32.mrf.mxu0
    %v729 = vadd.f32 0.0, %v728
    %v730 = vpop.f32.mrf.mxu0
    %v731 = vadd.f32 0.0, %v730
    %v732 = vpop.f32.mrf.mxu0
    %v733 = vadd.f32 0.0, %v732
    %v734 = vpop.f32.mrf.mxu0
    %v735 = vadd.f32 0.0, %v734
    %736 = vmatprep.mubr.bf16.mxu0 0
    %737 = vmatmul.mubr.bf16.gmra.mxu0 %v594
    %v738 = vpop.f32.mrf.mxu0
    %v739 = vadd.f32 0.0, %v738
    %v740 = vpop.f32.mrf.mxu0
    %v741 = vadd.f32 0.0, %v740
    %v742 = vpop.f32.mrf.mxu0
    %v743 = vadd.f32 0.0, %v742
    %v744 = vpop.f32.mrf.mxu0
    %v745 = vadd.f32 0.0, %v744
    %746 = vmatprep.mubr.bf16.mxu0 0
    %747 = vmatmul.mubr.bf16.gmra.mxu0 %v597
    %v748 = vpop.f32.mrf.mxu0
    %v749 = vadd.f32 0.0, %v748
    %v750 = vpop.f32.mrf.mxu0
    %v751 = vadd.f32 0.0, %v750
    %v752 = vpop.f32.mrf.mxu0
    %v753 = vadd.f32 0.0, %v752
    %v754 = vpop.f32.mrf.mxu0
    %v755 = vadd.f32 0.0, %v754
    %756 = vmatprep.mubr.bf16.mxu0 0
    %757 = vmatmul.mubr.bf16.gmra.mxu0 %v600
    %v758 = vpop.f32.mrf.mxu0
    %v759 = vadd.f32 0.0, %v758
    %v760 = vpop.f32.mrf.mxu0
    %v761 = vadd.f32 0.0, %v760
    %v762 = vpop.f32.mrf.mxu0
    %v763 = vadd.f32 0.0, %v762
    %v764 = vpop.f32.mrf.mxu0
    %v765 = vadd.f32 0.0, %v764
    %766 = vmatprep.mubr.bf16.mxu0 0
    %767 = vmatmul.mubr.bf16.gmra.mxu0 %v603
    %v768 = vpop.f32.mrf.mxu0
    %v769 = vadd.f32 0.0, %v768
    %v770 = vpop.f32.mrf.mxu0
    %v771 = vadd.f32 0.0, %v770
    %v772 = vpop.f32.mrf.mxu0
    %v773 = vadd.f32 0.0, %v772
    %v774 = vpop.f32.mrf.mxu0
    %v775 = vadd.f32 0.0, %v774
    %776 = vmatprep.mubr.bf16.mxu0 0
    %777 = vmatmul.mubr.bf16.gmra.mxu0 %v606
    %v778 = vpop.f32.mrf.mxu0
    %v779 = vadd.f32 0.0, %v778
    %v780 = vpop.f32.mrf.mxu0
    %v781 = vadd.f32 0.0, %v780
    %v782 = vpop.f32.mrf.mxu0
    %v783 = vadd.f32 0.0, %v782
    %v784 = vpop.f32.mrf.mxu0
    %v785 = vadd.f32 0.0, %v784
    %786 = vmatprep.mubr.bf16.mxu0 0
    %787 = vmatmul.mubr.bf16.gmra.mxu0 %v609
    %v788 = vpop.f32.mrf.mxu0
    %v789 = vadd.f32 0.0, %v788
    %v790 = vpop.f32.mrf.mxu0
    %v791 = vadd.f32 0.0, %v790
    %v792 = vpop.f32.mrf.mxu0
    %v793 = vadd.f32 0.0, %v792
    %v794 = vpop.f32.mrf.mxu0
    %v795 = vadd.f32 0.0, %v794
    %796 = vmatprep.mubr.bf16.mxu0 0
    %797 = vmatmul.mubr.bf16.gmra.mxu0 %v612
    %v798 = vpop.f32.mrf.mxu0
    %v799 = vadd.f32 0.0, %v798
    %v800 = vpop.f32.mrf.mxu0
    %v801 = vadd.f32 0.0, %v800
    %v802 = vpop.f32.mrf.mxu0
    %v803 = vadd.f32 0.0, %v802
    %v804 = vpop.f32.mrf.mxu0
    %v805 = vadd.f32 0.0, %v804
    %806 = vmatprep.mubr.bf16.mxu0 0
    %807 = vmatmul.mubr.bf16.gmra.mxu0 %v615
    %v808 = vpop.f32.mrf.mxu0
    %v809 = vadd.f32 0.0, %v808
    %v810 = vpop.f32.mrf.mxu0
    %v811 = vadd.f32 0.0, %v810
    %v812 = vpop.f32.mrf.mxu0
    %v813 = vadd.f32 0.0, %v812
    %v814 = vpop.f32.mrf.mxu0
    %v815 = vadd.f32 0.0, %v814
    %816 = vdwg.mxu0
    %v817 = vmax.f32 %v659, %v661
    %818 = vmax.xlane.f32.xlu0 %v817
    %v819 = vpop.xlane.xlu0 %818
    %v820 = vmax.f32 %v663, %v665
    %821 = vmax.xlane.f32.xlu0 %v820
    %v822 = vpop.xlane.xlu0 %821
    %v823 = vmax.f32 %v669, %v671
    %824 = vmax.xlane.f32.xlu0 %v823
    %v825 = vpop.xlane.xlu0 %824
    %v826 = vmax.f32 %v673, %v675
    %827 = vmax.xlane.f32.xlu0 %v826
    %v828 = vpop.xlane.xlu0 %827
    %v829 = vmax.f32 %v679, %v681
    %830 = vmax.xlane.f32.xlu0 %v829
    %v831 = vpop.xlane.xlu0 %830
    %v832 = vmax.f32 %v683, %v685
    %833 = vmax.xlane.f32.xlu0 %v832
    %v834 = vpop.xlane.xlu0 %833
    %v835 = vmax.f32 %v689, %v691
    %836 = vmax.xlane.f32.xlu0 %v835
    %v837 = vpop.xlane.xlu0 %836
    %v838 = vmax.f32 %v693, %v695
    %839 = vmax.xlane.f32.xlu0 %v838
    %v840 = vpop.xlane.xlu0 %839
    %v841 = vmax.f32 %v699, %v701
    %842 = vmax.xlane.f32.xlu0 %v841
    %v843 = vpop.xlane.xlu0 %842
    %v844 = vmax.f32 %v703, %v705
    %845 = vmax.xlane.f32.xlu0 %v844
    %v846 = vpop.xlane.xlu0 %845
    %v847 = vmax.f32 %v709, %v711
    %848 = vmax.xlane.f32.xlu0 %v847
    %v849 = vpop.xlane.xlu0 %848
    %v850 = vmax.f32 %v713, %v715
    %851 = vmax.xlane.f32.xlu0 %v850
    %v852 = vpop.xlane.xlu0 %851
    %v853 = vmax.f32 %v719, %v721
    %854 = vmax.xlane.f32.xlu0 %v853
    %v855 = vpop.xlane.xlu0 %854
    %v856 = vmax.f32 %v723, %v725
    %857 = vmax.xlane.f32.xlu0 %v856
    %v858 = vpop.xlane.xlu0 %857
    %v859 = vmax.f32 %v729, %v731
    %860 = vmax.xlane.f32.xlu0 %v859
    %v861 = vpop.xlane.xlu0 %860
    %v862 = vmax.f32 %v733, %v735
    %863 = vmax.xlane.f32.xlu0 %v862
    %v864 = vpop.xlane.xlu0 %863
    %v865 = vmax.f32 %v739, %v741
    %866 = vmax.xlane.f32.xlu0 %v865
    %v867 = vpop.xlane.xlu0 %866
    %v868 = vmax.f32 %v743, %v745
    %869 = vmax.xlane.f32.xlu0 %v868
    %v870 = vpop.xlane.xlu0 %869
    %v871 = vmax.f32 %v749, %v751
    %872 = vmax.xlane.f32.xlu0 %v871
    %v873 = vpop.xlane.xlu0 %872
    %v874 = vmax.f32 %v753, %v755
    %875 = vmax.xlane.f32.xlu0 %v874
    %v876 = vpop.xlane.xlu0 %875
    %v877 = vmax.f32 %v759, %v761
    %878 = vmax.xlane.f32.xlu0 %v877
    %v879 = vpop.xlane.xlu0 %878
    %v880 = vmax.f32 %v763, %v765
    %881 = vmax.xlane.f32.xlu0 %v880
    %v882 = vpop.xlane.xlu0 %881
    %v883 = vmax.f32 %v769, %v771
    %884 = vmax.xlane.f32.xlu0 %v883
    %v885 = vpop.xlane.xlu0 %884
    %v886 = vmax.f32 %v773, %v775
    %887 = vmax.xlane.f32.xlu0 %v886
    %v888 = vpop.xlane.xlu0 %887
    %v889 = vmax.f32 %v779, %v781
    %890 = vmax.xlane.f32.xlu0 %v889
    %v891 = vpop.xlane.xlu0 %890
    %v892 = vmax.f32 %v783, %v785
    %893 = vmax.xlane.f32.xlu0 %v892
    %v894 = vpop.xlane.xlu0 %893
    %v895 = vmax.f32 %v789, %v791
    %896 = vmax.xlane.f32.xlu0 %v895
    %v897 = vpop.xlane.xlu0 %896
    %v898 = vmax.f32 %v793, %v795
    %899 = vmax.xlane.f32.xlu0 %v898
    %v900 = vpop.xlane.xlu0 %899
    %v901 = vmax.f32 %v799, %v801
    %902 = vmax.xlane.f32.xlu0 %v901
    %v903 = vpop.xlane.xlu0 %902
    %v904 = vmax.f32 %v803, %v805
    %905 = vmax.xlane.f32.xlu0 %v904
    %v906 = vpop.xlane.xlu0 %905
    %v907 = vmax.f32 %v809, %v811
    %908 = vmax.xlane.f32.xlu0 %v907
    %v909 = vpop.xlane.xlu0 %908
    %v910 = vmax.f32 %v813, %v815
    %911 = vmax.xlane.f32.xlu0 %v910
    %v912 = vpop.xlane.xlu0 %911
    %v913 = vsub.f32 %v659, %v819
    %v914 = vsub.f32 %v661, %v819
    %v915 = vsub.f32 %v663, %v822
    %v916 = vsub.f32 %v665, %v822
    %v917 = vsub.f32 %v669, %v825
    %v918 = vsub.f32 %v671, %v825
    %v919 = vsub.f32 %v673, %v828
    %v920 = vsub.f32 %v675, %v828
    %v921 = vsub.f32 %v679, %v831
    %v922 = vsub.f32 %v681, %v831
    %v923 = vsub.f32 %v683, %v834
    %v924 = vsub.f32 %v685, %v834
    %v925 = vsub.f32 %v689, %v837
    %v926 = vsub.f32 %v691, %v837
    %v927 = vsub.f32 %v693, %v840
    %v928 = vsub.f32 %v695, %v840
    %v929 = vsub.f32 %v699, %v843
    %v930 = vsub.f32 %v701, %v843
    %v931 = vsub.f32 %v703, %v846
    %v932 = vsub.f32 %v705, %v846
    %v933 = vsub.f32 %v709, %v849
    %v934 = vsub.f32 %v711, %v849
    %v935 = vsub.f32 %v713, %v852
    %v936 = vsub.f32 %v715, %v852
    %v937 = vsub.f32 %v719, %v855
    %v938 = vsub.f32 %v721, %v855
    %v939 = vsub.f32 %v723, %v858
    %v940 = vsub.f32 %v725, %v858
    %v941 = vsub.f32 %v729, %v861
    %v942 = vsub.f32 %v731, %v861
    %v943 = vsub.f32 %v733, %v864
    %v944 = vsub.f32 %v735, %v864
    %v945 = vsub.f32 %v739, %v867
    %v946 = vsub.f32 %v741, %v867
    %v947 = vsub.f32 %v743, %v870
    %v948 = vsub.f32 %v745, %v870
    %v949 = vsub.f32 %v749, %v873
    %v950 = vsub.f32 %v751, %v873
    %v951 = vsub.f32 %v753, %v876
    %v952 = vsub.f32 %v755, %v876
    %v953 = vsub.f32 %v759, %v879
    %v954 = vsub.f32 %v761, %v879
    %v955 = vsub.f32 %v763, %v882
    %v956 = vsub.f32 %v765, %v882
    %v957 = vsub.f32 %v769, %v885
    %v958 = vsub.f32 %v771, %v885
    %v959 = vsub.f32 %v773, %v888
    %v960 = vsub.f32 %v775, %v888
    %v961 = vsub.f32 %v779, %v891
    %v962 = vsub.f32 %v781, %v891
    %v963 = vsub.f32 %v783, %v894
    %v964 = vsub.f32 %v785, %v894
    %v965 = vsub.f32 %v789, %v897
    %v966 = vsub.f32 %v791, %v897
    %v967 = vsub.f32 %v793, %v900
    %v968 = vsub.f32 %v795, %v900
    %v969 = vsub.f32 %v799, %v903
    %v970 = vsub.f32 %v801, %v903
    %v971 = vsub.f32 %v803, %v906
    %v972 = vsub.f32 %v805, %v906
    %v973 = vsub.f32 %v809, %v909
    %v974 = vsub.f32 %v811, %v909
    %v975 = vsub.f32 %v813, %v912
    %v976 = vsub.f32 %v815, %v912
    %v977 = vmul.f32 %v913, 1.442695
    %v978 = vpow.pop %v977
    %v979 = vmul.f32 %v914, 1.442695
    %v980 = vpow.pop %v979
    %v981 = vmul.f32 %v915, 1.442695
    %v982 = vpow.pop %v981
    %v983 = vmul.f32 %v916, 1.442695
    %v984 = vpow.pop %v983
    %v985 = vmul.f32 %v917, 1.442695
    %v986 = vpow.pop %v985
    %v987 = vmul.f32 %v918, 1.442695
    %v988 = vpow.pop %v987
    %v989 = vmul.f32 %v919, 1.442695
    %v990 = vpow.pop %v989
    %v991 = vmul.f32 %v920, 1.442695
    %v992 = vpow.pop %v991
    %v993 = vmul.f32 %v921, 1.442695
    %v994 = vpow.pop %v993
    %v995 = vmul.f32 %v922, 1.442695
    %v996 = vpow.pop %v995
    %v997 = vmul.f32 %v923, 1.442695
    %v998 = vpow.pop %v997
    %v999 = vmul.f32 %v924, 1.442695
    %v1000 = vpow.pop %v999
    %v1001 = vmul.f32 %v925, 1.442695
    %v1002 = vpow.pop %v1001
    %v1003 = vmul.f32 %v926, 1.442695
    %v1004 = vpow.pop %v1003
    %v1005 = vmul.f32 %v927, 1.442695
    %v1006 = vpow.pop %v1005
    %v1007 = vmul.f32 %v928, 1.442695
    %v1008 = vpow.pop %v1007
    %v1009 = vmul.f32 %v929, 1.442695
    %v1010 = vpow.pop %v1009
    %v1011 = vmul.f32 %v930, 1.442695
    %v1012 = vpow.pop %v1011
    %v1013 = vmul.f32 %v931, 1.442695
    %v1014 = vpow.pop %v1013
    %v1015 = vmul.f32 %v932, 1.442695
    %v1016 = vpow.pop %v1015
    %v1017 = vmul.f32 %v933, 1.442695
    %v1018 = vpow.pop %v1017
    %v1019 = vmul.f32 %v934, 1.442695
    %v1020 = vpow.pop %v1019
    %v1021 = vmul.f32 %v935, 1.442695
    %v1022 = vpow.pop %v1021
    %v1023 = vmul.f32 %v936, 1.442695
    %v1024 = vpow.pop %v1023
    %v1025 = vmul.f32 %v937, 1.442695
    %v1026 = vpow.pop %v1025
    %v1027 = vmul.f32 %v938, 1.442695
    %v1028 = vpow.pop %v1027
    %v1029 = vmul.f32 %v939, 1.442695
    %v1030 = vpow.pop %v1029
    %v1031 = vmul.f32 %v940, 1.442695
    %v1032 = vpow.pop %v1031
    %v1033 = vmul.f32 %v941, 1.442695
    %v1034 = vpow.pop %v1033
    %v1035 = vmul.f32 %v942, 1.442695
    %v1036 = vpow.pop %v1035
    %v1037 = vmul.f32 %v943, 1.442695
    %v1038 = vpow.pop %v1037
    %v1039 = vmul.f32 %v944, 1.442695
    %v1040 = vpow.pop %v1039
    %v1041 = vmul.f32 %v945, 1.442695
    %v1042 = vpow.pop %v1041
    %v1043 = vmul.f32 %v946, 1.442695
    %v1044 = vpow.pop %v1043
    %v1045 = vmul.f32 %v947, 1.442695
    %v1046 = vpow.pop %v1045
    %v1047 = vmul.f32 %v948, 1.442695
    %v1048 = vpow.pop %v1047
    %v1049 = vmul.f32 %v949, 1.442695
    %v1050 = vpow.pop %v1049
    %v1051 = vmul.f32 %v950, 1.442695
    %v1052 = vpow.pop %v1051
    %v1053 = vmul.f32 %v951, 1.442695
    %v1054 = vpow.pop %v1053
    %v1055 = vmul.f32 %v952, 1.442695
    %v1056 = vpow.pop %v1055
    %v1057 = vmul.f32 %v953, 1.442695
    %v1058 = vpow.pop %v1057
    %v1059 = vmul.f32 %v954, 1.442695
    %v1060 = vpow.pop %v1059
    %v1061 = vmul.f32 %v955, 1.442695
    %v1062 = vpow.pop %v1061
    %v1063 = vmul.f32 %v956, 1.442695
    %v1064 = vpow.pop %v1063
    %v1065 = vmul.f32 %v957, 1.442695
    %v1066 = vpow.pop %v1065
    %v1067 = vmul.f32 %v958, 1.442695
    %v1068 = vpow.pop %v1067
    %v1069 = vmul.f32 %v959, 1.442695
    %v1070 = vpow.pop %v1069
    %v1071 = vmul.f32 %v960, 1.442695
    %v1072 = vpow.pop %v1071
    %v1073 = vmul.f32 %v961, 1.442695
    %v1074 = vpow.pop %v1073
    %v1075 = vmul.f32 %v962, 1.442695
    %v1076 = vpow.pop %v1075
    %v1077 = vmul.f32 %v963, 1.442695
    %v1078 = vpow.pop %v1077
    %v1079 = vmul.f32 %v964, 1.442695
    %v1080 = vpow.pop %v1079
    %v1081 = vmul.f32 %v965, 1.442695
    %v1082 = vpow.pop %v1081
    %v1083 = vmul.f32 %v966, 1.442695
    %v1084 = vpow.pop %v1083
    %v1085 = vmul.f32 %v967, 1.442695
    %v1086 = vpow.pop %v1085
    %v1087 = vmul.f32 %v968, 1.442695
    %v1088 = vpow.pop %v1087
    %v1089 = vmul.f32 %v969, 1.442695
    %v1090 = vpow.pop %v1089
    %v1091 = vmul.f32 %v970, 1.442695
    %v1092 = vpow.pop %v1091
    %v1093 = vmul.f32 %v971, 1.442695
    %v1094 = vpow.pop %v1093
    %v1095 = vmul.f32 %v972, 1.442695
    %v1096 = vpow.pop %v1095
    %v1097 = vmul.f32 %v973, 1.442695
    %v1098 = vpow.pop %v1097
    %v1099 = vmul.f32 %v974, 1.442695
    %v1100 = vpow.pop %v1099
    %v1101 = vmul.f32 %v975, 1.442695
    %v1102 = vpow.pop %v1101
    %v1103 = vmul.f32 %v976, 1.442695
    %v1104 = vpow.pop %v1103
    %v1105 = vpack.c.bf16 %v982, %v978
    %v1106 = vpack.c.bf16 %v984, %v980
    %v1107 = vpack.c.bf16 %v990, %v986
    %v1108 = vpack.c.bf16 %v992, %v988
    %v1109 = vpack.c.bf16 %v998, %v994
    %v1110 = vpack.c.bf16 %v1000, %v996
    %v1111 = vpack.c.bf16 %v1006, %v1002
    %v1112 = vpack.c.bf16 %v1008, %v1004
    %v1113 = vpack.c.bf16 %v1014, %v1010
    %v1114 = vpack.c.bf16 %v1016, %v1012
    %v1115 = vpack.c.bf16 %v1022, %v1018
    %v1116 = vpack.c.bf16 %v1024, %v1020
    %v1117 = vpack.c.bf16 %v1030, %v1026
    %v1118 = vpack.c.bf16 %v1032, %v1028
    %v1119 = vpack.c.bf16 %v1038, %v1034
    %v1120 = vpack.c.bf16 %v1040, %v1036
    %v1121 = vpack.c.bf16 %v1046, %v1042
    %v1122 = vpack.c.bf16 %v1048, %v1044
    %v1123 = vpack.c.bf16 %v1054, %v1050
    %v1124 = vpack.c.bf16 %v1056, %v1052
    %v1125 = vpack.c.bf16 %v1062, %v1058
    %v1126 = vpack.c.bf16 %v1064, %v1060
    %v1127 = vpack.c.bf16 %v1070, %v1066
    %v1128 = vpack.c.bf16 %v1072, %v1068
    %v1129 = vpack.c.bf16 %v1078, %v1074
    %v1130 = vpack.c.bf16 %v1080, %v1076
    %v1131 = vpack.c.bf16 %v1086, %v1082
    %v1132 = vpack.c.bf16 %v1088, %v1084
    %v1133 = vpack.c.bf16 %v1094, %v1090
    %v1134 = vpack.c.bf16 %v1096, %v1092
    %v1135 = vpack.c.bf16 %v1102, %v1098
    %v1136 = vpack.c.bf16 %v1104, %v1100
    %v1137 = vpack.c.bf16 %v158, %v158
    %v1138 = vpack.c.bf16 %v160, %v160
    %1139 = vmatprep.subr.bf16.mxu0 %v1120
    %1140 = vmatpush1.bf16.xpose.msra.mxu0 %v1119
    %1141 = vmatprep.subr.bf16.mxu0 %v1118
    %1142 = vmatpush1.bf16.xpose.msra.mxu0 %v1117
    %1143 = vmatprep.subr.bf16.mxu0 %v1116
    %1144 = vmatpush1.bf16.xpose.msra.mxu0 %v1115
    %1145 = vmatprep.subr.bf16.mxu0 %v1114
    %1146 = vmatpush1.bf16.xpose.msra.mxu0 %v1113
    %1147 = vmatprep.subr.bf16.mxu0 %v1112
    %1148 = vmatpush1.bf16.xpose.msra.mxu0 %v1111
    %1149 = vmatprep.subr.bf16.mxu0 %v1110
    %1150 = vmatpush1.bf16.xpose.msra.mxu0 %v1109
    %1151 = vmatprep.subr.bf16.mxu0 %v1108
    %1152 = vmatpush1.bf16.xpose.msra.mxu0 %v1107
    %1153 = vmatprep.subr.bf16.mxu0 %v1106
    %1154 = vmatpush1.bf16.xpose.msra.mxu0 %v1105
    %1155 = vmatprep.subr.bf16.mxu0 %v1136
    %1156 = vmatpush2.bf16.xpose.msra.mxu0 %v1135
    %1157 = vmatprep.subr.bf16.mxu0 %v1134
    %1158 = vmatpush2.bf16.xpose.msra.mxu0 %v1133
    %1159 = vmatprep.subr.bf16.mxu0 %v1132
    %1160 = vmatpush2.bf16.xpose.msra.mxu0 %v1131
    %1161 = vmatprep.subr.bf16.mxu0 %v1130
    %1162 = vmatpush2.bf16.xpose.msra.mxu0 %v1129
    %1163 = vmatprep.subr.bf16.mxu0 %v1128
    %1164 = vmatpush2.bf16.xpose.msra.mxu0 %v1127
    %1165 = vmatprep.subr.bf16.mxu0 %v1126
    %1166 = vmatpush2.bf16.xpose.msra.mxu0 %v1125
    %1167 = vmatprep.subr.bf16.mxu0 %v1124
    %1168 = vmatpush2.bf16.xpose.msra.mxu0 %v1123
    %1169 = vmatprep.subr.bf16.mxu0 %v1122
    %1170 = vmatpush2.bf16.xpose.msra.mxu0 %v1121
    %1171 = vmatprep.mubr.bf16.mxu0 %v1138
    %1172 = vmatmul.mubr.bf16.gmra.mxu0 %v1137
    %v1173 = vpop.f32.mrf.mxu0
    %v1174 = vadd.f32 0.0, %v1173
    %v1175 = vpop.f32.mrf.mxu0
    %v1176 = vadd.f32 0.0, %v1175
    %v1177 = vpop.f32.mrf.mxu0
    %v1178 = vpop.f32.mrf.mxu0
    %1179 = vdwg.mxu0
    %1180 = vmatprep.subr.bf16.mxu0 %v1120
    %1181 = vmatpush1.bf16.xpose.msra.mxu0 %v1119
    %1182 = vmatprep.subr.bf16.mxu0 %v1118
    %1183 = vmatpush1.bf16.xpose.msra.mxu0 %v1117
    %1184 = vmatprep.subr.bf16.mxu0 %v1116
    %1185 = vmatpush1.bf16.xpose.msra.mxu0 %v1115
    %1186 = vmatprep.subr.bf16.mxu0 %v1114
    %1187 = vmatpush1.bf16.xpose.msra.mxu0 %v1113
    %1188 = vmatprep.subr.bf16.mxu0 %v1112
    %1189 = vmatpush1.bf16.xpose.msra.mxu0 %v1111
    %1190 = vmatprep.subr.bf16.mxu0 %v1110
    %1191 = vmatpush1.bf16.xpose.msra.mxu0 %v1109
    %1192 = vmatprep.subr.bf16.mxu0 %v1108
    %1193 = vmatpush1.bf16.xpose.msra.mxu0 %v1107
    %1194 = vmatprep.subr.bf16.mxu0 %v1106
    %1195 = vmatpush1.bf16.xpose.msra.mxu0 %v1105
    %1196 = vmatprep.subr.bf16.mxu0 %v1136
    %1197 = vmatpush2.bf16.xpose.msra.mxu0 %v1135
    %1198 = vmatprep.subr.bf16.mxu0 %v1134
    %1199 = vmatpush2.bf16.xpose.msra.mxu0 %v1133
    %1200 = vmatprep.subr.bf16.mxu0 %v1132
    %1201 = vmatpush2.bf16.xpose.msra.mxu0 %v1131
    %1202 = vmatprep.subr.bf16.mxu0 %v1130
    %1203 = vmatpush2.bf16.xpose.msra.mxu0 %v1129
    %1204 = vmatprep.subr.bf16.mxu0 %v1128
    %1205 = vmatpush2.bf16.xpose.msra.mxu0 %v1127
    %1206 = vmatprep.subr.bf16.mxu0 %v1126
    %1207 = vmatpush2.bf16.xpose.msra.mxu0 %v1125
    %1208 = vmatprep.subr.bf16.mxu0 %v1124
    %1209 = vmatpush2.bf16.xpose.msra.mxu0 %v1123
    %1210 = vmatprep.subr.bf16.mxu0 %v1122
    %1211 = vmatpush2.bf16.xpose.msra.mxu0 %v1121
    %1212 = vmatprep.mubr.bf16.mxu0 1065369472
    %1213 = vmatmul.mubr.bf16.gmra.mxu0 1065369472
    %v1214 = vpop.f32.mrf.mxu0
    %v1215 = vadd.f32 0.0, %v1214
    %v1216 = vpop.f32.mrf.mxu0
    %v1217 = vadd.f32 0.0, %v1216
    %v1218 = vpop.f32.mrf.mxu0
    %v1219 = vpop.f32.mrf.mxu0
    %1220 = vdwg.mxu0
    %v1221 = vrcp.pop %v1215
    %v1222 = vrcp.pop %v1217
    %v1223 = vlaneseq
    %v1224 = vshrl.u32 %v1223, 7
    %v1225 = vsub.s32 0, %v1224
    %v1226 = vrot.slane %v1221, %v1225
    %v1227 = vlaneseq
    %v1228 = vshrl.u32 %v1227, 7
    %v1229 = vsub.s32 0, %v1228
    %v1230 = vrot.slane %v1222, %v1229
    %v1231 = vmul.f32 %v1174, %v1226
    %v1232 = vmul.f32 %v1176, %v1230
    %v1233 = vadd.f32 %v1231, %v60
    %v1234 = vadd.f32 %v1232, %v72
    %v1237 = vcombine.low %v1233, %v1234
    %1239 = vst [vmem:[#allocation2] sm:$0x33] %v1237
    %1256 = vrot.lane.b32.xlu0 %v551, 124
    %v1257 = vpop.permute.xlu0 %1256
    %1258 = vrot.lane.b32.xlu0 %v552, 124
    %v1259 = vpop.permute.xlu0 %1258
    %1260 = vrot.lane.b32.xlu0 %v553, 124
    %v1261 = vpop.permute.xlu0 %1260
    %1262 = vrot.lane.b32.xlu0 %v554, 124
    %v1263 = vpop.permute.xlu0 %1262
    %1264 = vrot.lane.b32.xlu0 %v555, 124
    %v1265 = vpop.permute.xlu0 %1264
    %1266 = vrot.lane.b32.xlu0 %v556, 124
    %v1267 = vpop.permute.xlu0 %1266
    %1268 = vrot.lane.b32.xlu0 %v557, 124
    %v1269 = vpop.permute.xlu0 %1268
    %1270 = vrot.lane.b32.xlu0 %v558, 124
    %v1271 = vpop.permute.xlu0 %1270
    %1272 = vrot.lane.b32.xlu0 %v559, 124
    %v1273 = vpop.permute.xlu0 %1272
    %1274 = vrot.lane.b32.xlu0 %v560, 124
    %v1275 = vpop.permute.xlu0 %1274
    %1276 = vrot.lane.b32.xlu0 %v561, 124
    %v1277 = vpop.permute.xlu0 %1276
    %1278 = vrot.lane.b32.xlu0 %v562, 124
    %v1279 = vpop.permute.xlu0 %1278
    %1280 = vrot.lane.b32.xlu0 %v563, 124
    %v1281 = vpop.permute.xlu0 %1280
    %1282 = vrot.lane.b32.xlu0 %v564, 124
    %v1283 = vpop.permute.xlu0 %1282
    %1284 = vrot.lane.b32.xlu0 %v565, 124
    %v1285 = vpop.permute.xlu0 %1284
    %1286 = vrot.lane.b32.xlu0 %v566, 124
    %v1287 = vpop.permute.xlu0 %1286
    %v1290 = vrot.slane %v567, 2
    %v1291 = vrot.slane %v568, 2
    %v1293 = vsel %vm73, %v1257, 0
    %v1296 = vsel %vm73, %v1259, 0
    %v1299 = vsel %vm73, %v1261, 0
    %v1302 = vsel %vm73, %v1263, 0
    %v1305 = vsel %vm73, %v1265, 0
    %v1308 = vsel %vm73, %v1267, 0
    %v1311 = vsel %vm73, %v1269, 0
    %v1314 = vsel %vm73, %v1271, 0
    %v1317 = vsel %vm73, %v1273, 0
    %v1320 = vsel %vm73, %v1275, 0
    %v1323 = vsel %vm73, %v1277, 0
    %v1326 = vsel %vm73, %v1279, 0
    %v1329 = vsel %vm73, %v1281, 0
    %v1332 = vsel %vm73, %v1283, 0
    %v1335 = vsel %vm73, %v1285, 0
    %v1338 = vsel %vm73, %v1287, 0
    %v1341 = vsel %vm617, %v1290, 0
    %v1344 = vsel %vm617, %v1291, 0
    %1346 = vmatprep.subr.bf16.mxu0 0
    %1347 = vmatpush1.bf16.msra.mxu0 0
    %1348 = vmatprep.subr.bf16.mxu0 0
    %1349 = vmatpush1.bf16.msra.mxu0 0
    %1350 = vmatprep.subr.bf16.mxu0 0
    %1351 = vmatpush1.bf16.msra.mxu0 0
    %1352 = vmatprep.subr.bf16.mxu0 0
    %1353 = vmatpush1.bf16.msra.mxu0 0
    %1354 = vmatprep.subr.bf16.mxu0 0
    %1355 = vmatpush1.bf16.msra.mxu0 0
    %1356 = vmatprep.subr.bf16.mxu0 0
    %1357 = vmatpush1.bf16.msra.mxu0 0
    %1358 = vmatprep.subr.bf16.mxu0 0
    %1359 = vmatpush1.bf16.msra.mxu0 0
    %1360 = vmatprep.subr.bf16.mxu0 %v1344
    %1361 = vmatpush1.bf16.msra.mxu0 %v1341
    %1362 = vmatprep.subr.bf16.mxu0 0
    %1363 = vmatpush2.bf16.msra.mxu0 0
    %1364 = vmatprep.subr.bf16.mxu0 0
    %1365 = vmatpush2.bf16.msra.mxu0 0
    %1366 = vmatprep.subr.bf16.mxu0 0
    %1367 = vmatpush2.bf16.msra.mxu0 0
    %1368 = vmatprep.subr.bf16.mxu0 0
    %1369 = vmatpush2.bf16.msra.mxu0 0
    %1370 = vmatprep.subr.bf16.mxu0 0
    %1371 = vmatpush2.bf16.msra.mxu0 0
    %1372 = vmatprep.subr.bf16.mxu0 0
    %1373 = vmatpush2.bf16.msra.mxu0 0
    %1374 = vmatprep.subr.bf16.mxu0 0
    %1375 = vmatpush2.bf16.msra.mxu0 0
    %1376 = vmatprep.subr.bf16.mxu0 0
    %1377 = vmatpush2.bf16.msra.mxu0 0
    %1378 = vmatprep.mubr.bf16.mxu0 0
    %1379 = vmatmul.mubr.bf16.gmra.mxu0 %v1293
    %v1380 = vpop.f32.mrf.mxu0
    %v1381 = vadd.f32 0.0, %v1380
    %v1382 = vpop.f32.mrf.mxu0
    %v1383 = vadd.f32 0.0, %v1382
    %v1384 = vpop.f32.mrf.mxu0
    %v1385 = vadd.f32 0.0, %v1384
    %v1386 = vpop.f32.mrf.mxu0
    %v1387 = vadd.f32 0.0, %v1386
    %1388 = vmatprep.mubr.bf16.mxu0 0
    %1389 = vmatmul.mubr.bf16.gmra.mxu0 %v1296
    %v1390 = vpop.f32.mrf.mxu0
    %v1391 = vadd.f32 0.0, %v1390
    %v1392 = vpop.f32.mrf.mxu0
    %v1393 = vadd.f32 0.0, %v1392
    %v1394 = vpop.f32.mrf.mxu0
    %v1395 = vadd.f32 0.0, %v1394
    %v1396 = vpop.f32.mrf.mxu0
    %v1397 = vadd.f32 0.0, %v1396
    %1398 = vmatprep.mubr.bf16.mxu0 0
    %1399 = vmatmul.mubr.bf16.gmra.mxu0 %v1299
    %v1400 = vpop.f32.mrf.mxu0
    %v1401 = vadd.f32 0.0, %v1400
    %v1402 = vpop.f32.mrf.mxu0
    %v1403 = vadd.f32 0.0, %v1402
    %v1404 = vpop.f32.mrf.mxu0
    %v1405 = vadd.f32 0.0, %v1404
    %v1406 = vpop.f32.mrf.mxu0
    %v1407 = vadd.f32 0.0, %v1406
    %1408 = vmatprep.mubr.bf16.mxu0 0
    %1409 = vmatmul.mubr.bf16.gmra.mxu0 %v1302
    %v1410 = vpop.f32.mrf.mxu0
    %v1411 = vadd.f32 0.0, %v1410
    %v1412 = vpop.f32.mrf.mxu0
    %v1413 = vadd.f32 0.0, %v1412
    %v1414 = vpop.f32.mrf.mxu0
    %v1415 = vadd.f32 0.0, %v1414
    %v1416 = vpop.f32.mrf.mxu0
    %v1417 = vadd.f32 0.0, %v1416
    %1418 = vmatprep.mubr.bf16.mxu0 0
    %1419 = vmatmul.mubr.bf16.gmra.mxu0 %v1305
    %v1420 = vpop.f32.mrf.mxu0
    %v1421 = vadd.f32 0.0, %v1420
    %v1422 = vpop.f32.mrf.mxu0
    %v1423 = vadd.f32 0.0, %v1422
    %v1424 = vpop.f32.mrf.mxu0
    %v1425 = vadd.f32 0.0, %v1424
    %v1426 = vpop.f32.mrf.mxu0
    %v1427 = vadd.f32 0.0, %v1426
    %1428 = vmatprep.mubr.bf16.mxu0 0
    %1429 = vmatmul.mubr.bf16.gmra.mxu0 %v1308
    %v1430 = vpop.f32.mrf.mxu0
    %v1431 = vadd.f32 0.0, %v1430
    %v1432 = vpop.f32.mrf.mxu0
    %v1433 = vadd.f32 0.0, %v1432
    %v1434 = vpop.f32.mrf.mxu0
    %v1435 = vadd.f32 0.0, %v1434
    %v1436 = vpop.f32.mrf.mxu0
    %v1437 = vadd.f32 0.0, %v1436
    %1438 = vmatprep.mubr.bf16.mxu0 0
    %1439 = vmatmul.mubr.bf16.gmra.mxu0 %v1311
    %v1440 = vpop.f32.mrf.mxu0
    %v1441 = vadd.f32 0.0, %v1440
    %v1442 = vpop.f32.mrf.mxu0
    %v1443 = vadd.f32 0.0, %v1442
    %v1444 = vpop.f32.mrf.mxu0
    %v1445 = vadd.f32 0.0, %v1444
    %v1446 = vpop.f32.mrf.mxu0
    %v1447 = vadd.f32 0.0, %v1446
    %1448 = vmatprep.mubr.bf16.mxu0 0
    %1449 = vmatmul.mubr.bf16.gmra.mxu0 %v1314
    %v1450 = vpop.f32.mrf.mxu0
    %v1451 = vadd.f32 0.0, %v1450
    %v1452 = vpop.f32.mrf.mxu0
    %v1453 = vadd.f32 0.0, %v1452
    %v1454 = vpop.f32.mrf.mxu0
    %v1455 = vadd.f32 0.0, %v1454
    %v1456 = vpop.f32.mrf.mxu0
    %v1457 = vadd.f32 0.0, %v1456
    %1458 = vmatprep.mubr.bf16.mxu0 0
    %1459 = vmatmul.mubr.bf16.gmra.mxu0 %v1317
    %v1460 = vpop.f32.mrf.mxu0
    %v1461 = vadd.f32 0.0, %v1460
    %v1462 = vpop.f32.mrf.mxu0
    %v1463 = vadd.f32 0.0, %v1462
    %v1464 = vpop.f32.mrf.mxu0
    %v1465 = vadd.f32 0.0, %v1464
    %v1466 = vpop.f32.mrf.mxu0
    %v1467 = vadd.f32 0.0, %v1466
    %1468 = vmatprep.mubr.bf16.mxu0 0
    %1469 = vmatmul.mubr.bf16.gmra.mxu0 %v1320
    %v1470 = vpop.f32.mrf.mxu0
    %v1471 = vadd.f32 0.0, %v1470
    %v1472 = vpop.f32.mrf.mxu0
    %v1473 = vadd.f32 0.0, %v1472
    %v1474 = vpop.f32.mrf.mxu0
    %v1475 = vadd.f32 0.0, %v1474
    %v1476 = vpop.f32.mrf.mxu0
    %v1477 = vadd.f32 0.0, %v1476
    %1478 = vmatprep.mubr.bf16.mxu0 0
    %1479 = vmatmul.mubr.bf16.gmra.mxu0 %v1323
    %v1480 = vpop.f32.mrf.mxu0
    %v1481 = vadd.f32 0.0, %v1480
    %v1482 = vpop.f32.mrf.mxu0
    %v1483 = vadd.f32 0.0, %v1482
    %v1484 = vpop.f32.mrf.mxu0
    %v1485 = vadd.f32 0.0, %v1484
    %v1486 = vpop.f32.mrf.mxu0
    %v1487 = vadd.f32 0.0, %v1486
    %1488 = vmatprep.mubr.bf16.mxu0 0
    %1489 = vmatmul.mubr.bf16.gmra.mxu0 %v1326
    %v1490 = vpop.f32.mrf.mxu0
    %v1491 = vadd.f32 0.0, %v1490
    %v1492 = vpop.f32.mrf.mxu0
    %v1493 = vadd.f32 0.0, %v1492
    %v1494 = vpop.f32.mrf.mxu0
    %v1495 = vadd.f32 0.0, %v1494
    %v1496 = vpop.f32.mrf.mxu0
    %v1497 = vadd.f32 0.0, %v1496
    %1498 = vmatprep.mubr.bf16.mxu0 0
    %1499 = vmatmul.mubr.bf16.gmra.mxu0 %v1329
    %v1500 = vpop.f32.mrf.mxu0
    %v1501 = vadd.f32 0.0, %v1500
    %v1502 = vpop.f32.mrf.mxu0
    %v1503 = vadd.f32 0.0, %v1502
    %v1504 = vpop.f32.mrf.mxu0
    %v1505 = vadd.f32 0.0, %v1504
    %v1506 = vpop.f32.mrf.mxu0
    %v1507 = vadd.f32 0.0, %v1506
    %1508 = vmatprep.mubr.bf16.mxu0 0
    %1509 = vmatmul.mubr.bf16.gmra.mxu0 %v1332
    %v1510 = vpop.f32.mrf.mxu0
    %v1511 = vadd.f32 0.0, %v1510
    %v1512 = vpop.f32.mrf.mxu0
    %v1513 = vadd.f32 0.0, %v1512
    %v1514 = vpop.f32.mrf.mxu0
    %v1515 = vadd.f32 0.0, %v1514
    %v1516 = vpop.f32.mrf.mxu0
    %v1517 = vadd.f32 0.0, %v1516
    %1518 = vmatprep.mubr.bf16.mxu0 0
    %1519 = vmatmul.mubr.bf16.gmra.mxu0 %v1335
    %v1520 = vpop.f32.mrf.mxu0
    %v1521 = vadd.f32 0.0, %v1520
    %v1522 = vpop.f32.mrf.mxu0
    %v1523 = vadd.f32 0.0, %v1522
    %v1524 = vpop.f32.mrf.mxu0
    %v1525 = vadd.f32 0.0, %v1524
    %v1526 = vpop.f32.mrf.mxu0
    %v1527 = vadd.f32 0.0, %v1526
    %1528 = vmatprep.mubr.bf16.mxu0 0
    %1529 = vmatmul.mubr.bf16.gmra.mxu0 %v1338
    %v1530 = vpop.f32.mrf.mxu0
    %v1531 = vadd.f32 0.0, %v1530
    %v1532 = vpop.f32.mrf.mxu0
    %v1533 = vadd.f32 0.0, %v1532
    %v1534 = vpop.f32.mrf.mxu0
    %v1535 = vadd.f32 0.0, %v1534
    %v1536 = vpop.f32.mrf.mxu0
    %v1537 = vadd.f32 0.0, %v1536
    %1538 = vdwg.mxu0
    %v1539 = vmax.f32 %v1381, %v1383
    %1540 = vmax.xlane.f32.xlu0 %v1539
    %v1541 = vpop.xlane.xlu0 %1540
    %v1542 = vmax.f32 %v1385, %v1387
    %1543 = vmax.xlane.f32.xlu0 %v1542
    %v1544 = vpop.xlane.xlu0 %1543
    %v1545 = vmax.f32 %v1391, %v1393
    %1546 = vmax.xlane.f32.xlu0 %v1545
    %v1547 = vpop.xlane.xlu0 %1546
    %v1548 = vmax.f32 %v1395, %v1397
    %1549 = vmax.xlane.f32.xlu0 %v1548
    %v1550 = vpop.xlane.xlu0 %1549
    %v1551 = vmax.f32 %v1401, %v1403
    %1552 = vmax.xlane.f32.xlu0 %v1551
    %v1553 = vpop.xlane.xlu0 %1552
    %v1554 = vmax.f32 %v1405, %v1407
    %1555 = vmax.xlane.f32.xlu0 %v1554
    %v1556 = vpop.xlane.xlu0 %1555
    %v1557 = vmax.f32 %v1411, %v1413
    %1558 = vmax.xlane.f32.xlu0 %v1557
    %v1559 = vpop.xlane.xlu0 %1558
    %v1560 = vmax.f32 %v1415, %v1417
    %1561 = vmax.xlane.f32.xlu0 %v1560
    %v1562 = vpop.xlane.xlu0 %1561
    %v1563 = vmax.f32 %v1421, %v1423
    %1564 = vmax.xlane.f32.xlu0 %v1563
    %v1565 = vpop.xlane.xlu0 %1564
    %v1566 = vmax.f32 %v1425, %v1427
    %1567 = vmax.xlane.f32.xlu0 %v1566
    %v1568 = vpop.xlane.xlu0 %1567
    %v1569 = vmax.f32 %v1431, %v1433
    %1570 = vmax.xlane.f32.xlu0 %v1569
    %v1571 = vpop.xlane.xlu0 %1570
    %v1572 = vmax.f32 %v1435, %v1437
    %1573 = vmax.xlane.f32.xlu0 %v1572
    %v1574 = vpop.xlane.xlu0 %1573
    %v1575 = vmax.f32 %v1441, %v1443
    %1576 = vmax.xlane.f32.xlu0 %v1575
    %v1577 = vpop.xlane.xlu0 %1576
    %v1578 = vmax.f32 %v1445, %v1447
    %1579 = vmax.xlane.f32.xlu0 %v1578
    %v1580 = vpop.xlane.xlu0 %1579
    %v1581 = vmax.f32 %v1451, %v1453
    %1582 = vmax.xlane.f32.xlu0 %v1581
    %v1583 = vpop.xlane.xlu0 %1582
    %v1584 = vmax.f32 %v1455, %v1457
    %1585 = vmax.xlane.f32.xlu0 %v1584
    %v1586 = vpop.xlane.xlu0 %1585
    %v1587 = vmax.f32 %v1461, %v1463
    %1588 = vmax.xlane.f32.xlu0 %v1587
    %v1589 = vpop.xlane.xlu0 %1588
    %v1590 = vmax.f32 %v1465, %v1467
    %1591 = vmax.xlane.f32.xlu0 %v1590
    %v1592 = vpop.xlane.xlu0 %1591
    %v1593 = vmax.f32 %v1471, %v1473
    %1594 = vmax.xlane.f32.xlu0 %v1593
    %v1595 = vpop.xlane.xlu0 %1594
    %v1596 = vmax.f32 %v1475, %v1477
    %1597 = vmax.xlane.f32.xlu0 %v1596
    %v1598 = vpop.xlane.xlu0 %1597
    %v1599 = vmax.f32 %v1481, %v1483
    %1600 = vmax.xlane.f32.xlu0 %v1599
    %v1601 = vpop.xlane.xlu0 %1600
    %v1602 = vmax.f32 %v1485, %v1487
    %1603 = vmax.xlane.f32.xlu0 %v1602
    %v1604 = vpop.xlane.xlu0 %1603
    %v1605 = vmax.f32 %v1491, %v1493
    %1606 = vmax.xlane.f32.xlu0 %v1605
    %v1607 = vpop.xlane.xlu0 %1606
    %v1608 = vmax.f32 %v1495, %v1497
    %1609 = vmax.xlane.f32.xlu0 %v1608
    %v1610 = vpop.xlane.xlu0 %1609
    %v1611 = vmax.f32 %v1501, %v1503
    %1612 = vmax.xlane.f32.xlu0 %v1611
    %v1613 = vpop.xlane.xlu0 %1612
    %v1614 = vmax.f32 %v1505, %v1507
    %1615 = vmax.xlane.f32.xlu0 %v1614
    %v1616 = vpop.xlane.xlu0 %1615
    %v1617 = vmax.f32 %v1511, %v1513
    %1618 = vmax.xlane.f32.xlu0 %v1617
    %v1619 = vpop.xlane.xlu0 %1618
    %v1620 = vmax.f32 %v1515, %v1517
    %1621 = vmax.xlane.f32.xlu0 %v1620
    %v1622 = vpop.xlane.xlu0 %1621
    %v1623 = vmax.f32 %v1521, %v1523
    %1624 = vmax.xlane.f32.xlu0 %v1623
    %v1625 = vpop.xlane.xlu0 %1624
    %v1626 = vmax.f32 %v1525, %v1527
    %1627 = vmax.xlane.f32.xlu0 %v1626
    %v1628 = vpop.xlane.xlu0 %1627
    %v1629 = vmax.f32 %v1531, %v1533
    %1630 = vmax.xlane.f32.xlu0 %v1629
    %v1631 = vpop.xlane.xlu0 %1630
    %v1632 = vmax.f32 %v1535, %v1537
    %1633 = vmax.xlane.f32.xlu0 %v1632
    %v1634 = vpop.xlane.xlu0 %1633
    %v1635 = vsub.f32 %v1381, %v1541
    %v1636 = vsub.f32 %v1383, %v1541
    %v1637 = vsub.f32 %v1385, %v1544
    %v1638 = vsub.f32 %v1387, %v1544
    %v1639 = vsub.f32 %v1391, %v1547
    %v1640 = vsub.f32 %v1393, %v1547
    %v1641 = vsub.f32 %v1395, %v1550
    %v1642 = vsub.f32 %v1397, %v1550
    %v1643 = vsub.f32 %v1401, %v1553
    %v1644 = vsub.f32 %v1403, %v1553
    %v1645 = vsub.f32 %v1405, %v1556
    %v1646 = vsub.f32 %v1407, %v1556
    %v1647 = vsub.f32 %v1411, %v1559
    %v1648 = vsub.f32 %v1413, %v1559
    %v1649 = vsub.f32 %v1415, %v1562
    %v1650 = vsub.f32 %v1417, %v1562
    %v1651 = vsub.f32 %v1421, %v1565
    %v1652 = vsub.f32 %v1423, %v1565
    %v1653 = vsub.f32 %v1425, %v1568
    %v1654 = vsub.f32 %v1427, %v1568
    %v1655 = vsub.f32 %v1431, %v1571
    %v1656 = vsub.f32 %v1433, %v1571
    %v1657 = vsub.f32 %v1435, %v1574
    %v1658 = vsub.f32 %v1437, %v1574
    %v1659 = vsub.f32 %v1441, %v1577
    %v1660 = vsub.f32 %v1443, %v1577
    %v1661 = vsub.f32 %v1445, %v1580
    %v1662 = vsub.f32 %v1447, %v1580
    %v1663 = vsub.f32 %v1451, %v1583
    %v1664 = vsub.f32 %v1453, %v1583
    %v1665 = vsub.f32 %v1455, %v1586
    %v1666 = vsub.f32 %v1457, %v1586
    %v1667 = vsub.f32 %v1461, %v1589
    %v1668 = vsub.f32 %v1463, %v1589
    %v1669 = vsub.f32 %v1465, %v1592
    %v1670 = vsub.f32 %v1467, %v1592
    %v1671 = vsub.f32 %v1471, %v1595
    %v1672 = vsub.f32 %v1473, %v1595
    %v1673 = vsub.f32 %v1475, %v1598
    %v1674 = vsub.f32 %v1477, %v1598
    %v1675 = vsub.f32 %v1481, %v1601
    %v1676 = vsub.f32 %v1483, %v1601
    %v1677 = vsub.f32 %v1485, %v1604
    %v1678 = vsub.f32 %v1487, %v1604
    %v1679 = vsub.f32 %v1491, %v1607
    %v1680 = vsub.f32 %v1493, %v1607
    %v1681 = vsub.f32 %v1495, %v1610
    %v1682 = vsub.f32 %v1497, %v1610
    %v1683 = vsub.f32 %v1501, %v1613
    %v1684 = vsub.f32 %v1503, %v1613
    %v1685 = vsub.f32 %v1505, %v1616
    %v1686 = vsub.f32 %v1507, %v1616
    %v1687 = vsub.f32 %v1511, %v1619
    %v1688 = vsub.f32 %v1513, %v1619
    %v1689 = vsub.f32 %v1515, %v1622
    %v1690 = vsub.f32 %v1517, %v1622
    %v1691 = vsub.f32 %v1521, %v1625
    %v1692 = vsub.f32 %v1523, %v1625
    %v1693 = vsub.f32 %v1525, %v1628
    %v1694 = vsub.f32 %v1527, %v1628
    %v1695 = vsub.f32 %v1531, %v1631
    %v1696 = vsub.f32 %v1533, %v1631
    %v1697 = vsub.f32 %v1535, %v1634
    %v1698 = vsub.f32 %v1537, %v1634
    %v1699 = vmul.f32 %v1635, 1.442695
    %v1700 = vpow.pop %v1699
    %v1701 = vmul.f32 %v1636, 1.442695
    %v1702 = vpow.pop %v1701
    %v1703 = vmul.f32 %v1637, 1.442695
    %v1704 = vpow.pop %v1703
    %v1705 = vmul.f32 %v1638, 1.442695
    %v1706 = vpow.pop %v1705
    %v1707 = vmul.f32 %v1639, 1.442695
    %v1708 = vpow.pop %v1707
    %v1709 = vmul.f32 %v1640, 1.442695
    %v1710 = vpow.pop %v1709
    %v1711 = vmul.f32 %v1641, 1.442695
    %v1712 = vpow.pop %v1711
    %v1713 = vmul.f32 %v1642, 1.442695
    %v1714 = vpow.pop %v1713
    %v1715 = vmul.f32 %v1643, 1.442695
    %v1716 = vpow.pop %v1715
    %v1717 = vmul.f32 %v1644, 1.442695
    %v1718 = vpow.pop %v1717
    %v1719 = vmul.f32 %v1645, 1.442695
    %v1720 = vpow.pop %v1719
    %v1721 = vmul.f32 %v1646, 1.442695
    %v1722 = vpow.pop %v1721
    %v1723 = vmul.f32 %v1647, 1.442695
    %v1724 = vpow.pop %v1723
    %v1725 = vmul.f32 %v1648, 1.442695
    %v1726 = vpow.pop %v1725
    %v1727 = vmul.f32 %v1649, 1.442695
    %v1728 = vpow.pop %v1727
    %v1729 = vmul.f32 %v1650, 1.442695
    %v1730 = vpow.pop %v1729
    %v1731 = vmul.f32 %v1651, 1.442695
    %v1732 = vpow.pop %v1731
    %v1733 = vmul.f32 %v1652, 1.442695
    %v1734 = vpow.pop %v1733
    %v1735 = vmul.f32 %v1653, 1.442695
    %v1736 = vpow.pop %v1735
    %v1737 = vmul.f32 %v1654, 1.442695
    %v1738 = vpow.pop %v1737
    %v1739 = vmul.f32 %v1655, 1.442695
    %v1740 = vpow.pop %v1739
    %v1741 = vmul.f32 %v1656, 1.442695
    %v1742 = vpow.pop %v1741
    %v1743 = vmul.f32 %v1657, 1.442695
    %v1744 = vpow.pop %v1743
    %v1745 = vmul.f32 %v1658, 1.442695
    %v1746 = vpow.pop %v1745
    %v1747 = vmul.f32 %v1659, 1.442695
    %v1748 = vpow.pop %v1747
    %v1749 = vmul.f32 %v1660, 1.442695
    %v1750 = vpow.pop %v1749
    %v1751 = vmul.f32 %v1661, 1.442695
    %v1752 = vpow.pop %v1751
    %v1753 = vmul.f32 %v1662, 1.442695
    %v1754 = vpow.pop %v1753
    %v1755 = vmul.f32 %v1663, 1.442695
    %v1756 = vpow.pop %v1755
    %v1757 = vmul.f32 %v1664, 1.442695
    %v1758 = vpow.pop %v1757
    %v1759 = vmul.f32 %v1665, 1.442695
    %v1760 = vpow.pop %v1759
    %v1761 = vmul.f32 %v1666, 1.442695
    %v1762 = vpow.pop %v1761
    %v1763 = vmul.f32 %v1667, 1.442695
    %v1764 = vpow.pop %v1763
    %v1765 = vmul.f32 %v1668, 1.442695
    %v1766 = vpow.pop %v1765
    %v1767 = vmul.f32 %v1669, 1.442695
    %v1768 = vpow.pop %v1767
    %v1769 = vmul.f32 %v1670, 1.442695
    %v1770 = vpow.pop %v1769
    %v1771 = vmul.f32 %v1671, 1.442695
    %v1772 = vpow.pop %v1771
    %v1773 = vmul.f32 %v1672, 1.442695
    %v1774 = vpow.pop %v1773
    %v1775 = vmul.f32 %v1673, 1.442695
    %v1776 = vpow.pop %v1775
    %v1777 = vmul.f32 %v1674, 1.442695
    %v1778 = vpow.pop %v1777
    %v1779 = vmul.f32 %v1675, 1.442695
    %v1780 = vpow.pop %v1779
    %v1781 = vmul.f32 %v1676, 1.442695
    %v1782 = vpow.pop %v1781
    %v1783 = vmul.f32 %v1677, 1.442695
    %v1784 = vpow.pop %v1783
    %v1785 = vmul.f32 %v1678, 1.442695
    %v1786 = vpow.pop %v1785
    %v1787 = vmul.f32 %v1679, 1.442695
    %v1788 = vpow.pop %v1787
    %v1789 = vmul.f32 %v1680, 1.442695
    %v1790 = vpow.pop %v1789
    %v1791 = vmul.f32 %v1681, 1.442695
    %v1792 = vpow.pop %v1791
    %v1793 = vmul.f32 %v1682, 1.442695
    %v1794 = vpow.pop %v1793
    %v1795 = vmul.f32 %v1683, 1.442695
    %v1796 = vpow.pop %v1795
    %v1797 = vmul.f32 %v1684, 1.442695
    %v1798 = vpow.pop %v1797
    %v1799 = vmul.f32 %v1685, 1.442695
    %v1800 = vpow.pop %v1799
    %v1801 = vmul.f32 %v1686, 1.442695
    %v1802 = vpow.pop %v1801
    %v1803 = vmul.f32 %v1687, 1.442695
    %v1804 = vpow.pop %v1803
    %v1805 = vmul.f32 %v1688, 1.442695
    %v1806 = vpow.pop %v1805
    %v1807 = vmul.f32 %v1689, 1.442695
    %v1808 = vpow.pop %v1807
    %v1809 = vmul.f32 %v1690, 1.442695
    %v1810 = vpow.pop %v1809
    %v1811 = vmul.f32 %v1691, 1.442695
    %v1812 = vpow.pop %v1811
    %v1813 = vmul.f32 %v1692, 1.442695
    %v1814 = vpow.pop %v1813
    %v1815 = vmul.f32 %v1693, 1.442695
    %v1816 = vpow.pop %v1815
    %v1817 = vmul.f32 %v1694, 1.442695
    %v1818 = vpow.pop %v1817
    %v1819 = vmul.f32 %v1695, 1.442695
    %v1820 = vpow.pop %v1819
    %v1821 = vmul.f32 %v1696, 1.442695
    %v1822 = vpow.pop %v1821
    %v1823 = vmul.f32 %v1697, 1.442695
    %v1824 = vpow.pop %v1823
    %v1825 = vmul.f32 %v1698, 1.442695
    %v1826 = vpow.pop %v1825
    %v1827 = vpack.c.bf16 %v1704, %v1700
    %v1828 = vpack.c.bf16 %v1706, %v1702
    %v1829 = vpack.c.bf16 %v1712, %v1708
    %v1830 = vpack.c.bf16 %v1714, %v1710
    %v1831 = vpack.c.bf16 %v1720, %v1716
    %v1832 = vpack.c.bf16 %v1722, %v1718
    %v1833 = vpack.c.bf16 %v1728, %v1724
    %v1834 = vpack.c.bf16 %v1730, %v1726
    %v1835 = vpack.c.bf16 %v1736, %v1732
    %v1836 = vpack.c.bf16 %v1738, %v1734
    %v1837 = vpack.c.bf16 %v1744, %v1740
    %v1838 = vpack.c.bf16 %v1746, %v1742
    %v1839 = vpack.c.bf16 %v1752, %v1748
    %v1840 = vpack.c.bf16 %v1754, %v1750
    %v1841 = vpack.c.bf16 %v1760, %v1756
    %v1842 = vpack.c.bf16 %v1762, %v1758
    %v1843 = vpack.c.bf16 %v1768, %v1764
    %v1844 = vpack.c.bf16 %v1770, %v1766
    %v1845 = vpack.c.bf16 %v1776, %v1772
    %v1846 = vpack.c.bf16 %v1778, %v1774
    %v1847 = vpack.c.bf16 %v1784, %v1780
    %v1848 = vpack.c.bf16 %v1786, %v1782
    %v1849 = vpack.c.bf16 %v1792, %v1788
    %v1850 = vpack.c.bf16 %v1794, %v1790
    %v1851 = vpack.c.bf16 %v1800, %v1796
    %v1852 = vpack.c.bf16 %v1802, %v1798
    %v1853 = vpack.c.bf16 %v1808, %v1804
    %v1854 = vpack.c.bf16 %v1810, %v1806
    %v1855 = vpack.c.bf16 %v1816, %v1812
    %v1856 = vpack.c.bf16 %v1818, %v1814
    %v1857 = vpack.c.bf16 %v1824, %v1820
    %v1858 = vpack.c.bf16 %v1826, %v1822
    %v1861 = vrot.slane %v1137, 1
    %v1862 = vrot.slane %v1138, 1
    %1865 = vmatprep.subr.bf16.mxu0 %v1842
    %1866 = vmatpush1.bf16.xpose.msra.mxu0 %v1841
    %1867 = vmatprep.subr.bf16.mxu0 %v1840
    %1868 = vmatpush1.bf16.xpose.msra.mxu0 %v1839
    %1869 = vmatprep.subr.bf16.mxu0 %v1838
    %1870 = vmatpush1.bf16.xpose.msra.mxu0 %v1837
    %1871 = vmatprep.subr.bf16.mxu0 %v1836
    %1872 = vmatpush1.bf16.xpose.msra.mxu0 %v1835
    %1873 = vmatprep.subr.bf16.mxu0 %v1834
    %1874 = vmatpush1.bf16.xpose.msra.mxu0 %v1833
    %1875 = vmatprep.subr.bf16.mxu0 %v1832
    %1876 = vmatpush1.bf16.xpose.msra.mxu0 %v1831
    %1877 = vmatprep.subr.bf16.mxu0 %v1830
    %1878 = vmatpush1.bf16.xpose.msra.mxu0 %v1829
    %1879 = vmatprep.subr.bf16.mxu0 %v1828
    %1880 = vmatpush1.bf16.xpose.msra.mxu0 %v1827
    %1881 = vmatprep.subr.bf16.mxu0 %v1858
    %1882 = vmatpush2.bf16.xpose.msra.mxu0 %v1857
    %1883 = vmatprep.subr.bf16.mxu0 %v1856
    %1884 = vmatpush2.bf16.xpose.msra.mxu0 %v1855
    %1885 = vmatprep.subr.bf16.mxu0 %v1854
    %1886 = vmatpush2.bf16.xpose.msra.mxu0 %v1853
    %1887 = vmatprep.subr.bf16.mxu0 %v1852
    %1888 = vmatpush2.bf16.xpose.msra.mxu0 %v1851
    %1889 = vmatprep.subr.bf16.mxu0 %v1850
    %1890 = vmatpush2.bf16.xpose.msra.mxu0 %v1849
    %1891 = vmatprep.subr.bf16.mxu0 %v1848
    %1892 = vmatpush2.bf16.xpose.msra.mxu0 %v1847
    %1893 = vmatprep.subr.bf16.mxu0 %v1846
    %1894 = vmatpush2.bf16.xpose.msra.mxu0 %v1845
    %1895 = vmatprep.subr.bf16.mxu0 %v1844
    %1896 = vmatpush2.bf16.xpose.msra.mxu0 %v1843
    %1897 = vmatprep.mubr.bf16.mxu0 %v1862
    %1898 = vmatmul.mubr.bf16.gmra.mxu0 %v1861
    %v1899 = vpop.f32.mrf.mxu0
    %v1900 = vadd.f32 0.0, %v1899
    %v1901 = vpop.f32.mrf.mxu0
    %v1902 = vadd.f32 0.0, %v1901
    %v1903 = vpop.f32.mrf.mxu0
    %v1904 = vpop.f32.mrf.mxu0
    %1905 = vdwg.mxu0
    %1906 = vmatprep.subr.bf16.mxu0 %v1842
    %1907 = vmatpush1.bf16.xpose.msra.mxu0 %v1841
    %1908 = vmatprep.subr.bf16.mxu0 %v1840
    %1909 = vmatpush1.bf16.xpose.msra.mxu0 %v1839
    %1910 = vmatprep.subr.bf16.mxu0 %v1838
    %1911 = vmatpush1.bf16.xpose.msra.mxu0 %v1837
    %1912 = vmatprep.subr.bf16.mxu0 %v1836
    %1913 = vmatpush1.bf16.xpose.msra.mxu0 %v1835
    %1914 = vmatprep.subr.bf16.mxu0 %v1834
    %1915 = vmatpush1.bf16.xpose.msra.mxu0 %v1833
    %1916 = vmatprep.subr.bf16.mxu0 %v1832
    %1917 = vmatpush1.bf16.xpose.msra.mxu0 %v1831
    %1918 = vmatprep.subr.bf16.mxu0 %v1830
    %1919 = vmatpush1.bf16.xpose.msra.mxu0 %v1829
    %1920 = vmatprep.subr.bf16.mxu0 %v1828
    %1921 = vmatpush1.bf16.xpose.msra.mxu0 %v1827
    %1922 = vmatprep.subr.bf16.mxu0 %v1858
    %1923 = vmatpush2.bf16.xpose.msra.mxu0 %v1857
    %1924 = vmatprep.subr.bf16.mxu0 %v1856
    %1925 = vmatpush2.bf16.xpose.msra.mxu0 %v1855
    %1926 = vmatprep.subr.bf16.mxu0 %v1854
    %1927 = vmatpush2.bf16.xpose.msra.mxu0 %v1853
    %1928 = vmatprep.subr.bf16.mxu0 %v1852
    %1929 = vmatpush2.bf16.xpose.msra.mxu0 %v1851
    %1930 = vmatprep.subr.bf16.mxu0 %v1850
    %1931 = vmatpush2.bf16.xpose.msra.mxu0 %v1849
    %1932 = vmatprep.subr.bf16.mxu0 %v1848
    %1933 = vmatpush2.bf16.xpose.msra.mxu0 %v1847
    %1934 = vmatprep.subr.bf16.mxu0 %v1846
    %1935 = vmatpush2.bf16.xpose.msra.mxu0 %v1845
    %1936 = vmatprep.subr.bf16.mxu0 %v1844
    %1937 = vmatpush2.bf16.xpose.msra.mxu0 %v1843
    %1938 = vmatprep.mubr.bf16.mxu0 1065369472
    %1939 = vmatmul.mubr.bf16.gmra.mxu0 1065369472
    %v1940 = vpop.f32.mrf.mxu0
    %v1941 = vadd.f32 0.0, %v1940
    %v1942 = vpop.f32.mrf.mxu0
    %v1943 = vadd.f32 0.0, %v1942
    %v1944 = vpop.f32.mrf.mxu0
    %v1945 = vpop.f32.mrf.mxu0
    %1946 = vdwg.mxu0
    %v1947 = vrcp.pop %v1941
    %v1948 = vrcp.pop %v1943
    %v1949 = vlaneseq
    %v1950 = vshrl.u32 %v1949, 7
    %v1951 = vsub.s32 0, %v1950
    %v1952 = vrot.slane %v1947, %v1951
    %v1953 = vlaneseq
    %v1954 = vshrl.u32 %v1953, 7
    %v1955 = vsub.s32 0, %v1954
    %v1956 = vrot.slane %v1948, %v1955
    %v1957 = vmul.f32 %v1900, %v1952
    %v1958 = vmul.f32 %v1902, %v1956
    %v1959 = vrot.slane %v60, 2
    %v1960 = vrot.slane %v72, 2
    %v1963 = vadd.f32 %v1957, %v1959
    %v1964 = vadd.f32 %v1958, %v1960
    %v1967 = vcombine.low %v1963, %v1964
    %v1968 = vrot.slane %v1967, 6
    %1970 = vst [vmem:[#allocation2] sm:$0xcc] %v1968
    %s1971 = scalar_lea.vmem %s0, 8
    %v1972 = vld [vmem:[%s1971] sm:$0xff]
    %v1974 = vcombine.high %v1972, %v1972
    %v1975 = vsel %vm80, %v1972, 0
    %v1977 = vsel %vm80, %v1974, 0
    %1979 = vmatprep.subr.mxu0 0.0
    %1980 = vmatpush1.msra.mxu0 0.0
    %1981 = vmatprep.subr.mxu0 0.0
    %1982 = vmatpush1.msra.mxu0 0.0
    %1983 = vmatprep.subr.mxu0 0.0
    %1984 = vmatpush1.msra.mxu0 0.0
    %1985 = vmatprep.subr.mxu0 0.0
    %1986 = vmatpush1.msra.mxu0 0.0
    %1987 = vmatprep.subr.mxu0 0.0
    %1988 = vmatpush1.msra.mxu0 0.0
    %1989 = vmatprep.subr.mxu0 0.0
    %1990 = vmatpush1.msra.mxu0 0.0
    %1991 = vmatprep.subr.mxu0 0.0
    %1992 = vmatpush1.msra.mxu0 0.0
    %1993 = vmatprep.subr.mxu0 0.0
    %1994 = vmatpush1.msra.mxu0 0.0
    %1995 = vmatprep.subr.mxu0 0.0
    %1996 = vmatpush1.msra.mxu0 0.0
    %1997 = vmatprep.subr.mxu0 0.0
    %1998 = vmatpush1.msra.mxu0 0.0
    %1999 = vmatprep.subr.mxu0 0.0
    %2000 = vmatpush1.msra.mxu0 0.0
    %2001 = vmatprep.subr.mxu0 0.0
    %2002 = vmatpush1.msra.mxu0 0.0
    %2003 = vmatprep.subr.mxu0 0.0
    %2004 = vmatpush1.msra.mxu0 0.0
    %2005 = vmatprep.subr.mxu0 0.0
    %2006 = vmatpush1.msra.mxu0 0.0
    %2007 = vmatprep.subr.mxu0 0.0
    %2008 = vmatpush1.msra.mxu0 0.0
    %2009 = vmatprep.subr.mxu0 %v1977
    %2010 = vmatpush1.msra.mxu0 %v1975
    %2011 = vmatprep.subr.mxu0 0.0
    %2012 = vmatpush2.msra.mxu0 0.0
    %2013 = vmatprep.subr.mxu0 0.0
    %2014 = vmatpush2.msra.mxu0 0.0
    %2015 = vmatprep.subr.mxu0 0.0
    %2016 = vmatpush2.msra.mxu0 0.0
    %2017 = vmatprep.subr.mxu0 0.0
    %2018 = vmatpush2.msra.mxu0 0.0
    %2019 = vmatprep.subr.mxu0 0.0
    %2020 = vmatpush2.msra.mxu0 0.0
    %2021 = vmatprep.subr.mxu0 0.0
    %2022 = vmatpush2.msra.mxu0 0.0
    %2023 = vmatprep.subr.mxu0 0.0
    %2024 = vmatpush2.msra.mxu0 0.0
    %2025 = vmatprep.subr.mxu0 0.0
    %2026 = vmatpush2.msra.mxu0 0.0
    %2027 = vmatprep.subr.mxu0 0.0
    %2028 = vmatpush2.msra.mxu0 0.0
    %2029 = vmatprep.subr.mxu0 0.0
    %2030 = vmatpush2.msra.mxu0 0.0
    %2031 = vmatprep.subr.mxu0 0.0
    %2032 = vmatpush2.msra.mxu0 0.0
    %2033 = vmatprep.subr.mxu0 0.0
    %2034 = vmatpush2.msra.mxu0 0.0
    %2035 = vmatprep.subr.mxu0 0.0
    %2036 = vmatpush2.msra.mxu0 0.0
    %2037 = vmatprep.subr.mxu0 0.0
    %2038 = vmatpush2.msra.mxu0 0.0
    %2039 = vmatprep.subr.mxu0 0.0
    %2040 = vmatpush2.msra.mxu0 0.0
    %2041 = vmatprep.subr.mxu0 0.0
    %2042 = vmatpush2.msra.mxu0 0.0
    %2043 = vmatprep.mubr.f32.mxu0 0.0
    %2044 = vmatmul.mubr.f32.gmra.mxu0 %v75
    %v2045 = vpop.f32.mrf.mxu0
    %v2046 = vadd.f32 %v64, %v2045
    %v2047 = vpop.f32.mrf.mxu0
    %v2048 = vadd.f32 %v64, %v2047
    %2049 = vmatprep.mubr.f32.mxu0 0.0
    %2050 = vmatmul.mubr.f32.gmra.mxu0 %v78
    %v2051 = vpop.f32.mrf.mxu0
    %v2052 = vadd.f32 %v69, %v2051
    %v2053 = vpop.f32.mrf.mxu0
    %v2054 = vadd.f32 %v69, %v2053
    %2055 = vdwg.mxu0
    %2057 = vxpose.xlu0.b32.start [1/16] %v1972, 128
    %2058 = vxpose.xlu0.b32.cont [2/16] 0.0, 128
    %2059 = vxpose.xlu0.b32.cont [3/16] 0.0, 128
    %2060 = vxpose.xlu0.b32.cont [4/16] 0.0, 128
    %2061 = vxpose.xlu0.b32.cont [5/16] 0.0, 128
    %2062 = vxpose.xlu0.b32.cont [6/16] 0.0, 128
    %2063 = vxpose.xlu0.b32.cont [7/16] 0.0, 128
    %2064 = vxpose.xlu0.b32.cont [8/16] 0.0, 128
    %2065 = vxpose.xlu0.b32.cont [9/16] 0.0, 128
    %2066 = vxpose.xlu0.b32.cont [10/16] 0.0, 128
    %2067 = vxpose.xlu0.b32.cont [11/16] 0.0, 128
    %2068 = vxpose.xlu0.b32.cont [12/16] 0.0, 128
    %2069 = vxpose.xlu0.b32.cont [13/16] 0.0, 128
    %2070 = vxpose.xlu0.b32.cont [14/16] 0.0, 128
    %2071 = vxpose.xlu0.b32.cont [15/16] 0.0, 128
    %2072 = vxpose.xlu0.b32.end [16/16] 0.0, 128
    %v2073 = vpop.trf.xlu0
    %v2074 = vpop.trf.xlu0
    %v2075 = vpop.trf.xlu0
    %v2076 = vpop.trf.xlu0
    %v2077 = vpop.trf.xlu0
    %v2078 = vpop.trf.xlu0
    %v2079 = vpop.trf.xlu0
    %v2080 = vpop.trf.xlu0
    %v2081 = vpop.trf.xlu0
    %v2082 = vpop.trf.xlu0
    %v2083 = vpop.trf.xlu0
    %v2084 = vpop.trf.xlu0
    %v2085 = vpop.trf.xlu0
    %v2086 = vpop.trf.xlu0
    %v2087 = vpop.trf.xlu0
    %v2088 = vpop.trf.xlu0
    %2089 = vxpose.xlu0.b32.start [1/16] %v1974, 128
    %2090 = vxpose.xlu0.b32.cont [2/16] 0.0, 128
    %2091 = vxpose.xlu0.b32.cont [3/16] 0.0, 128
    %2092 = vxpose.xlu0.b32.cont [4/16] 0.0, 128
    %2093 = vxpose.xlu0.b32.cont [5/16] 0.0, 128
    %2094 = vxpose.xlu0.b32.cont [6/16] 0.0, 128
    %2095 = vxpose.xlu0.b32.cont [7/16] 0.0, 128
    %2096 = vxpose.xlu0.b32.cont [8/16] 0.0, 128
    %2097 = vxpose.xlu0.b32.cont [9/16] 0.0, 128
    %2098 = vxpose.xlu0.b32.cont [10/16] 0.0, 128
    %2099 = vxpose.xlu0.b32.cont [11/16] 0.0, 128
    %2100 = vxpose.xlu0.b32.cont [12/16] 0.0, 128
    %2101 = vxpose.xlu0.b32.cont [13/16] 0.0, 128
    %2102 = vxpose.xlu0.b32.cont [14/16] 0.0, 128
    %2103 = vxpose.xlu0.b32.cont [15/16] 0.0, 128
    %2104 = vxpose.xlu0.b32.end [16/16] 0.0, 128
    %v2105 = vpop.trf.xlu0
    %v2106 = vpop.trf.xlu0
    %v2107 = vpop.trf.xlu0
    %v2108 = vpop.trf.xlu0
    %v2109 = vpop.trf.xlu0
    %v2110 = vpop.trf.xlu0
    %v2111 = vpop.trf.xlu0
    %v2112 = vpop.trf.xlu0
    %v2113 = vpop.trf.xlu0
    %v2114 = vpop.trf.xlu0
    %v2115 = vpop.trf.xlu0
    %v2116 = vpop.trf.xlu0
    %v2117 = vpop.trf.xlu0
    %v2118 = vpop.trf.xlu0
    %v2119 = vpop.trf.xlu0
    %v2120 = vpop.trf.xlu0
    %v2122 = vsel %vm73, %v2073, 0
    %v2125 = vsel %vm73, %v2074, 0
    %v2128 = vsel %vm73, %v2075, 0
    %v2131 = vsel %vm73, %v2076, 0
    %v2134 = vsel %vm73, %v2077, 0
    %v2137 = vsel %vm73, %v2078, 0
    %v2140 = vsel %vm73, %v2079, 0
    %v2143 = vsel %vm73, %v2080, 0
    %v2146 = vsel %vm73, %v2081, 0
    %v2149 = vsel %vm73, %v2082, 0
    %v2152 = vsel %vm73, %v2083, 0
    %v2155 = vsel %vm73, %v2084, 0
    %v2158 = vsel %vm73, %v2085, 0
    %v2161 = vsel %vm73, %v2086, 0
    %v2164 = vsel %vm73, %v2087, 0
    %v2167 = vsel %vm73, %v2088, 0
    %v2170 = vsel %vm73, %v2105, 0
    %v2173 = vsel %vm73, %v2106, 0
    %v2176 = vsel %vm73, %v2107, 0
    %v2179 = vsel %vm73, %v2108, 0
    %v2182 = vsel %vm73, %v2109, 0
    %v2185 = vsel %vm73, %v2110, 0
    %v2188 = vsel %vm73, %v2111, 0
    %v2191 = vsel %vm73, %v2112, 0
    %v2194 = vsel %vm73, %v2113, 0
    %v2197 = vsel %vm73, %v2114, 0
    %v2200 = vsel %vm73, %v2115, 0
    %v2203 = vsel %vm73, %v2116, 0
    %v2206 = vsel %vm73, %v2117, 0
    %v2209 = vsel %vm73, %v2118, 0
    %v2212 = vsel %vm73, %v2119, 0
    %v2215 = vsel %vm73, %v2120, 0
    %2217 = vmatprep.subr.mxu0 0.0
    %2218 = vmatpush1.msra.mxu0 0.0
    %2219 = vmatprep.subr.mxu0 0.0
    %2220 = vmatpush1.msra.mxu0 0.0
    %2221 = vmatprep.subr.mxu0 0.0
    %2222 = vmatpush1.msra.mxu0 0.0
    %2223 = vmatprep.subr.mxu0 0.0
    %2224 = vmatpush1.msra.mxu0 0.0
    %2225 = vmatprep.subr.mxu0 0.0
    %2226 = vmatpush1.msra.mxu0 0.0
    %2227 = vmatprep.subr.mxu0 0.0
    %2228 = vmatpush1.msra.mxu0 0.0
    %2229 = vmatprep.subr.mxu0 0.0
    %2230 = vmatpush1.msra.mxu0 0.0
    %2231 = vmatprep.subr.mxu0 0.0
    %2232 = vmatpush1.msra.mxu0 0.0
    %2233 = vmatprep.subr.mxu0 0.0
    %2234 = vmatpush1.msra.mxu0 0.0
    %2235 = vmatprep.subr.mxu0 0.0
    %2236 = vmatpush1.msra.mxu0 0.0
    %2237 = vmatprep.subr.mxu0 0.0
    %2238 = vmatpush1.msra.mxu0 0.0
    %2239 = vmatprep.subr.mxu0 0.0
    %2240 = vmatpush1.msra.mxu0 0.0
    %2241 = vmatprep.subr.mxu0 0.0
    %2242 = vmatpush1.msra.mxu0 0.0
    %2243 = vmatprep.subr.mxu0 0.0
    %2244 = vmatpush1.msra.mxu0 0.0
    %2245 = vmatprep.subr.mxu0 0.0
    %2246 = vmatpush1.msra.mxu0 0.0
    %2247 = vmatprep.subr.mxu0 0.0
    %2248 = vmatpush1.msra.mxu0 %v324
    %2249 = vmatprep.subr.mxu0 0.0
    %2250 = vmatpush2.msra.mxu0 0.0
    %2251 = vmatprep.subr.mxu0 0.0
    %2252 = vmatpush2.msra.mxu0 0.0
    %2253 = vmatprep.subr.mxu0 0.0
    %2254 = vmatpush2.msra.mxu0 0.0
    %2255 = vmatprep.subr.mxu0 0.0
    %2256 = vmatpush2.msra.mxu0 0.0
    %2257 = vmatprep.subr.mxu0 0.0
    %2258 = vmatpush2.msra.mxu0 0.0
    %2259 = vmatprep.subr.mxu0 0.0
    %2260 = vmatpush2.msra.mxu0 0.0
    %2261 = vmatprep.subr.mxu0 0.0
    %2262 = vmatpush2.msra.mxu0 0.0
    %2263 = vmatprep.subr.mxu0 0.0
    %2264 = vmatpush2.msra.mxu0 0.0
    %2265 = vmatprep.subr.mxu0 0.0
    %2266 = vmatpush2.msra.mxu0 0.0
    %2267 = vmatprep.subr.mxu0 0.0
    %2268 = vmatpush2.msra.mxu0 0.0
    %2269 = vmatprep.subr.mxu0 0.0
    %2270 = vmatpush2.msra.mxu0 0.0
    %2271 = vmatprep.subr.mxu0 0.0
    %2272 = vmatpush2.msra.mxu0 0.0
    %2273 = vmatprep.subr.mxu0 0.0
    %2274 = vmatpush2.msra.mxu0 0.0
    %2275 = vmatprep.subr.mxu0 0.0
    %2276 = vmatpush2.msra.mxu0 0.0
    %2277 = vmatprep.subr.mxu0 0.0
    %2278 = vmatpush2.msra.mxu0 0.0
    %2279 = vmatprep.subr.mxu0 0.0
    %2280 = vmatpush2.msra.mxu0 0.0
    %2281 = vmatprep.mubr.f32.mxu0 0.0
    %2282 = vmatmul.mubr.f32.gmra.mxu0 %v2122
    %v2283 = vpop.f32.mrf.mxu0
    %v2284 = vadd.f32 %v28, %v2283
    %v2285 = vpop.f32.mrf.mxu0
    %2286 = vmatprep.mubr.f32.mxu0 0.0
    %2287 = vmatmul.mubr.f32.gmra.mxu0 %v2125
    %v2288 = vpop.f32.mrf.mxu0
    %v2289 = vadd.f32 %v29, %v2288
    %v2290 = vpop.f32.mrf.mxu0
    %2291 = vmatprep.mubr.f32.mxu0 0.0
    %2292 = vmatmul.mubr.f32.gmra.mxu0 %v2128
    %v2293 = vpop.f32.mrf.mxu0
    %v2294 = vadd.f32 %v30, %v2293
    %v2295 = vpop.f32.mrf.mxu0
    %2296 = vmatprep.mubr.f32.mxu0 0.0
    %2297 = vmatmul.mubr.f32.gmra.mxu0 %v2131
    %v2298 = vpop.f32.mrf.mxu0
    %v2299 = vadd.f32 %v31, %v2298
    %v2300 = vpop.f32.mrf.mxu0
    %2301 = vmatprep.mubr.f32.mxu0 0.0
    %2302 = vmatmul.mubr.f32.gmra.mxu0 %v2134
    %v2303 = vpop.f32.mrf.mxu0
    %v2304 = vadd.f32 %v32, %v2303
    %v2305 = vpop.f32.mrf.mxu0
    %2306 = vmatprep.mubr.f32.mxu0 0.0
    %2307 = vmatmul.mubr.f32.gmra.mxu0 %v2137
    %v2308 = vpop.f32.mrf.mxu0
    %v2309 = vadd.f32 %v33, %v2308
    %v2310 = vpop.f32.mrf.mxu0
    %2311 = vmatprep.mubr.f32.mxu0 0.0
    %2312 = vmatmul.mubr.f32.gmra.mxu0 %v2140
    %v2313 = vpop.f32.mrf.mxu0
    %v2314 = vadd.f32 %v34, %v2313
    %v2315 = vpop.f32.mrf.mxu0
    %2316 = vmatprep.mubr.f32.mxu0 0.0
    %2317 = vmatmul.mubr.f32.gmra.mxu0 %v2143
    %v2318 = vpop.f32.mrf.mxu0
    %v2319 = vadd.f32 %v35, %v2318
    %v2320 = vpop.f32.mrf.mxu0
    %2321 = vmatprep.mubr.f32.mxu0 0.0
    %2322 = vmatmul.mubr.f32.gmra.mxu0 %v2146
    %v2323 = vpop.f32.mrf.mxu0
    %v2324 = vadd.f32 %v36, %v2323
    %v2325 = vpop.f32.mrf.mxu0
    %2326 = vmatprep.mubr.f32.mxu0 0.0
    %2327 = vmatmul.mubr.f32.gmra.mxu0 %v2149
    %v2328 = vpop.f32.mrf.mxu0
    %v2329 = vadd.f32 %v37, %v2328
    %v2330 = vpop.f32.mrf.mxu0
    %2331 = vmatprep.mubr.f32.mxu0 0.0
    %2332 = vmatmul.mubr.f32.gmra.mxu0 %v2152
    %v2333 = vpop.f32.mrf.mxu0
    %v2334 = vadd.f32 %v38, %v2333
    %v2335 = vpop.f32.mrf.mxu0
    %2336 = vmatprep.mubr.f32.mxu0 0.0
    %2337 = vmatmul.mubr.f32.gmra.mxu0 %v2155
    %v2338 = vpop.f32.mrf.mxu0
    %v2339 = vadd.f32 %v39, %v2338
    %v2340 = vpop.f32.mrf.mxu0
    %2341 = vmatprep.mubr.f32.mxu0 0.0
    %2342 = vmatmul.mubr.f32.gmra.mxu0 %v2158
    %v2343 = vpop.f32.mrf.mxu0
    %v2344 = vadd.f32 %v40, %v2343
    %v2345 = vpop.f32.mrf.mxu0
    %2346 = vmatprep.mubr.f32.mxu0 0.0
    %2347 = vmatmul.mubr.f32.gmra.mxu0 %v2161
    %v2348 = vpop.f32.mrf.mxu0
    %v2349 = vadd.f32 %v41, %v2348
    %v2350 = vpop.f32.mrf.mxu0
    %2351 = vmatprep.mubr.f32.mxu0 0.0
    %2352 = vmatmul.mubr.f32.gmra.mxu0 %v2164
    %v2353 = vpop.f32.mrf.mxu0
    %v2354 = vadd.f32 %v42, %v2353
    %v2355 = vpop.f32.mrf.mxu0
    %2356 = vmatprep.mubr.f32.mxu0 0.0
    %2357 = vmatmul.mubr.f32.gmra.mxu0 %v2167
    %v2358 = vpop.f32.mrf.mxu0
    %v2359 = vadd.f32 %v43, %v2358
    %v2360 = vpop.f32.mrf.mxu0
    %2361 = vmatprep.mubr.f32.mxu0 0.0
    %2362 = vmatmul.mubr.f32.gmra.mxu0 %v2170
    %v2363 = vpop.f32.mrf.mxu0
    %v2364 = vadd.f32 %v44, %v2363
    %v2365 = vpop.f32.mrf.mxu0
    %2366 = vmatprep.mubr.f32.mxu0 0.0
    %2367 = vmatmul.mubr.f32.gmra.mxu0 %v2173
    %v2368 = vpop.f32.mrf.mxu0
    %v2369 = vadd.f32 %v45, %v2368
    %v2370 = vpop.f32.mrf.mxu0
    %2371 = vmatprep.mubr.f32.mxu0 0.0
    %2372 = vmatmul.mubr.f32.gmra.mxu0 %v2176
    %v2373 = vpop.f32.mrf.mxu0
    %v2374 = vadd.f32 %v46, %v2373
    %v2375 = vpop.f32.mrf.mxu0
    %2376 = vmatprep.mubr.f32.mxu0 0.0
    %2377 = vmatmul.mubr.f32.gmra.mxu0 %v2179
    %v2378 = vpop.f32.mrf.mxu0
    %v2379 = vadd.f32 %v47, %v2378
    %v2380 = vpop.f32.mrf.mxu0
    %2381 = vmatprep.mubr.f32.mxu0 0.0
    %2382 = vmatmul.mubr.f32.gmra.mxu0 %v2182
    %v2383 = vpop.f32.mrf.mxu0
    %v2384 = vadd.f32 %v48, %v2383
    %v2385 = vpop.f32.mrf.mxu0
    %2386 = vmatprep.mubr.f32.mxu0 0.0
    %2387 = vmatmul.mubr.f32.gmra.mxu0 %v2185
    %v2388 = vpop.f32.mrf.mxu0
    %v2389 = vadd.f32 %v49, %v2388
    %v2390 = vpop.f32.mrf.mxu0
    %2391 = vmatprep.mubr.f32.mxu0 0.0
    %2392 = vmatmul.mubr.f32.gmra.mxu0 %v2188
    %v2393 = vpop.f32.mrf.mxu0
    %v2394 = vadd.f32 %v50, %v2393
    %v2395 = vpop.f32.mrf.mxu0
    %2396 = vmatprep.mubr.f32.mxu0 0.0
    %2397 = vmatmul.mubr.f32.gmra.mxu0 %v2191
    %v2398 = vpop.f32.mrf.mxu0
    %v2399 = vadd.f32 %v51, %v2398
    %v2400 = vpop.f32.mrf.mxu0
    %2401 = vmatprep.mubr.f32.mxu0 0.0
    %2402 = vmatmul.mubr.f32.gmra.mxu0 %v2194
    %v2403 = vpop.f32.mrf.mxu0
    %v2404 = vadd.f32 %v52, %v2403
    %v2405 = vpop.f32.mrf.mxu0
    %2406 = vmatprep.mubr.f32.mxu0 0.0
    %2407 = vmatmul.mubr.f32.gmra.mxu0 %v2197
    %v2408 = vpop.f32.mrf.mxu0
    %v2409 = vadd.f32 %v53, %v2408
    %v2410 = vpop.f32.mrf.mxu0
    %2411 = vmatprep.mubr.f32.mxu0 0.0
    %2412 = vmatmul.mubr.f32.gmra.mxu0 %v2200
    %v2413 = vpop.f32.mrf.mxu0
    %v2414 = vadd.f32 %v54, %v2413
    %v2415 = vpop.f32.mrf.mxu0
    %2416 = vmatprep.mubr.f32.mxu0 0.0
    %2417 = vmatmul.mubr.f32.gmra.mxu0 %v2203
    %v2418 = vpop.f32.mrf.mxu0
    %v2419 = vadd.f32 %v55, %v2418
    %v2420 = vpop.f32.mrf.mxu0
    %2421 = vmatprep.mubr.f32.mxu0 0.0
    %2422 = vmatmul.mubr.f32.gmra.mxu0 %v2206
    %v2423 = vpop.f32.mrf.mxu0
    %v2424 = vadd.f32 %v56, %v2423
    %v2425 = vpop.f32.mrf.mxu0
    %2426 = vmatprep.mubr.f32.mxu0 0.0
    %2427 = vmatmul.mubr.f32.gmra.mxu0 %v2209
    %v2428 = vpop.f32.mrf.mxu0
    %v2429 = vadd.f32 %v57, %v2428
    %v2430 = vpop.f32.mrf.mxu0
    %2431 = vmatprep.mubr.f32.mxu0 0.0
    %2432 = vmatmul.mubr.f32.gmra.mxu0 %v2212
    %v2433 = vpop.f32.mrf.mxu0
    %v2434 = vadd.f32 %v58, %v2433
    %v2435 = vpop.f32.mrf.mxu0
    %2436 = vmatprep.mubr.f32.mxu0 0.0
    %2437 = vmatmul.mubr.f32.gmra.mxu0 %v2215
    %v2438 = vpop.f32.mrf.mxu0
    %v2439 = vadd.f32 %v59, %v2438
    %v2440 = vpop.f32.mrf.mxu0
    %2441 = vdwg.mxu0
    %v2442 = vpack.c.bf16 %v2289, %v2284
    %v2443 = vpack.c.bf16 %v2299, %v2294
    %v2444 = vpack.c.bf16 %v2309, %v2304
    %v2445 = vpack.c.bf16 %v2319, %v2314
    %v2446 = vpack.c.bf16 %v2329, %v2324
    %v2447 = vpack.c.bf16 %v2339, %v2334
    %v2448 = vpack.c.bf16 %v2349, %v2344
    %v2449 = vpack.c.bf16 %v2359, %v2354
    %v2450 = vpack.c.bf16 %v2369, %v2364
    %v2451 = vpack.c.bf16 %v2379, %v2374
    %v2452 = vpack.c.bf16 %v2389, %v2384
    %v2453 = vpack.c.bf16 %v2399, %v2394
    %v2454 = vpack.c.bf16 %v2409, %v2404
    %v2455 = vpack.c.bf16 %v2419, %v2414
    %v2456 = vpack.c.bf16 %v2429, %v2424
    %v2457 = vpack.c.bf16 %v2439, %v2434
    %v2458 = vpack.c.bf16 %v2046, %v2046
    %v2459 = vpack.c.bf16 %v2048, %v2048
    %v2461 = vsel %vm73, %v2442, 0
    %v2464 = vsel %vm73, %v2443, 0
    %v2467 = vsel %vm73, %v2444, 0
    %v2470 = vsel %vm73, %v2445, 0
    %v2473 = vsel %vm73, %v2446, 0
    %v2476 = vsel %vm73, %v2447, 0
    %v2479 = vsel %vm73, %v2448, 0
    %v2482 = vsel %vm73, %v2449, 0
    %v2485 = vsel %vm73, %v2450, 0
    %v2488 = vsel %vm73, %v2451, 0
    %v2491 = vsel %vm73, %v2452, 0
    %v2494 = vsel %vm73, %v2453, 0
    %v2497 = vsel %vm73, %v2454, 0
    %v2500 = vsel %vm73, %v2455, 0
    %v2503 = vsel %vm73, %v2456, 0
    %v2506 = vsel %vm73, %v2457, 0
    %v2509 = vsel %vm617, %v2458, 0
    %v2512 = vsel %vm617, %v2459, 0
    %2514 = vmatprep.subr.bf16.mxu0 0
    %2515 = vmatpush1.bf16.msra.mxu0 0
    %2516 = vmatprep.subr.bf16.mxu0 0
    %2517 = vmatpush1.bf16.msra.mxu0 0
    %2518 = vmatprep.subr.bf16.mxu0 0
    %2519 = vmatpush1.bf16.msra.mxu0 0
    %2520 = vmatprep.subr.bf16.mxu0 0
    %2521 = vmatpush1.bf16.msra.mxu0 0
    %2522 = vmatprep.subr.bf16.mxu0 0
    %2523 = vmatpush1.bf16.msra.mxu0 0
    %2524 = vmatprep.subr.bf16.mxu0 0
    %2525 = vmatpush1.bf16.msra.mxu0 0
    %2526 = vmatprep.subr.bf16.mxu0 0
    %2527 = vmatpush1.bf16.msra.mxu0 0
    %2528 = vmatprep.subr.bf16.mxu0 %v2512
    %2529 = vmatpush1.bf16.msra.mxu0 %v2509
    %2530 = vmatprep.subr.bf16.mxu0 0
    %2531 = vmatpush2.bf16.msra.mxu0 0
    %2532 = vmatprep.subr.bf16.mxu0 0
    %2533 = vmatpush2.bf16.msra.mxu0 0
    %2534 = vmatprep.subr.bf16.mxu0 0
    %2535 = vmatpush2.bf16.msra.mxu0 0
    %2536 = vmatprep.subr.bf16.mxu0 0
    %2537 = vmatpush2.bf16.msra.mxu0 0
    %2538 = vmatprep.subr.bf16.mxu0 0
    %2539 = vmatpush2.bf16.msra.mxu0 0
    %2540 = vmatprep.subr.bf16.mxu0 0
    %2541 = vmatpush2.bf16.msra.mxu0 0
    %2542 = vmatprep.subr.bf16.mxu0 0
    %2543 = vmatpush2.bf16.msra.mxu0 0
    %2544 = vmatprep.subr.bf16.mxu0 0
    %2545 = vmatpush2.bf16.msra.mxu0 0
    %2546 = vmatprep.mubr.bf16.mxu0 0
    %2547 = vmatmul.mubr.bf16.gmra.mxu0 %v2461
    %v2548 = vpop.f32.mrf.mxu0
    %v2549 = vadd.f32 0.0, %v2548
    %v2550 = vpop.f32.mrf.mxu0
    %v2551 = vadd.f32 0.0, %v2550
    %v2552 = vpop.f32.mrf.mxu0
    %v2553 = vadd.f32 0.0, %v2552
    %v2554 = vpop.f32.mrf.mxu0
    %v2555 = vadd.f32 0.0, %v2554
    %2556 = vmatprep.mubr.bf16.mxu0 0
    %2557 = vmatmul.mubr.bf16.gmra.mxu0 %v2464
    %v2558 = vpop.f32.mrf.mxu0
    %v2559 = vadd.f32 0.0, %v2558
    %v2560 = vpop.f32.mrf.mxu0
    %v2561 = vadd.f32 0.0, %v2560
    %v2562 = vpop.f32.mrf.mxu0
    %v2563 = vadd.f32 0.0, %v2562
    %v2564 = vpop.f32.mrf.mxu0
    %v2565 = vadd.f32 0.0, %v2564
    %2566 = vmatprep.mubr.bf16.mxu0 0
    %2567 = vmatmul.mubr.bf16.gmra.mxu0 %v2467
    %v2568 = vpop.f32.mrf.mxu0
    %v2569 = vadd.f32 0.0, %v2568
    %v2570 = vpop.f32.mrf.mxu0
    %v2571 = vadd.f32 0.0, %v2570
    %v2572 = vpop.f32.mrf.mxu0
    %v2573 = vadd.f32 0.0, %v2572
    %v2574 = vpop.f32.mrf.mxu0
    %v2575 = vadd.f32 0.0, %v2574
    %2576 = vmatprep.mubr.bf16.mxu0 0
    %2577 = vmatmul.mubr.bf16.gmra.mxu0 %v2470
    %v2578 = vpop.f32.mrf.mxu0
    %v2579 = vadd.f32 0.0, %v2578
    %v2580 = vpop.f32.mrf.mxu0
    %v2581 = vadd.f32 0.0, %v2580
    %v2582 = vpop.f32.mrf.mxu0
    %v2583 = vadd.f32 0.0, %v2582
    %v2584 = vpop.f32.mrf.mxu0
    %v2585 = vadd.f32 0.0, %v2584
    %2586 = vmatprep.mubr.bf16.mxu0 0
    %2587 = vmatmul.mubr.bf16.gmra.mxu0 %v2473
    %v2588 = vpop.f32.mrf.mxu0
    %v2589 = vadd.f32 0.0, %v2588
    %v2590 = vpop.f32.mrf.mxu0
    %v2591 = vadd.f32 0.0, %v2590
    %v2592 = vpop.f32.mrf.mxu0
    %v2593 = vadd.f32 0.0, %v2592
    %v2594 = vpop.f32.mrf.mxu0
    %v2595 = vadd.f32 0.0, %v2594
    %2596 = vmatprep.mubr.bf16.mxu0 0
    %2597 = vmatmul.mubr.bf16.gmra.mxu0 %v2476
    %v2598 = vpop.f32.mrf.mxu0
    %v2599 = vadd.f32 0.0, %v2598
    %v2600 = vpop.f32.mrf.mxu0
    %v2601 = vadd.f32 0.0, %v2600
    %v2602 = vpop.f32.mrf.mxu0
    %v2603 = vadd.f32 0.0, %v2602
    %v2604 = vpop.f32.mrf.mxu0
    %v2605 = vadd.f32 0.0, %v2604
    %2606 = vmatprep.mubr.bf16.mxu0 0
    %2607 = vmatmul.mubr.bf16.gmra.mxu0 %v2479
    %v2608 = vpop.f32.mrf.mxu0
    %v2609 = vadd.f32 0.0, %v2608
    %v2610 = vpop.f32.mrf.mxu0
    %v2611 = vadd.f32 0.0, %v2610
    %v2612 = vpop.f32.mrf.mxu0
    %v2613 = vadd.f32 0.0, %v2612
    %v2614 = vpop.f32.mrf.mxu0
    %v2615 = vadd.f32 0.0, %v2614
    %2616 = vmatprep.mubr.bf16.mxu0 0
    %2617 = vmatmul.mubr.bf16.gmra.mxu0 %v2482
    %v2618 = vpop.f32.mrf.mxu0
    %v2619 = vadd.f32 0.0, %v2618
    %v2620 = vpop.f32.mrf.mxu0
    %v2621 = vadd.f32 0.0, %v2620
    %v2622 = vpop.f32.mrf.mxu0
    %v2623 = vadd.f32 0.0, %v2622
    %v2624 = vpop.f32.mrf.mxu0
    %v2625 = vadd.f32 0.0, %v2624
    %2626 = vmatprep.mubr.bf16.mxu0 0
    %2627 = vmatmul.mubr.bf16.gmra.mxu0 %v2485
    %v2628 = vpop.f32.mrf.mxu0
    %v2629 = vadd.f32 0.0, %v2628
    %v2630 = vpop.f32.mrf.mxu0
    %v2631 = vadd.f32 0.0, %v2630
    %v2632 = vpop.f32.mrf.mxu0
    %v2633 = vadd.f32 0.0, %v2632
    %v2634 = vpop.f32.mrf.mxu0
    %v2635 = vadd.f32 0.0, %v2634
    %2636 = vmatprep.mubr.bf16.mxu0 0
    %2637 = vmatmul.mubr.bf16.gmra.mxu0 %v2488
    %v2638 = vpop.f32.mrf.mxu0
    %v2639 = vadd.f32 0.0, %v2638
    %v2640 = vpop.f32.mrf.mxu0
    %v2641 = vadd.f32 0.0, %v2640
    %v2642 = vpop.f32.mrf.mxu0
    %v2643 = vadd.f32 0.0, %v2642
    %v2644 = vpop.f32.mrf.mxu0
    %v2645 = vadd.f32 0.0, %v2644
    %2646 = vmatprep.mubr.bf16.mxu0 0
    %2647 = vmatmul.mubr.bf16.gmra.mxu0 %v2491
    %v2648 = vpop.f32.mrf.mxu0
    %v2649 = vadd.f32 0.0, %v2648
    %v2650 = vpop.f32.mrf.mxu0
    %v2651 = vadd.f32 0.0, %v2650
    %v2652 = vpop.f32.mrf.mxu0
    %v2653 = vadd.f32 0.0, %v2652
    %v2654 = vpop.f32.mrf.mxu0
    %v2655 = vadd.f32 0.0, %v2654
    %2656 = vmatprep.mubr.bf16.mxu0 0
    %2657 = vmatmul.mubr.bf16.gmra.mxu0 %v2494
    %v2658 = vpop.f32.mrf.mxu0
    %v2659 = vadd.f32 0.0, %v2658
    %v2660 = vpop.f32.mrf.mxu0
    %v2661 = vadd.f32 0.0, %v2660
    %v2662 = vpop.f32.mrf.mxu0
    %v2663 = vadd.f32 0.0, %v2662
    %v2664 = vpop.f32.mrf.mxu0
    %v2665 = vadd.f32 0.0, %v2664
    %2666 = vmatprep.mubr.bf16.mxu0 0
    %2667 = vmatmul.mubr.bf16.gmra.mxu0 %v2497
    %v2668 = vpop.f32.mrf.mxu0
    %v2669 = vadd.f32 0.0, %v2668
    %v2670 = vpop.f32.mrf.mxu0
    %v2671 = vadd.f32 0.0, %v2670
    %v2672 = vpop.f32.mrf.mxu0
    %v2673 = vadd.f32 0.0, %v2672
    %v2674 = vpop.f32.mrf.mxu0
    %v2675 = vadd.f32 0.0, %v2674
    %2676 = vmatprep.mubr.bf16.mxu0 0
    %2677 = vmatmul.mubr.bf16.gmra.mxu0 %v2500
    %v2678 = vpop.f32.mrf.mxu0
    %v2679 = vadd.f32 0.0, %v2678
    %v2680 = vpop.f32.mrf.mxu0
    %v2681 = vadd.f32 0.0, %v2680
    %v2682 = vpop.f32.mrf.mxu0
    %v2683 = vadd.f32 0.0, %v2682
    %v2684 = vpop.f32.mrf.mxu0
    %v2685 = vadd.f32 0.0, %v2684
    %2686 = vmatprep.mubr.bf16.mxu0 0
    %2687 = vmatmul.mubr.bf16.gmra.mxu0 %v2503
    %v2688 = vpop.f32.mrf.mxu0
    %v2689 = vadd.f32 0.0, %v2688
    %v2690 = vpop.f32.mrf.mxu0
    %v2691 = vadd.f32 0.0, %v2690
    %v2692 = vpop.f32.mrf.mxu0
    %v2693 = vadd.f32 0.0, %v2692
    %v2694 = vpop.f32.mrf.mxu0
    %v2695 = vadd.f32 0.0, %v2694
    %2696 = vmatprep.mubr.bf16.mxu0 0
    %2697 = vmatmul.mubr.bf16.gmra.mxu0 %v2506
    %v2698 = vpop.f32.mrf.mxu0
    %v2699 = vadd.f32 0.0, %v2698
    %v2700 = vpop.f32.mrf.mxu0
    %v2701 = vadd.f32 0.0, %v2700
    %v2702 = vpop.f32.mrf.mxu0
    %v2703 = vadd.f32 0.0, %v2702
    %v2704 = vpop.f32.mrf.mxu0
    %v2705 = vadd.f32 0.0, %v2704
    %2706 = vdwg.mxu0
    %v2707 = vmax.f32 %v2549, %v2551
    %2708 = vmax.xlane.f32.xlu0 %v2707
    %v2709 = vpop.xlane.xlu0 %2708
    %v2710 = vmax.f32 %v2553, %v2555
    %2711 = vmax.xlane.f32.xlu0 %v2710
    %v2712 = vpop.xlane.xlu0 %2711
    %v2713 = vmax.f32 %v2559, %v2561
    %2714 = vmax.xlane.f32.xlu0 %v2713
    %v2715 = vpop.xlane.xlu0 %2714
    %v2716 = vmax.f32 %v2563, %v2565
    %2717 = vmax.xlane.f32.xlu0 %v2716
    %v2718 = vpop.xlane.xlu0 %2717
    %v2719 = vmax.f32 %v2569, %v2571
    %2720 = vmax.xlane.f32.xlu0 %v2719
    %v2721 = vpop.xlane.xlu0 %2720
    %v2722 = vmax.f32 %v2573, %v2575
    %2723 = vmax.xlane.f32.xlu0 %v2722
    %v2724 = vpop.xlane.xlu0 %2723
    %v2725 = vmax.f32 %v2579, %v2581
    %2726 = vmax.xlane.f32.xlu0 %v2725
    %v2727 = vpop.xlane.xlu0 %2726
    %v2728 = vmax.f32 %v2583, %v2585
    %2729 = vmax.xlane.f32.xlu0 %v2728
    %v2730 = vpop.xlane.xlu0 %2729
    %v2731 = vmax.f32 %v2589, %v2591
    %2732 = vmax.xlane.f32.xlu0 %v2731
    %v2733 = vpop.xlane.xlu0 %2732
    %v2734 = vmax.f32 %v2593, %v2595
    %2735 = vmax.xlane.f32.xlu0 %v2734
    %v2736 = vpop.xlane.xlu0 %2735
    %v2737 = vmax.f32 %v2599, %v2601
    %2738 = vmax.xlane.f32.xlu0 %v2737
    %v2739 = vpop.xlane.xlu0 %2738
    %v2740 = vmax.f32 %v2603, %v2605
    %2741 = vmax.xlane.f32.xlu0 %v2740
    %v2742 = vpop.xlane.xlu0 %2741
    %v2743 = vmax.f32 %v2609, %v2611
    %2744 = vmax.xlane.f32.xlu0 %v2743
    %v2745 = vpop.xlane.xlu0 %2744
    %v2746 = vmax.f32 %v2613, %v2615
    %2747 = vmax.xlane.f32.xlu0 %v2746
    %v2748 = vpop.xlane.xlu0 %2747
    %v2749 = vmax.f32 %v2619, %v2621
    %2750 = vmax.xlane.f32.xlu0 %v2749
    %v2751 = vpop.xlane.xlu0 %2750
    %v2752 = vmax.f32 %v2623, %v2625
    %2753 = vmax.xlane.f32.xlu0 %v2752
    %v2754 = vpop.xlane.xlu0 %2753
    %v2755 = vmax.f32 %v2629, %v2631
    %2756 = vmax.xlane.f32.xlu0 %v2755
    %v2757 = vpop.xlane.xlu0 %2756
    %v2758 = vmax.f32 %v2633, %v2635
    %2759 = vmax.xlane.f32.xlu0 %v2758
    %v2760 = vpop.xlane.xlu0 %2759
    %v2761 = vmax.f32 %v2639, %v2641
    %2762 = vmax.xlane.f32.xlu0 %v2761
    %v2763 = vpop.xlane.xlu0 %2762
    %v2764 = vmax.f32 %v2643, %v2645
    %2765 = vmax.xlane.f32.xlu0 %v2764
    %v2766 = vpop.xlane.xlu0 %2765
    %v2767 = vmax.f32 %v2649, %v2651
    %2768 = vmax.xlane.f32.xlu0 %v2767
    %v2769 = vpop.xlane.xlu0 %2768
    %v2770 = vmax.f32 %v2653, %v2655
    %2771 = vmax.xlane.f32.xlu0 %v2770
    %v2772 = vpop.xlane.xlu0 %2771
    %v2773 = vmax.f32 %v2659, %v2661
    %2774 = vmax.xlane.f32.xlu0 %v2773
    %v2775 = vpop.xlane.xlu0 %2774
    %v2776 = vmax.f32 %v2663, %v2665
    %2777 = vmax.xlane.f32.xlu0 %v2776
    %v2778 = vpop.xlane.xlu0 %2777
    %v2779 = vmax.f32 %v2669, %v2671
    %2780 = vmax.xlane.f32.xlu0 %v2779
    %v2781 = vpop.xlane.xlu0 %2780
    %v2782 = vmax.f32 %v2673, %v2675
    %2783 = vmax.xlane.f32.xlu0 %v2782
    %v2784 = vpop.xlane.xlu0 %2783
    %v2785 = vmax.f32 %v2679, %v2681
    %2786 = vmax.xlane.f32.xlu0 %v2785
    %v2787 = vpop.xlane.xlu0 %2786
    %v2788 = vmax.f32 %v2683, %v2685
    %2789 = vmax.xlane.f32.xlu0 %v2788
    %v2790 = vpop.xlane.xlu0 %2789
    %v2791 = vmax.f32 %v2689, %v2691
    %2792 = vmax.xlane.f32.xlu0 %v2791
    %v2793 = vpop.xlane.xlu0 %2792
    %v2794 = vmax.f32 %v2693, %v2695
    %2795 = vmax.xlane.f32.xlu0 %v2794
    %v2796 = vpop.xlane.xlu0 %2795
    %v2797 = vmax.f32 %v2699, %v2701
    %2798 = vmax.xlane.f32.xlu0 %v2797
    %v2799 = vpop.xlane.xlu0 %2798
    %v2800 = vmax.f32 %v2703, %v2705
    %2801 = vmax.xlane.f32.xlu0 %v2800
    %v2802 = vpop.xlane.xlu0 %2801
    %v2803 = vsub.f32 %v2549, %v2709
    %v2804 = vsub.f32 %v2551, %v2709
    %v2805 = vsub.f32 %v2553, %v2712
    %v2806 = vsub.f32 %v2555, %v2712
    %v2807 = vsub.f32 %v2559, %v2715
    %v2808 = vsub.f32 %v2561, %v2715
    %v2809 = vsub.f32 %v2563, %v2718
    %v2810 = vsub.f32 %v2565, %v2718
    %v2811 = vsub.f32 %v2569, %v2721
    %v2812 = vsub.f32 %v2571, %v2721
    %v2813 = vsub.f32 %v2573, %v2724
    %v2814 = vsub.f32 %v2575, %v2724
    %v2815 = vsub.f32 %v2579, %v2727
    %v2816 = vsub.f32 %v2581, %v2727
    %v2817 = vsub.f32 %v2583, %v2730
    %v2818 = vsub.f32 %v2585, %v2730
    %v2819 = vsub.f32 %v2589, %v2733
    %v2820 = vsub.f32 %v2591, %v2733
    %v2821 = vsub.f32 %v2593, %v2736
    %v2822 = vsub.f32 %v2595, %v2736
    %v2823 = vsub.f32 %v2599, %v2739
    %v2824 = vsub.f32 %v2601, %v2739
    %v2825 = vsub.f32 %v2603, %v2742
    %v2826 = vsub.f32 %v2605, %v2742
    %v2827 = vsub.f32 %v2609, %v2745
    %v2828 = vsub.f32 %v2611, %v2745
    %v2829 = vsub.f32 %v2613, %v2748
    %v2830 = vsub.f32 %v2615, %v2748
    %v2831 = vsub.f32 %v2619, %v2751
    %v2832 = vsub.f32 %v2621, %v2751
    %v2833 = vsub.f32 %v2623, %v2754
    %v2834 = vsub.f32 %v2625, %v2754
    %v2835 = vsub.f32 %v2629, %v2757
    %v2836 = vsub.f32 %v2631, %v2757
    %v2837 = vsub.f32 %v2633, %v2760
    %v2838 = vsub.f32 %v2635, %v2760
    %v2839 = vsub.f32 %v2639, %v2763
    %v2840 = vsub.f32 %v2641, %v2763
    %v2841 = vsub.f32 %v2643, %v2766
    %v2842 = vsub.f32 %v2645, %v2766
    %v2843 = vsub.f32 %v2649, %v2769
    %v2844 = vsub.f32 %v2651, %v2769
    %v2845 = vsub.f32 %v2653, %v2772
    %v2846 = vsub.f32 %v2655, %v2772
    %v2847 = vsub.f32 %v2659, %v2775
    %v2848 = vsub.f32 %v2661, %v2775
    %v2849 = vsub.f32 %v2663, %v2778
    %v2850 = vsub.f32 %v2665, %v2778
    %v2851 = vsub.f32 %v2669, %v2781
    %v2852 = vsub.f32 %v2671, %v2781
    %v2853 = vsub.f32 %v2673, %v2784
    %v2854 = vsub.f32 %v2675, %v2784
    %v2855 = vsub.f32 %v2679, %v2787
    %v2856 = vsub.f32 %v2681, %v2787
    %v2857 = vsub.f32 %v2683, %v2790
    %v2858 = vsub.f32 %v2685, %v2790
    %v2859 = vsub.f32 %v2689, %v2793
    %v2860 = vsub.f32 %v2691, %v2793
    %v2861 = vsub.f32 %v2693, %v2796
    %v2862 = vsub.f32 %v2695, %v2796
    %v2863 = vsub.f32 %v2699, %v2799
    %v2864 = vsub.f32 %v2701, %v2799
    %v2865 = vsub.f32 %v2703, %v2802
    %v2866 = vsub.f32 %v2705, %v2802
    %v2867 = vmul.f32 %v2803, 1.442695
    %v2868 = vpow.pop %v2867
    %v2869 = vmul.f32 %v2804, 1.442695
    %v2870 = vpow.pop %v2869
    %v2871 = vmul.f32 %v2805, 1.442695
    %v2872 = vpow.pop %v2871
    %v2873 = vmul.f32 %v2806, 1.442695
    %v2874 = vpow.pop %v2873
    %v2875 = vmul.f32 %v2807, 1.442695
    %v2876 = vpow.pop %v2875
    %v2877 = vmul.f32 %v2808, 1.442695
    %v2878 = vpow.pop %v2877
    %v2879 = vmul.f32 %v2809, 1.442695
    %v2880 = vpow.pop %v2879
    %v2881 = vmul.f32 %v2810, 1.442695
    %v2882 = vpow.pop %v2881
    %v2883 = vmul.f32 %v2811, 1.442695
    %v2884 = vpow.pop %v2883
    %v2885 = vmul.f32 %v2812, 1.442695
    %v2886 = vpow.pop %v2885
    %v2887 = vmul.f32 %v2813, 1.442695
    %v2888 = vpow.pop %v2887
    %v2889 = vmul.f32 %v2814, 1.442695
    %v2890 = vpow.pop %v2889
    %v2891 = vmul.f32 %v2815, 1.442695
    %v2892 = vpow.pop %v2891
    %v2893 = vmul.f32 %v2816, 1.442695
    %v2894 = vpow.pop %v2893
    %v2895 = vmul.f32 %v2817, 1.442695
    %v2896 = vpow.pop %v2895
    %v2897 = vmul.f32 %v2818, 1.442695
    %v2898 = vpow.pop %v2897
    %v2899 = vmul.f32 %v2819, 1.442695
    %v2900 = vpow.pop %v2899
    %v2901 = vmul.f32 %v2820, 1.442695
    %v2902 = vpow.pop %v2901
    %v2903 = vmul.f32 %v2821, 1.442695
    %v2904 = vpow.pop %v2903
    %v2905 = vmul.f32 %v2822, 1.442695
    %v2906 = vpow.pop %v2905
    %v2907 = vmul.f32 %v2823, 1.442695
    %v2908 = vpow.pop %v2907
    %v2909 = vmul.f32 %v2824, 1.442695
    %v2910 = vpow.pop %v2909
    %v2911 = vmul.f32 %v2825, 1.442695
    %v2912 = vpow.pop %v2911
    %v2913 = vmul.f32 %v2826, 1.442695
    %v2914 = vpow.pop %v2913
    %v2915 = vmul.f32 %v2827, 1.442695
    %v2916 = vpow.pop %v2915
    %v2917 = vmul.f32 %v2828, 1.442695
    %v2918 = vpow.pop %v2917
    %v2919 = vmul.f32 %v2829, 1.442695
    %v2920 = vpow.pop %v2919
    %v2921 = vmul.f32 %v2830, 1.442695
    %v2922 = vpow.pop %v2921
    %v2923 = vmul.f32 %v2831, 1.442695
    %v2924 = vpow.pop %v2923
    %v2925 = vmul.f32 %v2832, 1.442695
    %v2926 = vpow.pop %v2925
    %v2927 = vmul.f32 %v2833, 1.442695
    %v2928 = vpow.pop %v2927
    %v2929 = vmul.f32 %v2834, 1.442695
    %v2930 = vpow.pop %v2929
    %v2931 = vmul.f32 %v2835, 1.442695
    %v2932 = vpow.pop %v2931
    %v2933 = vmul.f32 %v2836, 1.442695
    %v2934 = vpow.pop %v2933
    %v2935 = vmul.f32 %v2837, 1.442695
    %v2936 = vpow.pop %v2935
    %v2937 = vmul.f32 %v2838, 1.442695
    %v2938 = vpow.pop %v2937
    %v2939 = vmul.f32 %v2839, 1.442695
    %v2940 = vpow.pop %v2939
    %v2941 = vmul.f32 %v2840, 1.442695
    %v2942 = vpow.pop %v2941
    %v2943 = vmul.f32 %v2841, 1.442695
    %v2944 = vpow.pop %v2943
    %v2945 = vmul.f32 %v2842, 1.442695
    %v2946 = vpow.pop %v2945
    %v2947 = vmul.f32 %v2843, 1.442695
    %v2948 = vpow.pop %v2947
    %v2949 = vmul.f32 %v2844, 1.442695
    %v2950 = vpow.pop %v2949
    %v2951 = vmul.f32 %v2845, 1.442695
    %v2952 = vpow.pop %v2951
    %v2953 = vmul.f32 %v2846, 1.442695
    %v2954 = vpow.pop %v2953
    %v2955 = vmul.f32 %v2847, 1.442695
    %v2956 = vpow.pop %v2955
    %v2957 = vmul.f32 %v2848, 1.442695
    %v2958 = vpow.pop %v2957
    %v2959 = vmul.f32 %v2849, 1.442695
    %v2960 = vpow.pop %v2959
    %v2961 = vmul.f32 %v2850, 1.442695
    %v2962 = vpow.pop %v2961
    %v2963 = vmul.f32 %v2851, 1.442695
    %v2964 = vpow.pop %v2963
    %v2965 = vmul.f32 %v2852, 1.442695
    %v2966 = vpow.pop %v2965
    %v2967 = vmul.f32 %v2853, 1.442695
    %v2968 = vpow.pop %v2967
    %v2969 = vmul.f32 %v2854, 1.442695
    %v2970 = vpow.pop %v2969
    %v2971 = vmul.f32 %v2855, 1.442695
    %v2972 = vpow.pop %v2971
    %v2973 = vmul.f32 %v2856, 1.442695
    %v2974 = vpow.pop %v2973
    %v2975 = vmul.f32 %v2857, 1.442695
    %v2976 = vpow.pop %v2975
    %v2977 = vmul.f32 %v2858, 1.442695
    %v2978 = vpow.pop %v2977
    %v2979 = vmul.f32 %v2859, 1.442695
    %v2980 = vpow.pop %v2979
    %v2981 = vmul.f32 %v2860, 1.442695
    %v2982 = vpow.pop %v2981
    %v2983 = vmul.f32 %v2861, 1.442695
    %v2984 = vpow.pop %v2983
    %v2985 = vmul.f32 %v2862, 1.442695
    %v2986 = vpow.pop %v2985
    %v2987 = vmul.f32 %v2863, 1.442695
    %v2988 = vpow.pop %v2987
    %v2989 = vmul.f32 %v2864, 1.442695
    %v2990 = vpow.pop %v2989
    %v2991 = vmul.f32 %v2865, 1.442695
    %v2992 = vpow.pop %v2991
    %v2993 = vmul.f32 %v2866, 1.442695
    %v2994 = vpow.pop %v2993
    %v2995 = vpack.c.bf16 %v2872, %v2868
    %v2996 = vpack.c.bf16 %v2874, %v2870
    %v2997 = vpack.c.bf16 %v2880, %v2876
    %v2998 = vpack.c.bf16 %v2882, %v2878
    %v2999 = vpack.c.bf16 %v2888, %v2884
    %v3000 = vpack.c.bf16 %v2890, %v2886
    %v3001 = vpack.c.bf16 %v2896, %v2892
    %v3002 = vpack.c.bf16 %v2898, %v2894
    %v3003 = vpack.c.bf16 %v2904, %v2900
    %v3004 = vpack.c.bf16 %v2906, %v2902
    %v3005 = vpack.c.bf16 %v2912, %v2908
    %v3006 = vpack.c.bf16 %v2914, %v2910
    %v3007 = vpack.c.bf16 %v2920, %v2916
    %v3008 = vpack.c.bf16 %v2922, %v2918
    %v3009 = vpack.c.bf16 %v2928, %v2924
    %v3010 = vpack.c.bf16 %v2930, %v2926
    %v3011 = vpack.c.bf16 %v2936, %v2932
    %v3012 = vpack.c.bf16 %v2938, %v2934
    %v3013 = vpack.c.bf16 %v2944, %v2940
    %v3014 = vpack.c.bf16 %v2946, %v2942
    %v3015 = vpack.c.bf16 %v2952, %v2948
    %v3016 = vpack.c.bf16 %v2954, %v2950
    %v3017 = vpack.c.bf16 %v2960, %v2956
    %v3018 = vpack.c.bf16 %v2962, %v2958
    %v3019 = vpack.c.bf16 %v2968, %v2964
    %v3020 = vpack.c.bf16 %v2970, %v2966
    %v3021 = vpack.c.bf16 %v2976, %v2972
    %v3022 = vpack.c.bf16 %v2978, %v2974
    %v3023 = vpack.c.bf16 %v2984, %v2980
    %v3024 = vpack.c.bf16 %v2986, %v2982
    %v3025 = vpack.c.bf16 %v2992, %v2988
    %v3026 = vpack.c.bf16 %v2994, %v2990
    %v3027 = vpack.c.bf16 %v2052, %v2052
    %v3028 = vpack.c.bf16 %v2054, %v2054
    %3029 = vmatprep.subr.bf16.mxu0 %v3010
    %3030 = vmatpush1.bf16.xpose.msra.mxu0 %v3009
    %3031 = vmatprep.subr.bf16.mxu0 %v3008
    %3032 = vmatpush1.bf16.xpose.msra.mxu0 %v3007
    %3033 = vmatprep.subr.bf16.mxu0 %v3006
    %3034 = vmatpush1.bf16.xpose.msra.mxu0 %v3005
    %3035 = vmatprep.subr.bf16.mxu0 %v3004
    %3036 = vmatpush1.bf16.xpose.msra.mxu0 %v3003
    %3037 = vmatprep.subr.bf16.mxu0 %v3002
    %3038 = vmatpush1.bf16.xpose.msra.mxu0 %v3001
    %3039 = vmatprep.subr.bf16.mxu0 %v3000
    %3040 = vmatpush1.bf16.xpose.msra.mxu0 %v2999
    %3041 = vmatprep.subr.bf16.mxu0 %v2998
    %3042 = vmatpush1.bf16.xpose.msra.mxu0 %v2997
    %3043 = vmatprep.subr.bf16.mxu0 %v2996
    %3044 = vmatpush1.bf16.xpose.msra.mxu0 %v2995
    %3045 = vmatprep.subr.bf16.mxu0 %v3026
    %3046 = vmatpush2.bf16.xpose.msra.mxu0 %v3025
    %3047 = vmatprep.subr.bf16.mxu0 %v3024
    %3048 = vmatpush2.bf16.xpose.msra.mxu0 %v3023
    %3049 = vmatprep.subr.bf16.mxu0 %v3022
    %3050 = vmatpush2.bf16.xpose.msra.mxu0 %v3021
    %3051 = vmatprep.subr.bf16.mxu0 %v3020
    %3052 = vmatpush2.bf16.xpose.msra.mxu0 %v3019
    %3053 = vmatprep.subr.bf16.mxu0 %v3018
    %3054 = vmatpush2.bf16.xpose.msra.mxu0 %v3017
    %3055 = vmatprep.subr.bf16.mxu0 %v3016
    %3056 = vmatpush2.bf16.xpose.msra.mxu0 %v3015
    %3057 = vmatprep.subr.bf16.mxu0 %v3014
    %3058 = vmatpush2.bf16.xpose.msra.mxu0 %v3013
    %3059 = vmatprep.subr.bf16.mxu0 %v3012
    %3060 = vmatpush2.bf16.xpose.msra.mxu0 %v3011
    %3061 = vmatprep.mubr.bf16.mxu0 %v3028
    %3062 = vmatmul.mubr.bf16.gmra.mxu0 %v3027
    %v3063 = vpop.f32.mrf.mxu0
    %v3064 = vadd.f32 0.0, %v3063
    %v3065 = vpop.f32.mrf.mxu0
    %v3066 = vadd.f32 0.0, %v3065
    %v3067 = vpop.f32.mrf.mxu0
    %v3068 = vpop.f32.mrf.mxu0
    %3069 = vdwg.mxu0
    %3070 = vmatprep.subr.bf16.mxu0 %v3010
    %3071 = vmatpush1.bf16.xpose.msra.mxu0 %v3009
    %3072 = vmatprep.subr.bf16.mxu0 %v3008
    %3073 = vmatpush1.bf16.xpose.msra.mxu0 %v3007
    %3074 = vmatprep.subr.bf16.mxu0 %v3006
    %3075 = vmatpush1.bf16.xpose.msra.mxu0 %v3005
    %3076 = vmatprep.subr.bf16.mxu0 %v3004
    %3077 = vmatpush1.bf16.xpose.msra.mxu0 %v3003
    %3078 = vmatprep.subr.bf16.mxu0 %v3002
    %3079 = vmatpush1.bf16.xpose.msra.mxu0 %v3001
    %3080 = vmatprep.subr.bf16.mxu0 %v3000
    %3081 = vmatpush1.bf16.xpose.msra.mxu0 %v2999
    %3082 = vmatprep.subr.bf16.mxu0 %v2998
    %3083 = vmatpush1.bf16.xpose.msra.mxu0 %v2997
    %3084 = vmatprep.subr.bf16.mxu0 %v2996
    %3085 = vmatpush1.bf16.xpose.msra.mxu0 %v2995
    %3086 = vmatprep.subr.bf16.mxu0 %v3026
    %3087 = vmatpush2.bf16.xpose.msra.mxu0 %v3025
    %3088 = vmatprep.subr.bf16.mxu0 %v3024
    %3089 = vmatpush2.bf16.xpose.msra.mxu0 %v3023
    %3090 = vmatprep.subr.bf16.mxu0 %v3022
    %3091 = vmatpush2.bf16.xpose.msra.mxu0 %v3021
    %3092 = vmatprep.subr.bf16.mxu0 %v3020
    %3093 = vmatpush2.bf16.xpose.msra.mxu0 %v3019
    %3094 = vmatprep.subr.bf16.mxu0 %v3018
    %3095 = vmatpush2.bf16.xpose.msra.mxu0 %v3017
    %3096 = vmatprep.subr.bf16.mxu0 %v3016
    %3097 = vmatpush2.bf16.xpose.msra.mxu0 %v3015
    %3098 = vmatprep.subr.bf16.mxu0 %v3014
    %3099 = vmatpush2.bf16.xpose.msra.mxu0 %v3013
    %3100 = vmatprep.subr.bf16.mxu0 %v3012
    %3101 = vmatpush2.bf16.xpose.msra.mxu0 %v3011
    %3102 = vmatprep.mubr.bf16.mxu0 1065369472
    %3103 = vmatmul.mubr.bf16.gmra.mxu0 1065369472
    %v3104 = vpop.f32.mrf.mxu0
    %v3105 = vadd.f32 0.0, %v3104
    %v3106 = vpop.f32.mrf.mxu0
    %v3107 = vadd.f32 0.0, %v3106
    %v3108 = vpop.f32.mrf.mxu0
    %v3109 = vpop.f32.mrf.mxu0
    %3110 = vdwg.mxu0
    %v3111 = vrcp.pop %v3105
    %v3112 = vrcp.pop %v3107
    %v3113 = vlaneseq
    %v3114 = vshrl.u32 %v3113, 7
    %v3115 = vsub.s32 0, %v3114
    %v3116 = vrot.slane %v3111, %v3115
    %v3117 = vlaneseq
    %v3118 = vshrl.u32 %v3117, 7
    %v3119 = vsub.s32 0, %v3118
    %v3120 = vrot.slane %v3112, %v3119
    %v3121 = vmul.f32 %v3064, %v3116
    %v3122 = vmul.f32 %v3066, %v3120
    %v3123 = vadd.f32 %v3121, %v1972
    %v3124 = vadd.f32 %v3122, %v1974
    %v3127 = vcombine.low %v3123, %v3124
    %s3129 = scalar_lea.vmem [#allocation2], 8
    %3130 = vst [vmem:[%s3129] sm:$0x33] %v3127
    %3147 = vrot.lane.b32.xlu0 %v2442, 124
    %v3148 = vpop.permute.xlu0 %3147
    %3149 = vrot.lane.b32.xlu0 %v2443, 124
    %v3150 = vpop.permute.xlu0 %3149
    %3151 = vrot.lane.b32.xlu0 %v2444, 124
    %v3152 = vpop.permute.xlu0 %3151
    %3153 = vrot.lane.b32.xlu0 %v2445, 124
    %v3154 = vpop.permute.xlu0 %3153
    %3155 = vrot.lane.b32.xlu0 %v2446, 124
    %v3156 = vpop.permute.xlu0 %3155
    %3157 = vrot.lane.b32.xlu0 %v2447, 124
    %v3158 = vpop.permute.xlu0 %3157
    %3159 = vrot.lane.b32.xlu0 %v2448, 124
    %v3160 = vpop.permute.xlu0 %3159
    %3161 = vrot.lane.b32.xlu0 %v2449, 124
    %v3162 = vpop.permute.xlu0 %3161
    %3163 = vrot.lane.b32.xlu0 %v2450, 124
    %v3164 = vpop.permute.xlu0 %3163
    %3165 = vrot.lane.b32.xlu0 %v2451, 124
    %v3166 = vpop.permute.xlu0 %3165
    %3167 = vrot.lane.b32.xlu0 %v2452, 124
    %v3168 = vpop.permute.xlu0 %3167
    %3169 = vrot.lane.b32.xlu0 %v2453, 124
    %v3170 = vpop.permute.xlu0 %3169
    %3171 = vrot.lane.b32.xlu0 %v2454, 124
    %v3172 = vpop.permute.xlu0 %3171
    %3173 = vrot.lane.b32.xlu0 %v2455, 124
    %v3174 = vpop.permute.xlu0 %3173
    %3175 = vrot.lane.b32.xlu0 %v2456, 124
    %v3176 = vpop.permute.xlu0 %3175
    %3177 = vrot.lane.b32.xlu0 %v2457, 124
    %v3178 = vpop.permute.xlu0 %3177
    %v3181 = vrot.slane %v2458, 2
    %v3182 = vrot.slane %v2459, 2
    %v3184 = vsel %vm73, %v3148, 0
    %v3187 = vsel %vm73, %v3150, 0
    %v3190 = vsel %vm73, %v3152, 0
    %v3193 = vsel %vm73, %v3154, 0
    %v3196 = vsel %vm73, %v3156, 0
    %v3199 = vsel %vm73, %v3158, 0
    %v3202 = vsel %vm73, %v3160, 0
    %v3205 = vsel %vm73, %v3162, 0
    %v3208 = vsel %vm73, %v3164, 0
    %v3211 = vsel %vm73, %v3166, 0
    %v3214 = vsel %vm73, %v3168, 0
    %v3217 = vsel %vm73, %v3170, 0
    %v3220 = vsel %vm73, %v3172, 0
    %v3223 = vsel %vm73, %v3174, 0
    %v3226 = vsel %vm73, %v3176, 0
    %v3229 = vsel %vm73, %v3178, 0
    %v3232 = vsel %vm617, %v3181, 0
    %v3235 = vsel %vm617, %v3182, 0
    %3237 = vmatprep.subr.bf16.mxu0 0
    %3238 = vmatpush1.bf16.msra.mxu0 0
    %3239 = vmatprep.subr.bf16.mxu0 0
    %3240 = vmatpush1.bf16.msra.mxu0 0
    %3241 = vmatprep.subr.bf16.mxu0 0
    %3242 = vmatpush1.bf16.msra.mxu0 0
    %3243 = vmatprep.subr.bf16.mxu0 0
    %3244 = vmatpush1.bf16.msra.mxu0 0
    %3245 = vmatprep.subr.bf16.mxu0 0
    %3246 = vmatpush1.bf16.msra.mxu0 0
    %3247 = vmatprep.subr.bf16.mxu0 0
    %3248 = vmatpush1.bf16.msra.mxu0 0
    %3249 = vmatprep.subr.bf16.mxu0 0
    %3250 = vmatpush1.bf16.msra.mxu0 0
    %3251 = vmatprep.subr.bf16.mxu0 %v3235
    %3252 = vmatpush1.bf16.msra.mxu0 %v3232
    %3253 = vmatprep.subr.bf16.mxu0 0
    %3254 = vmatpush2.bf16.msra.mxu0 0
    %3255 = vmatprep.subr.bf16.mxu0 0
    %3256 = vmatpush2.bf16.msra.mxu0 0
    %3257 = vmatprep.subr.bf16.mxu0 0
    %3258 = vmatpush2.bf16.msra.mxu0 0
    %3259 = vmatprep.subr.bf16.mxu0 0
    %3260 = vmatpush2.bf16.msra.mxu0 0
    %3261 = vmatprep.subr.bf16.mxu0 0
    %3262 = vmatpush2.bf16.msra.mxu0 0
    %3263 = vmatprep.subr.bf16.mxu0 0
    %3264 = vmatpush2.bf16.msra.mxu0 0
    %3265 = vmatprep.subr.bf16.mxu0 0
    %3266 = vmatpush2.bf16.msra.mxu0 0
    %3267 = vmatprep.subr.bf16.mxu0 0
    %3268 = vmatpush2.bf16.msra.mxu0 0
    %3269 = vmatprep.mubr.bf16.mxu0 0
    %3270 = vmatmul.mubr.bf16.gmra.mxu0 %v3184
    %v3271 = vpop.f32.mrf.mxu0
    %v3272 = vadd.f32 0.0, %v3271
    %v3273 = vpop.f32.mrf.mxu0
    %v3274 = vadd.f32 0.0, %v3273
    %v3275 = vpop.f32.mrf.mxu0
    %v3276 = vadd.f32 0.0, %v3275
    %v3277 = vpop.f32.mrf.mxu0
    %v3278 = vadd.f32 0.0, %v3277
    %3279 = vmatprep.mubr.bf16.mxu0 0
    %3280 = vmatmul.mubr.bf16.gmra.mxu0 %v3187
    %v3281 = vpop.f32.mrf.mxu0
    %v3282 = vadd.f32 0.0, %v3281
    %v3283 = vpop.f32.mrf.mxu0
    %v3284 = vadd.f32 0.0, %v3283
    %v3285 = vpop.f32.mrf.mxu0
    %v3286 = vadd.f32 0.0, %v3285
    %v3287 = vpop.f32.mrf.mxu0
    %v3288 = vadd.f32 0.0, %v3287
    %3289 = vmatprep.mubr.bf16.mxu0 0
    %3290 = vmatmul.mubr.bf16.gmra.mxu0 %v3190
    %v3291 = vpop.f32.mrf.mxu0
    %v3292 = vadd.f32 0.0, %v3291
    %v3293 = vpop.f32.mrf.mxu0
    %v3294 = vadd.f32 0.0, %v3293
    %v3295 = vpop.f32.mrf.mxu0
    %v3296 = vadd.f32 0.0, %v3295
    %v3297 = vpop.f32.mrf.mxu0
    %v3298 = vadd.f32 0.0, %v3297
    %3299 = vmatprep.mubr.bf16.mxu0 0
    %3300 = vmatmul.mubr.bf16.gmra.mxu0 %v3193
    %v3301 = vpop.f32.mrf.mxu0
    %v3302 = vadd.f32 0.0, %v3301
    %v3303 = vpop.f32.mrf.mxu0
    %v3304 = vadd.f32 0.0, %v3303
    %v3305 = vpop.f32.mrf.mxu0
    %v3306 = vadd.f32 0.0, %v3305
    %v3307 = vpop.f32.mrf.mxu0
    %v3308 = vadd.f32 0.0, %v3307
    %3309 = vmatprep.mubr.bf16.mxu0 0
    %3310 = vmatmul.mubr.bf16.gmra.mxu0 %v3196
    %v3311 = vpop.f32.mrf.mxu0
    %v3312 = vadd.f32 0.0, %v3311
    %v3313 = vpop.f32.mrf.mxu0
    %v3314 = vadd.f32 0.0, %v3313
    %v3315 = vpop.f32.mrf.mxu0
    %v3316 = vadd.f32 0.0, %v3315
    %v3317 = vpop.f32.mrf.mxu0
    %v3318 = vadd.f32 0.0, %v3317
    %3319 = vmatprep.mubr.bf16.mxu0 0
    %3320 = vmatmul.mubr.bf16.gmra.mxu0 %v3199
    %v3321 = vpop.f32.mrf.mxu0
    %v3322 = vadd.f32 0.0, %v3321
    %v3323 = vpop.f32.mrf.mxu0
    %v3324 = vadd.f32 0.0, %v3323
    %v3325 = vpop.f32.mrf.mxu0
    %v3326 = vadd.f32 0.0, %v3325
    %v3327 = vpop.f32.mrf.mxu0
    %v3328 = vadd.f32 0.0, %v3327
    %3329 = vmatprep.mubr.bf16.mxu0 0
    %3330 = vmatmul.mubr.bf16.gmra.mxu0 %v3202
    %v3331 = vpop.f32.mrf.mxu0
    %v3332 = vadd.f32 0.0, %v3331
    %v3333 = vpop.f32.mrf.mxu0
    %v3334 = vadd.f32 0.0, %v3333
    %v3335 = vpop.f32.mrf.mxu0
    %v3336 = vadd.f32 0.0, %v3335
    %v3337 = vpop.f32.mrf.mxu0
    %v3338 = vadd.f32 0.0, %v3337
    %3339 = vmatprep.mubr.bf16.mxu0 0
    %3340 = vmatmul.mubr.bf16.gmra.mxu0 %v3205
    %v3341 = vpop.f32.mrf.mxu0
    %v3342 = vadd.f32 0.0, %v3341
    %v3343 = vpop.f32.mrf.mxu0
    %v3344 = vadd.f32 0.0, %v3343
    %v3345 = vpop.f32.mrf.mxu0
    %v3346 = vadd.f32 0.0, %v3345
    %v3347 = vpop.f32.mrf.mxu0
    %v3348 = vadd.f32 0.0, %v3347
    %3349 = vmatprep.mubr.bf16.mxu0 0
    %3350 = vmatmul.mubr.bf16.gmra.mxu0 %v3208
    %v3351 = vpop.f32.mrf.mxu0
    %v3352 = vadd.f32 0.0, %v3351
    %v3353 = vpop.f32.mrf.mxu0
    %v3354 = vadd.f32 0.0, %v3353
    %v3355 = vpop.f32.mrf.mxu0
    %v3356 = vadd.f32 0.0, %v3355
    %v3357 = vpop.f32.mrf.mxu0
    %v3358 = vadd.f32 0.0, %v3357
    %3359 = vmatprep.mubr.bf16.mxu0 0
    %3360 = vmatmul.mubr.bf16.gmra.mxu0 %v3211
    %v3361 = vpop.f32.mrf.mxu0
    %v3362 = vadd.f32 0.0, %v3361
    %v3363 = vpop.f32.mrf.mxu0
    %v3364 = vadd.f32 0.0, %v3363
    %v3365 = vpop.f32.mrf.mxu0
    %v3366 = vadd.f32 0.0, %v3365
    %v3367 = vpop.f32.mrf.mxu0
    %v3368 = vadd.f32 0.0, %v3367
    %3369 = vmatprep.mubr.bf16.mxu0 0
    %3370 = vmatmul.mubr.bf16.gmra.mxu0 %v3214
    %v3371 = vpop.f32.mrf.mxu0
    %v3372 = vadd.f32 0.0, %v3371
    %v3373 = vpop.f32.mrf.mxu0
    %v3374 = vadd.f32 0.0, %v3373
    %v3375 = vpop.f32.mrf.mxu0
    %v3376 = vadd.f32 0.0, %v3375
    %v3377 = vpop.f32.mrf.mxu0
    %v3378 = vadd.f32 0.0, %v3377
    %3379 = vmatprep.mubr.bf16.mxu0 0
    %3380 = vmatmul.mubr.bf16.gmra.mxu0 %v3217
    %v3381 = vpop.f32.mrf.mxu0
    %v3382 = vadd.f32 0.0, %v3381
    %v3383 = vpop.f32.mrf.mxu0
    %v3384 = vadd.f32 0.0, %v3383
    %v3385 = vpop.f32.mrf.mxu0
    %v3386 = vadd.f32 0.0, %v3385
    %v3387 = vpop.f32.mrf.mxu0
    %v3388 = vadd.f32 0.0, %v3387
    %3389 = vmatprep.mubr.bf16.mxu0 0
    %3390 = vmatmul.mubr.bf16.gmra.mxu0 %v3220
    %v3391 = vpop.f32.mrf.mxu0
    %v3392 = vadd.f32 0.0, %v3391
    %v3393 = vpop.f32.mrf.mxu0
    %v3394 = vadd.f32 0.0, %v3393
    %v3395 = vpop.f32.mrf.mxu0
    %v3396 = vadd.f32 0.0, %v3395
    %v3397 = vpop.f32.mrf.mxu0
    %v3398 = vadd.f32 0.0, %v3397
    %3399 = vmatprep.mubr.bf16.mxu0 0
    %3400 = vmatmul.mubr.bf16.gmra.mxu0 %v3223
    %v3401 = vpop.f32.mrf.mxu0
    %v3402 = vadd.f32 0.0, %v3401
    %v3403 = vpop.f32.mrf.mxu0
    %v3404 = vadd.f32 0.0, %v3403
    %v3405 = vpop.f32.mrf.mxu0
    %v3406 = vadd.f32 0.0, %v3405
    %v3407 = vpop.f32.mrf.mxu0
    %v3408 = vadd.f32 0.0, %v3407
    %3409 = vmatprep.mubr.bf16.mxu0 0
    %3410 = vmatmul.mubr.bf16.gmra.mxu0 %v3226
    %v3411 = vpop.f32.mrf.mxu0
    %v3412 = vadd.f32 0.0, %v3411
    %v3413 = vpop.f32.mrf.mxu0
    %v3414 = vadd.f32 0.0, %v3413
    %v3415 = vpop.f32.mrf.mxu0
    %v3416 = vadd.f32 0.0, %v3415
    %v3417 = vpop.f32.mrf.mxu0
    %v3418 = vadd.f32 0.0, %v3417
    %3419 = vmatprep.mubr.bf16.mxu0 0
    %3420 = vmatmul.mubr.bf16.gmra.mxu0 %v3229
    %v3421 = vpop.f32.mrf.mxu0
    %v3422 = vadd.f32 0.0, %v3421
    %v3423 = vpop.f32.mrf.mxu0
    %v3424 = vadd.f32 0.0, %v3423
    %v3425 = vpop.f32.mrf.mxu0
    %v3426 = vadd.f32 0.0, %v3425
    %v3427 = vpop.f32.mrf.mxu0
    %v3428 = vadd.f32 0.0, %v3427
    %3429 = vdwg.mxu0
    %v3430 = vmax.f32 %v3272, %v3274
    %3431 = vmax.xlane.f32.xlu0 %v3430
    %v3432 = vpop.xlane.xlu0 %3431
    %v3433 = vmax.f32 %v3276, %v3278
    %3434 = vmax.xlane.f32.xlu0 %v3433
    %v3435 = vpop.xlane.xlu0 %3434
    %v3436 = vmax.f32 %v3282, %v3284
    %3437 = vmax.xlane.f32.xlu0 %v3436
    %v3438 = vpop.xlane.xlu0 %3437
    %v3439 = vmax.f32 %v3286, %v3288
    %3440 = vmax.xlane.f32.xlu0 %v3439
    %v3441 = vpop.xlane.xlu0 %3440
    %v3442 = vmax.f32 %v3292, %v3294
    %3443 = vmax.xlane.f32.xlu0 %v3442
    %v3444 = vpop.xlane.xlu0 %3443
    %v3445 = vmax.f32 %v3296, %v3298
    %3446 = vmax.xlane.f32.xlu0 %v3445
    %v3447 = vpop.xlane.xlu0 %3446
    %v3448 = vmax.f32 %v3302, %v3304
    %3449 = vmax.xlane.f32.xlu0 %v3448
    %v3450 = vpop.xlane.xlu0 %3449
    %v3451 = vmax.f32 %v3306, %v3308
    %3452 = vmax.xlane.f32.xlu0 %v3451
    %v3453 = vpop.xlane.xlu0 %3452
    %v3454 = vmax.f32 %v3312, %v3314
    %3455 = vmax.xlane.f32.xlu0 %v3454
    %v3456 = vpop.xlane.xlu0 %3455
    %v3457 = vmax.f32 %v3316, %v3318
    %3458 = vmax.xlane.f32.xlu0 %v3457
    %v3459 = vpop.xlane.xlu0 %3458
    %v3460 = vmax.f32 %v3322, %v3324
    %3461 = vmax.xlane.f32.xlu0 %v3460
    %v3462 = vpop.xlane.xlu0 %3461
    %v3463 = vmax.f32 %v3326, %v3328
    %3464 = vmax.xlane.f32.xlu0 %v3463
    %v3465 = vpop.xlane.xlu0 %3464
    %v3466 = vmax.f32 %v3332, %v3334
    %3467 = vmax.xlane.f32.xlu0 %v3466
    %v3468 = vpop.xlane.xlu0 %3467
    %v3469 = vmax.f32 %v3336, %v3338
    %3470 = vmax.xlane.f32.xlu0 %v3469
    %v3471 = vpop.xlane.xlu0 %3470
    %v3472 = vmax.f32 %v3342, %v3344
    %3473 = vmax.xlane.f32.xlu0 %v3472
    %v3474 = vpop.xlane.xlu0 %3473
    %v3475 = vmax.f32 %v3346, %v3348
    %3476 = vmax.xlane.f32.xlu0 %v3475
    %v3477 = vpop.xlane.xlu0 %3476
    %v3478 = vmax.f32 %v3352, %v3354
    %3479 = vmax.xlane.f32.xlu0 %v3478
    %v3480 = vpop.xlane.xlu0 %3479
    %v3481 = vmax.f32 %v3356, %v3358
    %3482 = vmax.xlane.f32.xlu0 %v3481
    %v3483 = vpop.xlane.xlu0 %3482
    %v3484 = vmax.f32 %v3362, %v3364
    %3485 = vmax.xlane.f32.xlu0 %v3484
    %v3486 = vpop.xlane.xlu0 %3485
    %v3487 = vmax.f32 %v3366, %v3368
    %3488 = vmax.xlane.f32.xlu0 %v3487
    %v3489 = vpop.xlane.xlu0 %3488
    %v3490 = vmax.f32 %v3372, %v3374
    %3491 = vmax.xlane.f32.xlu0 %v3490
    %v3492 = vpop.xlane.xlu0 %3491
    %v3493 = vmax.f32 %v3376, %v3378
    %3494 = vmax.xlane.f32.xlu0 %v3493
    %v3495 = vpop.xlane.xlu0 %3494
    %v3496 = vmax.f32 %v3382, %v3384
    %3497 = vmax.xlane.f32.xlu0 %v3496
    %v3498 = vpop.xlane.xlu0 %3497
    %v3499 = vmax.f32 %v3386, %v3388
    %3500 = vmax.xlane.f32.xlu0 %v3499
    %v3501 = vpop.xlane.xlu0 %3500
    %v3502 = vmax.f32 %v3392, %v3394
    %3503 = vmax.xlane.f32.xlu0 %v3502
    %v3504 = vpop.xlane.xlu0 %3503
    %v3505 = vmax.f32 %v3396, %v3398
    %3506 = vmax.xlane.f32.xlu0 %v3505
    %v3507 = vpop.xlane.xlu0 %3506
    %v3508 = vmax.f32 %v3402, %v3404
    %3509 = vmax.xlane.f32.xlu0 %v3508
    %v3510 = vpop.xlane.xlu0 %3509
    %v3511 = vmax.f32 %v3406, %v3408
    %3512 = vmax.xlane.f32.xlu0 %v3511
    %v3513 = vpop.xlane.xlu0 %3512
    %v3514 = vmax.f32 %v3412, %v3414
    %3515 = vmax.xlane.f32.xlu0 %v3514
    %v3516 = vpop.xlane.xlu0 %3515
    %v3517 = vmax.f32 %v3416, %v3418
    %3518 = vmax.xlane.f32.xlu0 %v3517
    %v3519 = vpop.xlane.xlu0 %3518
    %v3520 = vmax.f32 %v3422, %v3424
    %3521 = vmax.xlane.f32.xlu0 %v3520
    %v3522 = vpop.xlane.xlu0 %3521
    %v3523 = vmax.f32 %v3426, %v3428
    %3524 = vmax.xlane.f32.xlu0 %v3523
    %v3525 = vpop.xlane.xlu0 %3524
    %v3526 = vsub.f32 %v3272, %v3432
    %v3527 = vsub.f32 %v3274, %v3432
    %v3528 = vsub.f32 %v3276, %v3435
    %v3529 = vsub.f32 %v3278, %v3435
    %v3530 = vsub.f32 %v3282, %v3438
    %v3531 = vsub.f32 %v3284, %v3438
    %v3532 = vsub.f32 %v3286, %v3441
    %v3533 = vsub.f32 %v3288, %v3441
    %v3534 = vsub.f32 %v3292, %v3444
    %v3535 = vsub.f32 %v3294, %v3444
    %v3536 = vsub.f32 %v3296, %v3447
    %v3537 = vsub.f32 %v3298, %v3447
    %v3538 = vsub.f32 %v3302, %v3450
    %v3539 = vsub.f32 %v3304, %v3450
    %v3540 = vsub.f32 %v3306, %v3453
    %v3541 = vsub.f32 %v3308, %v3453
    %v3542 = vsub.f32 %v3312, %v3456
    %v3543 = vsub.f32 %v3314, %v3456
    %v3544 = vsub.f32 %v3316, %v3459
    %v3545 = vsub.f32 %v3318, %v3459
    %v3546 = vsub.f32 %v3322, %v3462
    %v3547 = vsub.f32 %v3324, %v3462
    %v3548 = vsub.f32 %v3326, %v3465
    %v3549 = vsub.f32 %v3328, %v3465
    %v3550 = vsub.f32 %v3332, %v3468
    %v3551 = vsub.f32 %v3334, %v3468
    %v3552 = vsub.f32 %v3336, %v3471
    %v3553 = vsub.f32 %v3338, %v3471
    %v3554 = vsub.f32 %v3342, %v3474
    %v3555 = vsub.f32 %v3344, %v3474
    %v3556 = vsub.f32 %v3346, %v3477
    %v3557 = vsub.f32 %v3348, %v3477
    %v3558 = vsub.f32 %v3352, %v3480
    %v3559 = vsub.f32 %v3354, %v3480
    %v3560 = vsub.f32 %v3356, %v3483
    %v3561 = vsub.f32 %v3358, %v3483
    %v3562 = vsub.f32 %v3362, %v3486
    %v3563 = vsub.f32 %v3364, %v3486
    %v3564 = vsub.f32 %v3366, %v3489
    %v3565 = vsub.f32 %v3368, %v3489
    %v3566 = vsub.f32 %v3372, %v3492
    %v3567 = vsub.f32 %v3374, %v3492
    %v3568 = vsub.f32 %v3376, %v3495
    %v3569 = vsub.f32 %v3378, %v3495
    %v3570 = vsub.f32 %v3382, %v3498
    %v3571 = vsub.f32 %v3384, %v3498
    %v3572 = vsub.f32 %v3386, %v3501
    %v3573 = vsub.f32 %v3388, %v3501
    %v3574 = vsub.f32 %v3392, %v3504
    %v3575 = vsub.f32 %v3394, %v3504
    %v3576 = vsub.f32 %v3396, %v3507
    %v3577 = vsub.f32 %v3398, %v3507
    %v3578 = vsub.f32 %v3402, %v3510
    %v3579 = vsub.f32 %v3404, %v3510
    %v3580 = vsub.f32 %v3406, %v3513
    %v3581 = vsub.f32 %v3408, %v3513
    %v3582 = vsub.f32 %v3412, %v3516
    %v3583 = vsub.f32 %v3414, %v3516
    %v3584 = vsub.f32 %v3416, %v3519
    %v3585 = vsub.f32 %v3418, %v3519
    %v3586 = vsub.f32 %v3422, %v3522
    %v3587 = vsub.f32 %v3424, %v3522
    %v3588 = vsub.f32 %v3426, %v3525
    %v3589 = vsub.f32 %v3428, %v3525
    %v3590 = vmul.f32 %v3526, 1.442695
    %v3591 = vpow.pop %v3590
    %v3592 = vmul.f32 %v3527, 1.442695
    %v3593 = vpow.pop %v3592
    %v3594 = vmul.f32 %v3528, 1.442695
    %v3595 = vpow.pop %v3594
    %v3596 = vmul.f32 %v3529, 1.442695
    %v3597 = vpow.pop %v3596
    %v3598 = vmul.f32 %v3530, 1.442695
    %v3599 = vpow.pop %v3598
    %v3600 = vmul.f32 %v3531, 1.442695
    %v3601 = vpow.pop %v3600
    %v3602 = vmul.f32 %v3532, 1.442695
    %v3603 = vpow.pop %v3602
    %v3604 = vmul.f32 %v3533, 1.442695
    %v3605 = vpow.pop %v3604
    %v3606 = vmul.f32 %v3534, 1.442695
    %v3607 = vpow.pop %v3606
    %v3608 = vmul.f32 %v3535, 1.442695
    %v3609 = vpow.pop %v3608
    %v3610 = vmul.f32 %v3536, 1.442695
    %v3611 = vpow.pop %v3610
    %v3612 = vmul.f32 %v3537, 1.442695
    %v3613 = vpow.pop %v3612
    %v3614 = vmul.f32 %v3538, 1.442695
    %v3615 = vpow.pop %v3614
    %v3616 = vmul.f32 %v3539, 1.442695
    %v3617 = vpow.pop %v3616
    %v3618 = vmul.f32 %v3540, 1.442695
    %v3619 = vpow.pop %v3618
    %v3620 = vmul.f32 %v3541, 1.442695
    %v3621 = vpow.pop %v3620
    %v3622 = vmul.f32 %v3542, 1.442695
    %v3623 = vpow.pop %v3622
    %v3624 = vmul.f32 %v3543, 1.442695
    %v3625 = vpow.pop %v3624
    %v3626 = vmul.f32 %v3544, 1.442695
    %v3627 = vpow.pop %v3626
    %v3628 = vmul.f32 %v3545, 1.442695
    %v3629 = vpow.pop %v3628
    %v3630 = vmul.f32 %v3546, 1.442695
    %v3631 = vpow.pop %v3630
    %v3632 = vmul.f32 %v3547, 1.442695
    %v3633 = vpow.pop %v3632
    %v3634 = vmul.f32 %v3548, 1.442695
    %v3635 = vpow.pop %v3634
    %v3636 = vmul.f32 %v3549, 1.442695
    %v3637 = vpow.pop %v3636
    %v3638 = vmul.f32 %v3550, 1.442695
    %v3639 = vpow.pop %v3638
    %v3640 = vmul.f32 %v3551, 1.442695
    %v3641 = vpow.pop %v3640
    %v3642 = vmul.f32 %v3552, 1.442695
    %v3643 = vpow.pop %v3642
    %v3644 = vmul.f32 %v3553, 1.442695
    %v3645 = vpow.pop %v3644
    %v3646 = vmul.f32 %v3554, 1.442695
    %v3647 = vpow.pop %v3646
    %v3648 = vmul.f32 %v3555, 1.442695
    %v3649 = vpow.pop %v3648
    %v3650 = vmul.f32 %v3556, 1.442695
    %v3651 = vpow.pop %v3650
    %v3652 = vmul.f32 %v3557, 1.442695
    %v3653 = vpow.pop %v3652
    %v3654 = vmul.f32 %v3558, 1.442695
    %v3655 = vpow.pop %v3654
    %v3656 = vmul.f32 %v3559, 1.442695
    %v3657 = vpow.pop %v3656
    %v3658 = vmul.f32 %v3560, 1.442695
    %v3659 = vpow.pop %v3658
    %v3660 = vmul.f32 %v3561, 1.442695
    %v3661 = vpow.pop %v3660
    %v3662 = vmul.f32 %v3562, 1.442695
    %v3663 = vpow.pop %v3662
    %v3664 = vmul.f32 %v3563, 1.442695
    %v3665 = vpow.pop %v3664
    %v3666 = vmul.f32 %v3564, 1.442695
    %v3667 = vpow.pop %v3666
    %v3668 = vmul.f32 %v3565, 1.442695
    %v3669 = vpow.pop %v3668
    %v3670 = vmul.f32 %v3566, 1.442695
    %v3671 = vpow.pop %v3670
    %v3672 = vmul.f32 %v3567, 1.442695
    %v3673 = vpow.pop %v3672
    %v3674 = vmul.f32 %v3568, 1.442695
    %v3675 = vpow.pop %v3674
    %v3676 = vmul.f32 %v3569, 1.442695
    %v3677 = vpow.pop %v3676
    %v3678 = vmul.f32 %v3570, 1.442695
    %v3679 = vpow.pop %v3678
    %v3680 = vmul.f32 %v3571, 1.442695
    %v3681 = vpow.pop %v3680
    %v3682 = vmul.f32 %v3572, 1.442695
    %v3683 = vpow.pop %v3682
    %v3684 = vmul.f32 %v3573, 1.442695
    %v3685 = vpow.pop %v3684
    %v3686 = vmul.f32 %v3574, 1.442695
    %v3687 = vpow.pop %v3686
    %v3688 = vmul.f32 %v3575, 1.442695
    %v3689 = vpow.pop %v3688
    %v3690 = vmul.f32 %v3576, 1.442695
    %v3691 = vpow.pop %v3690
    %v3692 = vmul.f32 %v3577, 1.442695
    %v3693 = vpow.pop %v3692
    %v3694 = vmul.f32 %v3578, 1.442695
    %v3695 = vpow.pop %v3694
    %v3696 = vmul.f32 %v3579, 1.442695
    %v3697 = vpow.pop %v3696
    %v3698 = vmul.f32 %v3580, 1.442695
    %v3699 = vpow.pop %v3698
    %v3700 = vmul.f32 %v3581, 1.442695
    %v3701 = vpow.pop %v3700
    %v3702 = vmul.f32 %v3582, 1.442695
    %v3703 = vpow.pop %v3702
    %v3704 = vmul.f32 %v3583, 1.442695
    %v3705 = vpow.pop %v3704
    %v3706 = vmul.f32 %v3584, 1.442695
    %v3707 = vpow.pop %v3706
    %v3708 = vmul.f32 %v3585, 1.442695
    %v3709 = vpow.pop %v3708
    %v3710 = vmul.f32 %v3586, 1.442695
    %v3711 = vpow.pop %v3710
    %v3712 = vmul.f32 %v3587, 1.442695
    %v3713 = vpow.pop %v3712
    %v3714 = vmul.f32 %v3588, 1.442695
    %v3715 = vpow.pop %v3714
    %v3716 = vmul.f32 %v3589, 1.442695
    %v3717 = vpow.pop %v3716
    %v3718 = vpack.c.bf16 %v3595, %v3591
    %v3719 = vpack.c.bf16 %v3597, %v3593
    %v3720 = vpack.c.bf16 %v3603, %v3599
    %v3721 = vpack.c.bf16 %v3605, %v3601
    %v3722 = vpack.c.bf16 %v3611, %v3607
    %v3723 = vpack.c.bf16 %v3613, %v3609
    %v3724 = vpack.c.bf16 %v3619, %v3615
    %v3725 = vpack.c.bf16 %v3621, %v3617
    %v3726 = vpack.c.bf16 %v3627, %v3623
    %v3727 = vpack.c.bf16 %v3629, %v3625
    %v3728 = vpack.c.bf16 %v3635, %v3631
    %v3729 = vpack.c.bf16 %v3637, %v3633
    %v3730 = vpack.c.bf16 %v3643, %v3639
    %v3731 = vpack.c.bf16 %v3645, %v3641
    %v3732 = vpack.c.bf16 %v3651, %v3647
    %v3733 = vpack.c.bf16 %v3653, %v3649
    %v3734 = vpack.c.bf16 %v3659, %v3655
    %v3735 = vpack.c.bf16 %v3661, %v3657
    %v3736 = vpack.c.bf16 %v3667, %v3663
    %v3737 = vpack.c.bf16 %v3669, %v3665
    %v3738 = vpack.c.bf16 %v3675, %v3671
    %v3739 = vpack.c.bf16 %v3677, %v3673
    %v3740 = vpack.c.bf16 %v3683, %v3679
    %v3741 = vpack.c.bf16 %v3685, %v3681
    %v3742 = vpack.c.bf16 %v3691, %v3687
    %v3743 = vpack.c.bf16 %v3693, %v3689
    %v3744 = vpack.c.bf16 %v3699, %v3695
    %v3745 = vpack.c.bf16 %v3701, %v3697
    %v3746 = vpack.c.bf16 %v3707, %v3703
    %v3747 = vpack.c.bf16 %v3709, %v3705
    %v3748 = vpack.c.bf16 %v3715, %v3711
    %v3749 = vpack.c.bf16 %v3717, %v3713
    %v3752 = vrot.slane %v3027, 1
    %v3753 = vrot.slane %v3028, 1
    %3756 = vmatprep.subr.bf16.mxu0 %v3733
    %3757 = vmatpush1.bf16.xpose.msra.mxu0 %v3732
    %3758 = vmatprep.subr.bf16.mxu0 %v3731
    %3759 = vmatpush1.bf16.xpose.msra.mxu0 %v3730
    %3760 = vmatprep.subr.bf16.mxu0 %v3729
    %3761 = vmatpush1.bf16.xpose.msra.mxu0 %v3728
    %3762 = vmatprep.subr.bf16.mxu0 %v3727
    %3763 = vmatpush1.bf16.xpose.msra.mxu0 %v3726
    %3764 = vmatprep.subr.bf16.mxu0 %v3725
    %3765 = vmatpush1.bf16.xpose.msra.mxu0 %v3724
    %3766 = vmatprep.subr.bf16.mxu0 %v3723
    %3767 = vmatpush1.bf16.xpose.msra.mxu0 %v3722
    %3768 = vmatprep.subr.bf16.mxu0 %v3721
    %3769 = vmatpush1.bf16.xpose.msra.mxu0 %v3720
    %3770 = vmatprep.subr.bf16.mxu0 %v3719
    %3771 = vmatpush1.bf16.xpose.msra.mxu0 %v3718
    %3772 = vmatprep.subr.bf16.mxu0 %v3749
    %3773 = vmatpush2.bf16.xpose.msra.mxu0 %v3748
    %3774 = vmatprep.subr.bf16.mxu0 %v3747
    %3775 = vmatpush2.bf16.xpose.msra.mxu0 %v3746
    %3776 = vmatprep.subr.bf16.mxu0 %v3745
    %3777 = vmatpush2.bf16.xpose.msra.mxu0 %v3744
    %3778 = vmatprep.subr.bf16.mxu0 %v3743
    %3779 = vmatpush2.bf16.xpose.msra.mxu0 %v3742
    %3780 = vmatprep.subr.bf16.mxu0 %v3741
    %3781 = vmatpush2.bf16.xpose.msra.mxu0 %v3740
    %3782 = vmatprep.subr.bf16.mxu0 %v3739
    %3783 = vmatpush2.bf16.xpose.msra.mxu0 %v3738
    %3784 = vmatprep.subr.bf16.mxu0 %v3737
    %3785 = vmatpush2.bf16.xpose.msra.mxu0 %v3736
    %3786 = vmatprep.subr.bf16.mxu0 %v3735
    %3787 = vmatpush2.bf16.xpose.msra.mxu0 %v3734
    %3788 = vmatprep.mubr.bf16.mxu0 %v3753
    %3789 = vmatmul.mubr.bf16.gmra.mxu0 %v3752
    %v3790 = vpop.f32.mrf.mxu0
    %v3791 = vadd.f32 0.0, %v3790
    %v3792 = vpop.f32.mrf.mxu0
    %v3793 = vadd.f32 0.0, %v3792
    %v3794 = vpop.f32.mrf.mxu0
    %v3795 = vpop.f32.mrf.mxu0
    %3796 = vdwg.mxu0
    %3797 = vmatprep.subr.bf16.mxu0 %v3733
    %3798 = vmatpush1.bf16.xpose.msra.mxu0 %v3732
    %3799 = vmatprep.subr.bf16.mxu0 %v3731
    %3800 = vmatpush1.bf16.xpose.msra.mxu0 %v3730
    %3801 = vmatprep.subr.bf16.mxu0 %v3729
    %3802 = vmatpush1.bf16.xpose.msra.mxu0 %v3728
    %3803 = vmatprep.subr.bf16.mxu0 %v3727
    %3804 = vmatpush1.bf16.xpose.msra.mxu0 %v3726
    %3805 = vmatprep.subr.bf16.mxu0 %v3725
    %3806 = vmatpush1.bf16.xpose.msra.mxu0 %v3724
    %3807 = vmatprep.subr.bf16.mxu0 %v3723
    %3808 = vmatpush1.bf16.xpose.msra.mxu0 %v3722
    %3809 = vmatprep.subr.bf16.mxu0 %v3721
    %3810 = vmatpush1.bf16.xpose.msra.mxu0 %v3720
    %3811 = vmatprep.subr.bf16.mxu0 %v3719
    %3812 = vmatpush1.bf16.xpose.msra.mxu0 %v3718
    %3813 = vmatprep.subr.bf16.mxu0 %v3749
    %3814 = vmatpush2.bf16.xpose.msra.mxu0 %v3748
    %3815 = vmatprep.subr.bf16.mxu0 %v3747
    %3816 = vmatpush2.bf16.xpose.msra.mxu0 %v3746
    %3817 = vmatprep.subr.bf16.mxu0 %v3745
    %3818 = vmatpush2.bf16.xpose.msra.mxu0 %v3744
    %3819 = vmatprep.subr.bf16.mxu0 %v3743
    %3820 = vmatpush2.bf16.xpose.msra.mxu0 %v3742
    %3821 = vmatprep.subr.bf16.mxu0 %v3741
    %3822 = vmatpush2.bf16.xpose.msra.mxu0 %v3740
    %3823 = vmatprep.subr.bf16.mxu0 %v3739
    %3824 = vmatpush2.bf16.xpose.msra.mxu0 %v3738
    %3825 = vmatprep.subr.bf16.mxu0 %v3737
    %3826 = vmatpush2.bf16.xpose.msra.mxu0 %v3736
    %3827 = vmatprep.subr.bf16.mxu0 %v3735
    %3828 = vmatpush2.bf16.xpose.msra.mxu0 %v3734
    %3829 = vmatprep.mubr.bf16.mxu0 1065369472
    %3830 = vmatmul.mubr.bf16.gmra.mxu0 1065369472
    %v3831 = vpop.f32.mrf.mxu0
    %v3832 = vadd.f32 0.0, %v3831
    %v3833 = vpop.f32.mrf.mxu0
    %v3834 = vadd.f32 0.0, %v3833
    %v3835 = vpop.f32.mrf.mxu0
    %v3836 = vpop.f32.mrf.mxu0
    %3837 = vdwg.mxu0
    %v3838 = vrcp.pop %v3832
    %v3839 = vrcp.pop %v3834
    %v3840 = vlaneseq
    %v3841 = vshrl.u32 %v3840, 7
    %v3842 = vsub.s32 0, %v3841
    %v3843 = vrot.slane %v3838, %v3842
    %v3844 = vlaneseq
    %v3845 = vshrl.u32 %v3844, 7
    %v3846 = vsub.s32 0, %v3845
    %v3847 = vrot.slane %v3839, %v3846
    %v3848 = vmul.f32 %v3791, %v3843
    %v3849 = vmul.f32 %v3793, %v3847
    %v3850 = vrot.slane %v1972, 2
    %v3851 = vrot.slane %v1974, 2
    %v3854 = vadd.f32 %v3848, %v3850
    %v3855 = vadd.f32 %v3849, %v3851
    %v3858 = vcombine.low %v3854, %v3855
    %v3859 = vrot.slane %v3858, 6
    %3861 = vst [vmem:[%s3129] sm:$0xcc] %v3859
    // Predicated region
    $region22: #{tpu_custom_call.1} parent=1 // pred_check
      _
    $region23: #{tpu_custom_call.1} parent=1 // pred_check_branch
      %3863 = sbr.rel (0) target = $region25
    $region24: #{tpu_custom_call.1} parent=1 // pred_region
      %s3865 = ssub.s32 256, 256
      %3866 = vsyncadd [#allocation3], %s3865
      %s3867 = sshll.u32 [#allocation2], 4
      %s3868 = int_to_ptr.vmem [resolvable:$true] %s3867
      %3873 = dma.vmem_to_hbm [thread:$0]  %s3868, 256, %s5, [#allocation3], 128, 128, 8
    $region25: #{tpu_custom_call.1} parent=1 // pred_fallthru
      _
    // Predicated region
    $region26: #{tpu_custom_call.1} parent=1 // pred_check
      _
    $region27: #{tpu_custom_call.1} parent=1 // pred_check_branch
      %3875 = sbr.rel (0) target = $region29
    $region28: #{tpu_custom_call.1} parent=1 // pred_region
      %3876 = dma.done [#allocation3], 256
    $region29: #{tpu_custom_call.1} parent=1 // pred_fallthru
      _
    %3877 = vsyncpa [#allocation3], 1

</llo_original>
